<compile_context>
chip_gen: v6e
topology: v6e:2x2x1
jax: 0.10.0
libtpu: 0.0.40
codegen_flags: <defaults>
</compile_context>

<pallas_src>
import math

import jax
import jax.numpy as jnp
from jax.experimental import pallas as pl
from jax.experimental.pallas import tpu as pltpu


# ----------------------------------------------------------------------------
# Hoisted input projection:  gates_x = x @ W_ih^T + (b_ih + b_hh)  for all t.
# (Single-block kernels — the test shapes are tiny; tile over M for large B*T.)
# ----------------------------------------------------------------------------
def _proj1_kernel(x_ref, w_ref, b_ref, o_ref):
    o_ref[...] = (jnp.dot(x_ref[...].astype(jnp.bfloat16), w_ref[...],
                          preferred_element_type=jnp.float32) + b_ref[...])


def _proj2_kernel(xa_ref, xb_ref, wa_ref, wb_ref, b_ref, o_ref):
    # input of layers >= 1 is concat([fwd, bwd]) — realised as a split-weight sum
    o_ref[...] = (jnp.dot(xa_ref[...].astype(jnp.bfloat16), wa_ref[...],
                          preferred_element_type=jnp.float32)
                  + jnp.dot(xb_ref[...].astype(jnp.bfloat16), wb_ref[...],
                            preferred_element_type=jnp.float32)
                  + b_ref[...])


def project_gates(xs, wih_parts, bias):
    """xs: tuple of (M, D_i) f32 arrays; returns (M, 4H) f32 gate pre-activations."""
    M = xs[0].shape[0]
    G = wih_parts[0].shape[1]
    out_shape = jax.ShapeDtypeStruct((M, G), jnp.float32)
    if len(xs) == 1:
        return pl.pallas_call(_proj1_kernel, out_shape=out_shape)(
            xs[0], wih_parts[0], bias)
    return pl.pallas_call(_proj2_kernel, out_shape=out_shape)(
        xs[0], xs[1], wih_parts[0], wih_parts[1], bias)


# ----------------------------------------------------------------------------
# Recurrent part: grid over time chunks, Tc steps unrolled per grid step,
# h/c carried in VMEM scratch.  Only the small (B,H)x(H,4H) dot is sequential.
# ----------------------------------------------------------------------------
def _pick_chunk(T, max_chunk=16):
    """Largest divisor of T that is <= max_chunk (static unroll length per grid step)."""
    for tc in range(min(T, max_chunk), 0, -1):
        if T % tc == 0:
            return tc
    return T


def _make_recurrent_kernel(Tc, H, reverse, only_last):
    steps = tuple(range(Tc - 1, -1, -1)) if reverse else tuple(range(Tc))

    def kernel(gx_ref, whh_ref, out_ref, h_sc, c_sc):
        @pl.when(pl.program_id(0) == 0)
        def _():
            h_sc[...] = jnp.zeros_like(h_sc)
            c_sc[...] = jnp.zeros_like(c_sc)

        h = h_sc[...]                      # (B, H) f32
        c = c_sc[...]                      # (B, H) f32
        whh = whh_ref[...]                 # (H, 4H) bf16, VMEM-resident

        for i in steps:                    # static unroll over the chunk
            gates = gx_ref[i] + jnp.dot(h.astype(jnp.bfloat16), whh,
                                        preferred_element_type=jnp.float32)
            # PyTorch gate order i | f | g | o.  (For large H, padding H to a
            # multiple of 128 would make these slices lane-aligned.)
            i_g = jax.nn.sigmoid(gates[:, 0 * H:1 * H])
            f_g = jax.nn.sigmoid(gates[:, 1 * H:2 * H])
            g_g = jnp.tanh(gates[:, 2 * H:3 * H])
            o_g = jax.nn.sigmoid(gates[:, 3 * H:4 * H])
            c = f_g * c + i_g * g_g
            h = o_g * jnp.tanh(c)
            if not only_last:
                out_ref[i] = h             # slot into the (Tc, B, H) output slab

        h_sc[...] = h
        c_sc[...] = c
        if only_last:
            out_ref[...] = h               # resident (B, H) output, flushed at end

    return kernel


def lstm_recurrence(gates_x, whh_t, *, reverse, only_last=False):
    """gates_x: (T, B, 4H) f32 (x-projection + bias); whh_t: (H, 4H) bf16.

    Returns hidden states (T, B, H) f32 in natural time order, or the final
    hidden state (B, H) if only_last=True.
    """
    T, B, G = gates_x.shape
    H = G // 4
    Tc = _pick_chunk(T)
    nc = T // Tc

    if reverse:
        blk_map = lambda c: (nc - 1 - c, 0, 0)   # walk chunks back-to-front
    else:
        blk_map = lambda c: (c, 0, 0)

    if only_last:
        out_shape = jax.ShapeDtypeStruct((B, H), jnp.float32)
        out_spec = pl.BlockSpec((B, H), lambda c: (0, 0))
    else:
        out_shape = jax.ShapeDtypeStruct((T, B, H), jnp.float32)
        out_spec = pl.BlockSpec((Tc, B, H), blk_map)

    kernel = _make_recurrent_kernel(Tc, H, reverse, only_last)

    return pl.pallas_call(
        kernel,
        out_shape=out_shape,
        grid_spec=pltpu.PrefetchScalarGridSpec(
            num_scalar_prefetch=0,
            grid=(nc,),
            in_specs=[
                pl.BlockSpec((Tc, B, G), blk_map),        # gate pre-activations chunk
                pl.BlockSpec((H, G), lambda c: (0, 0)),   # W_hh^T (VMEM-resident)
            ],
            out_specs=out_spec,
            scratch_shapes=[
                pltpu.VMEM((B, H), jnp.float32),          # h carry
                pltpu.VMEM((B, H), jnp.float32),          # c carry
            ],
        ),
        compiler_params=pltpu.CompilerParams(
            dimension_semantics=("arbitrary",),           # sequential recurrence
        ),
    )(gates_x, whh_t)


# ----------------------------------------------------------------------------
# Fused head: last-layer backward single step (from zero state) + Linear layer.
#   fc(concat(h_f_last, h_b_last)) = h_f_last @ Wf + h_b_last @ Wb + b
# ----------------------------------------------------------------------------
def _head_kernel(hf_ref, gxb_ref, wf_ref, wb_ref, b_ref, o_ref):
    H = hf_ref.shape[-1]
    gx = gxb_ref[...]                                   # (B, 4H) bwd gates at t=T-1
    i_g = jax.nn.sigmoid(gx[:, 0 * H:1 * H])
    g_g = jnp.tanh(gx[:, 2 * H:3 * H])
    o_g = jax.nn.sigmoid(gx[:, 3 * H:4 * H])
    # c_prev = h_prev = 0 for the reverse direction at its first step,
    # so the forget gate contributes nothing and W_hh drops out entirely.
    h_b = o_g * jnp.tanh(i_g * g_g)
    o_ref[...] = (jnp.dot(hf_ref[...], wf_ref[...], preferred_element_type=jnp.float32)
                  + jnp.dot(h_b, wb_ref[...], preferred_element_type=jnp.float32)
                  + b_ref[...])


# ----------------------------------------------------------------------------
# Full BiLSTM forward.
# ----------------------------------------------------------------------------
def bilstm_forward(x, params):
    B, T, _ = x.shape
    layers = params["lstm_layers"]

    # Time-major internal layout (T, B, feat): per-timestep slices are clean
    # leading-dim blocks inside the recurrent kernel.
    cur = (jnp.transpose(x, (1, 0, 2)),)

    # All layers except the last produce full (T, B, H) fwd/bwd sequences.
    for lp in layers[:-1]:
        flat = tuple(c.reshape(T * B, c.shape[-1]) for c in cur)
        gx_f = project_gates(flat, lp["fwd"]["wih_parts"], lp["fwd"]["bias"]).reshape(T, B, -1)
        gx_b = project_gates(flat, lp["bwd"]["wih_parts"], lp["bwd"]["bias"]).reshape(T, B, -1)
        out_f = lstm_recurrence(gx_f, lp["fwd"]["whh_t"], reverse=False)
        out_b = lstm_recurrence(gx_b, lp["bwd"]["whh_t"], reverse=True)
        # TODO(synk): inter-layer dropout (p=0.1) is a train-time op; eval semantics (no-op) used here.
        cur = (out_f, out_b)

    # Last layer: only bilstm_output[:, -1, :] is consumed by the FC head.
    lp = layers[-1]
    flat = tuple(c.reshape(T * B, c.shape[-1]) for c in cur)
    gx_f = project_gates(flat, lp["fwd"]["wih_parts"], lp["fwd"]["bias"]).reshape(T, B, -1)
    h_f_last = lstm_recurrence(gx_f, lp["fwd"]["whh_t"], reverse=False, only_last=True)

    # Backward output at position T-1 is a single step from zero state -> only the
    # backward input projection of the last timestep is needed.
    last_inputs = tuple(c[-1] for c in cur)                      # (B, feat) each
    gx_b_last = project_gates(last_inputs, lp["bwd"]["wih_parts"], lp["bwd"]["bias"])

    out_size = params["fc_b"].shape[-1]
    return pl.pallas_call(
        _head_kernel,
        out_shape=jax.ShapeDtypeStruct((B, out_size), jnp.float32),
    )(h_f_last, gx_b_last, params["fc_wf_t"], params["fc_wb_t"], params["fc_b"])


# ----------------------------------------------------------------------------
# Deterministic parameter init (matches PyTorch uniform(-1/sqrt(H), 1/sqrt(H))).
# ----------------------------------------------------------------------------
def init_params(key, input_size, hidden_size, output_size, num_layers):
    H = hidden_size
    k = 1.0 / math.sqrt(H)
    params = {"lstm_layers": []}

    def u(key, shape, bound):
        return jax.random.uniform(key, shape, jnp.float32, -bound, bound)

    for layer in range(num_layers):
        d_in = input_size if layer == 0 else 2 * H
        layer_p = {}
        for direction in ("fwd", "bwd"):
            key, k1, k2, k3, k4 = jax.random.split(key, 5)
            w_ih = u(k1, (4 * H, d_in), k)               # PyTorch layout (4H, D_in)
            w_hh = u(k2, (4 * H, H), k)
            b_ih = u(k3, (4 * H,), k)
            b_hh = u(k4, (4 * H,), k)
            wih_t = jnp.transpose(w_ih).astype(jnp.bfloat16)     # (D_in, 4H)
            if layer == 0:
                wih_parts = (wih_t,)
            else:
                # split the concat-input weight into fwd-half / bwd-half
                wih_parts = (wih_t[:H], wih_t[H:])
            layer_p[direction] = {
                "wih_parts": wih_parts,
                "whh_t": jnp.transpose(w_hh).astype(jnp.bfloat16),   # (H, 4H)
                "bias": (b_ih + b_hh)[None, :],                      # (1, 4H) f32
            }
        params["lstm_layers"].append(layer_p)

    key, k1, k2 = jax.random.split(key, 3)
    kf = 1.0 / math.sqrt(2 * H)
    fc_w = u(k1, (output_size, 2 * H), kf)
    fc_b = u(k2, (output_size,), kf)
    fc_w_t = jnp.transpose(fc_w)                          # (2H, O)
    params["fc_wf_t"] = fc_w_t[:H]                        # fwd-half of FC weight
    params["fc_wb_t"] = fc_w_t[H:]                        # bwd-half of FC weight
    params["fc_b"] = fc_b[None, :]                        # (1, O)
    return params


if __name__ == "__main__":
    B, T = 2, 8
    input_size, hidden_size, output_size, num_layers = 16, 32, 8, 2

    key = jax.random.PRNGKey(0)
    key, pkey, xkey = jax.random.split(key, 3)
    params = init_params(pkey, input_size, hidden_size, output_size, num_layers)
    x = jax.random.normal(xkey, (B, T, input_size), jnp.float32)

    out = jax.jit(bilstm_forward)(x, params)
    out = jax.block_until_ready(out)
    assert out.shape == (B, output_size), out.shape
    assert jnp.all(jnp.isfinite(out))
    print("KERNEL_OK")
</pallas_src>

<mosaic_0001>
module attributes {stable_mosaic.version = 11 : i64} {
  func.func @_proj2_kernel(%arg0: memref<2x32xf32, #tpu.memory_space<vmem>>, %arg1: memref<2x32xf32, #tpu.memory_space<vmem>>, %arg2: memref<32x128xbf16, #tpu.memory_space<vmem>>, %arg3: memref<32x128xbf16, #tpu.memory_space<vmem>>, %arg4: memref<1x128xf32, #tpu.memory_space<vmem>>, %arg5: memref<2x128xf32, #tpu.memory_space<vmem>>) attributes {dimension_semantics = [], scalar_prefetch = 0 : i64, scratch_operands = 0 : i64, tpu.core_type = #tpu.core_type<tc>} {
    %c0 = arith.constant 0 : index
    %c0_0 = arith.constant 0 : index
    %0 = vector.load %arg0[%c0, %c0_0] : memref<2x32xf32, #tpu.memory_space<vmem>>, vector<2x32xf32>
    %1 = arith.truncf %0 : vector<2x32xf32> to vector<2x32xbf16>
    %c0_1 = arith.constant 0 : index
    %c0_2 = arith.constant 0 : index
    %2 = vector.load %arg2[%c0_1, %c0_2] : memref<32x128xbf16, #tpu.memory_space<vmem>>, vector<32x128xbf16>
    %cst = arith.constant dense<0.000000e+00> : vector<2x128xf32>
    %3 = tpu.matmul %1, %2, %cst {dimension_numbers = #tpu.dot_dimension_numbers<[1], [0], [0], [1], [0, 0, 1, 1], [], []>} : vector<2x32xbf16>, vector<32x128xbf16>, vector<2x128xf32> -> vector<2x128xf32>
    %c0_3 = arith.constant 0 : index
    %c0_4 = arith.constant 0 : index
    %4 = vector.load %arg1[%c0_3, %c0_4] : memref<2x32xf32, #tpu.memory_space<vmem>>, vector<2x32xf32>
    %5 = arith.truncf %4 : vector<2x32xf32> to vector<2x32xbf16>
    %c0_5 = arith.constant 0 : index
    %c0_6 = arith.constant 0 : index
    %6 = vector.load %arg3[%c0_5, %c0_6] : memref<32x128xbf16, #tpu.memory_space<vmem>>, vector<32x128xbf16>
    %cst_7 = arith.constant dense<0.000000e+00> : vector<2x128xf32>
    %7 = tpu.matmul %5, %6, %cst_7 {dimension_numbers = #tpu.dot_dimension_numbers<[1], [0], [0], [1], [0, 0, 1, 1], [], []>} : vector<2x32xbf16>, vector<32x128xbf16>, vector<2x128xf32> -> vector<2x128xf32>
    %8 = arith.addf %3, %7 : vector<2x128xf32>
    %c0_8 = arith.constant 0 : index
    %c0_9 = arith.constant 0 : index
    %9 = vector.load %arg4[%c0_8, %c0_9] : memref<1x128xf32, #tpu.memory_space<vmem>>, vector<1x128xf32>
    %10 = vector.broadcast %9 : vector<1x128xf32> to vector<2x128xf32>
    %11 = arith.addf %8, %10 : vector<2x128xf32>
    %c0_10 = arith.constant 0 : index
    %c0_11 = arith.constant 0 : index
    %12 = vector.load %arg5[%c0_10, %c0_11] : memref<2x128xf32, #tpu.memory_space<vmem>>, vector<2x128xf32>
    tpu.vector_store %arg5[%c0_10, %c0_11], %11 {strides = array<i32>} : memref<2x128xf32, #tpu.memory_space<vmem>>, vector<2x128xf32>,
    return
  }
}

module attributes {stable_mosaic.version = 11 : i64} {
  func.func @kernel(%arg0: i32, %arg1: memref<8x2x128xf32, #tpu.memory_space<vmem>>, %arg2: memref<32x128xbf16, #tpu.memory_space<vmem>>, %arg3: memref<8x2x32xf32, #tpu.memory_space<vmem>>, %arg4: memref<2x32xf32, #tpu.memory_space<vmem>>, %arg5: memref<2x32xf32, #tpu.memory_space<vmem>>) attributes {dimension_semantics = [#tpu.dimension_semantics<arbitrary>], iteration_bounds = array<i64: 1>, scalar_prefetch = 0 : i64, scratch_operands = 2 : i64, tpu.core_type = #tpu.core_type<tc>, window_params = [{transform_indices = @transform_0, window_bounds = array<i64: 8, 2, 128>}, {pipeline_mode = #tpu.pipeline_mode<synchronous>, transform_indices = @transform_1, window_bounds = array<i64: 32, 128>}, {transform_indices = @transform_2, window_bounds = array<i64: 8, 2, 32>}]} {
    %c0_i32 = arith.constant 0 : i32
    %0 = arith.cmpi eq, %arg0, %c0_i32 : i32
    %1 = arith.extui %0 : i1 to i32
    %c0_i32_0 = arith.constant 0 : i32
    %2 = arith.cmpi ne, %1, %c0_i32_0 : i32
    scf.if %2 {
      %cst_82 = arith.constant 0.000000e+00 : f32
      %272 = vector.broadcast %cst_82 : f32 to vector<2x32xf32>
      %c0_83 = arith.constant 0 : index
      %c0_84 = arith.constant 0 : index
      %273 = vector.load %arg4[%c0_83, %c0_84] : memref<2x32xf32, #tpu.memory_space<vmem>>, vector<2x32xf32>
      tpu.vector_store %arg4[%c0_83, %c0_84], %272 {strides = array<i32>} : memref<2x32xf32, #tpu.memory_space<vmem>>, vector<2x32xf32>,
      %cst_85 = arith.constant 0.000000e+00 : f32
      %274 = vector.broadcast %cst_85 : f32 to vector<2x32xf32>
      %c0_86 = arith.constant 0 : index
      %c0_87 = arith.constant 0 : index
      %275 = vector.load %arg5[%c0_86, %c0_87] : memref<2x32xf32, #tpu.memory_space<vmem>>, vector<2x32xf32>
      tpu.vector_store %arg5[%c0_86, %c0_87], %274 {strides = array<i32>} : memref<2x32xf32, #tpu.memory_space<vmem>>, vector<2x32xf32>,
    } else {
    }
    %c0 = arith.constant 0 : index
    %c0_1 = arith.constant 0 : index
    %3 = vector.load %arg4[%c0, %c0_1] : memref<2x32xf32, #tpu.memory_space<vmem>>, vector<2x32xf32>
    %c0_2 = arith.constant 0 : index
    %c0_3 = arith.constant 0 : index
    %4 = vector.load %arg5[%c0_2, %c0_3] : memref<2x32xf32, #tpu.memory_space<vmem>>, vector<2x32xf32>
    %c0_4 = arith.constant 0 : index
    %c0_5 = arith.constant 0 : index
    %5 = vector.load %arg2[%c0_4, %c0_5] : memref<32x128xbf16, #tpu.memory_space<vmem>>, vector<32x128xbf16>
    %c7 = arith.constant 7 : index
    %c0_6 = arith.constant 0 : index
    %c0_7 = arith.constant 0 : index
    %6 = vector.load %arg1[%c7, %c0_6, %c0_7] : memref<8x2x128xf32, #tpu.memory_space<vmem>>, vector<1x2x128xf32>
    %7 = vector.shape_cast %6 : vector<1x2x128xf32> to vector<2x128xf32>
    %8 = arith.truncf %3 : vector<2x32xf32> to vector<2x32xbf16>
    %cst = arith.constant dense<0.000000e+00> : vector<2x128xf32>
    %9 = tpu.matmul %8, %5, %cst {dimension_numbers = #tpu.dot_dimension_numbers<[1], [0], [0], [1], [0, 0, 1, 1], [], []>} : vector<2x32xbf16>, vector<32x128xbf16>, vector<2x128xf32> -> vector<2x128xf32>
    %10 = arith.addf %7, %9 : vector<2x128xf32>
    %11 = vector.extract_strided_slice %10 {offsets = [0, 0], sizes = [2, 32], strides = [1, 1]} : vector<2x128xf32> to vector<2x32xf32>
    %12 = arith.negf %11 : vector<2x32xf32>
    %13 = math.exp %12 : vector<2x32xf32>
    %cst_8 = arith.constant 1.000000e+00 : f32
    %14 = vector.broadcast %cst_8 : f32 to vector<2x32xf32>
    %15 = arith.addf %14, %13 : vector<2x32xf32>
    %16 = arith.divf %14, %15 : vector<2x32xf32>
    %17 = vector.extract_strided_slice %10 {offsets = [0, 32], sizes = [2, 32], strides = [1, 1]} : vector<2x128xf32> to vector<2x32xf32>
    %18 = arith.negf %17 : vector<2x32xf32>
    %19 = math.exp %18 : vector<2x32xf32>
    %cst_9 = arith.constant 1.000000e+00 : f32
    %20 = vector.broadcast %cst_9 : f32 to vector<2x32xf32>
    %21 = arith.addf %20, %19 : vector<2x32xf32>
    %22 = arith.divf %20, %21 : vector<2x32xf32>
    %23 = vector.extract_strided_slice %10 {offsets = [0, 64], sizes = [2, 32], strides = [1, 1]} : vector<2x128xf32> to vector<2x32xf32>
    %24 = math.tanh %23 : vector<2x32xf32>
    %25 = vector.extract_strided_slice %10 {offsets = [0, 96], sizes = [2, 32], strides = [1, 1]} : vector<2x128xf32> to vector<2x32xf32>
    %26 = arith.negf %25 : vector<2x32xf32>
    %27 = math.exp %26 : vector<2x32xf32>
    %cst_10 = arith.constant 1.000000e+00 : f32
    %28 = vector.broadcast %cst_10 : f32 to vector<2x32xf32>
    %29 = arith.addf %28, %27 : vector<2x32xf32>
    %30 = arith.divf %28, %29 : vector<2x32xf32>
    %31 = arith.mulf %22, %4 : vector<2x32xf32>
    %32 = arith.mulf %16, %24 : vector<2x32xf32>
    %33 = arith.addf %31, %32 : vector<2x32xf32>
    %34 = math.tanh %33 : vector<2x32xf32>
    %35 = arith.mulf %30, %34 : vector<2x32xf32>
    %c7_11 = arith.constant 7 : index
    %c0_12 = arith.constant 0 : index
    %c0_13 = arith.constant 0 : index
    %36 = vector.load %arg3[%c7_11, %c0_12, %c0_13] : memref<8x2x32xf32, #tpu.memory_space<vmem>>, vector<1x2x32xf32>
    %37 = vector.shape_cast %36 : vector<1x2x32xf32> to vector<2x32xf32>
    %38 = vector.shape_cast %35 : vector<2x32xf32> to vector<1x2x32xf32>
    tpu.vector_store %arg3[%c7_11, %c0_12, %c0_13], %38 {strides = array<i32>} : memref<8x2x32xf32, #tpu.memory_space<vmem>>, vector<1x2x32xf32>,
    %c6 = arith.constant 6 : index
    %c0_14 = arith.constant 0 : index
    %c0_15 = arith.constant 0 : index
    %39 = vector.load %arg1[%c6, %c0_14, %c0_15] : memref<8x2x128xf32, #tpu.memory_space<vmem>>, vector<1x2x128xf32>
    %40 = vector.shape_cast %39 : vector<1x2x128xf32> to vector<2x128xf32>
    %41 = arith.truncf %35 : vector<2x32xf32> to vector<2x32xbf16>
    %cst_16 = arith.constant dense<0.000000e+00> : vector<2x128xf32>
    %42 = tpu.matmul %41, %5, %cst_16 {dimension_numbers = #tpu.dot_dimension_numbers<[1], [0], [0], [1], [0, 0, 1, 1], [], []>} : vector<2x32xbf16>, vector<32x128xbf16>, vector<2x128xf32> -> vector<2x128xf32>
    %43 = arith.addf %40, %42 : vector<2x128xf32>
    %44 = vector.extract_strided_slice %43 {offsets = [0, 0], sizes = [2, 32], strides = [1, 1]} : vector<2x128xf32> to vector<2x32xf32>
    %45 = arith.negf %44 : vector<2x32xf32>
    %46 = math.exp %45 : vector<2x32xf32>
    %cst_17 = arith.constant 1.000000e+00 : f32
    %47 = vector.broadcast %cst_17 : f32 to vector<2x32xf32>
    %48 = arith.addf %47, %46 : vector<2x32xf32>
    %49 = arith.divf %47, %48 : vector<2x32xf32>
    %50 = vector.extract_strided_slice %43 {offsets = [0, 32], sizes = [2, 32], strides = [1, 1]} : vector<2x128xf32> to vector<2x32xf32>
    %51 = arith.negf %50 : vector<2x32xf32>
    %52 = math.exp %51 : vector<2x32xf32>
    %cst_18 = arith.constant 1.000000e+00 : f32
    %53 = vector.broadcast %cst_18 : f32 to vector<2x32xf32>
    %54 = arith.addf %53, %52 : vector<2x32xf32>
    %55 = arith.divf %53, %54 : vector<2x32xf32>
    %56 = vector.extract_strided_slice %43 {offsets = [0, 64], sizes = [2, 32], strides = [1, 1]} : vector<2x128xf32> to vector<2x32xf32>
    %57 = math.tanh %56 : vector<2x32xf32>
    %58 = vector.extract_strided_slice %43 {offsets = [0, 96], sizes = [2, 32], strides = [1, 1]} : vector<2x128xf32> to vector<2x32xf32>
    %59 = arith.negf %58 : vector<2x32xf32>
    %60 = math.exp %59 : vector<2x32xf32>
    %cst_19 = arith.constant 1.000000e+00 : f32
    %61 = vector.broadcast %cst_19 : f32 to vector<2x32xf32>
    %62 = arith.addf %61, %60 : vector<2x32xf32>
    %63 = arith.divf %61, %62 : vector<2x32xf32>
    %64 = arith.mulf %55, %33 : vector<2x32xf32>
    %65 = arith.mulf %49, %57 : vector<2x32xf32>
    %66 = arith.addf %64, %65 : vector<2x32xf32>
    %67 = math.tanh %66 : vector<2x32xf32>
    %68 = arith.mulf %63, %67 : vector<2x32xf32>
    %c6_20 = arith.constant 6 : index
    %c0_21 = arith.constant 0 : index
    %c0_22 = arith.constant 0 : index
    %69 = vector.load %arg3[%c6_20, %c0_21, %c0_22] : memref<8x2x32xf32, #tpu.memory_space<vmem>>, vector<1x2x32xf32>
    %70 = vector.shape_cast %69 : vector<1x2x32xf32> to vector<2x32xf32>
    %71 = vector.shape_cast %68 : vector<2x32xf32> to vector<1x2x32xf32>
    tpu.vector_store %arg3[%c6_20, %c0_21, %c0_22], %71 {strides = array<i32>} : memref<8x2x32xf32, #tpu.memory_space<vmem>>, vector<1x2x32xf32>,
    %c5 = arith.constant 5 : index
    %c0_23 = arith.constant 0 : index
    %c0_24 = arith.constant 0 : index
    %72 = vector.load %arg1[%c5, %c0_23, %c0_24] : memref<8x2x128xf32, #tpu.memory_space<vmem>>, vector<1x2x128xf32>
    %73 = vector.shape_cast %72 : vector<1x2x128xf32> to vector<2x128xf32>
    %74 = arith.truncf %68 : vector<2x32xf32> to vector<2x32xbf16>
    %cst_25 = arith.constant dense<0.000000e+00> : vector<2x128xf32>
    %75 = tpu.matmul %74, %5, %cst_25 {dimension_numbers = #tpu.dot_dimension_numbers<[1], [0], [0], [1], [0, 0, 1, 1], [], []>} : vector<2x32xbf16>, vector<32x128xbf16>, vector<2x128xf32> -> vector<2x128xf32>
    %76 = arith.addf %73, %75 : vector<2x128xf32>
    %77 = vector.extract_strided_slice %76 {offsets = [0, 0], sizes = [2, 32], strides = [1, 1]} : vector<2x128xf32> to vector<2x32xf32>
    %78 = arith.negf %77 : vector<2x32xf32>
    %79 = math.exp %78 : vector<2x32xf32>
    %cst_26 = arith.constant 1.000000e+00 : f32
    %80 = vector.broadcast %cst_26 : f32 to vector<2x32xf32>
    %81 = arith.addf %80, %79 : vector<2x32xf32>
    %82 = arith.divf %80, %81 : vector<2x32xf32>
    %83 = vector.extract_strided_slice %76 {offsets = [0, 32], sizes = [2, 32], strides = [1, 1]} : vector<2x128xf32> to vector<2x32xf32>
    %84 = arith.negf %83 : vector<2x32xf32>
    %85 = math.exp %84 : vector<2x32xf32>
    %cst_27 = arith.constant 1.000000e+00 : f32
    %86 = vector.broadcast %cst_27 : f32 to vector<2x32xf32>
    %87 = arith.addf %86, %85 : vector<2x32xf32>
    %88 = arith.divf %86, %87 : vector<2x32xf32>
    %89 = vector.extract_strided_slice %76 {offsets = [0, 64], sizes = [2, 32], strides = [1, 1]} : vector<2x128xf32> to vector<2x32xf32>
    %90 = math.tanh %89 : vector<2x32xf32>
    %91 = vector.extract_strided_slice %76 {offsets = [0, 96], sizes = [2, 32], strides = [1, 1]} : vector<2x128xf32> to vector<2x32xf32>
    %92 = arith.negf %91 : vector<2x32xf32>
    %93 = math.exp %92 : vector<2x32xf32>
    %cst_28 = arith.constant 1.000000e+00 : f32
    %94 = vector.broadcast %cst_28 : f32 to vector<2x32xf32>
    %95 = arith.addf %94, %93 : vector<2x32xf32>
    %96 = arith.divf %94, %95 : vector<2x32xf32>
    %97 = arith.mulf %88, %66 : vector<2x32xf32>
    %98 = arith.mulf %82, %90 : vector<2x32xf32>
    %99 = arith.addf %97, %98 : vector<2x32xf32>
    %100 = math.tanh %99 : vector<2x32xf32>
    %101 = arith.mulf %96, %100 : vector<2x32xf32>
    %c5_29 = arith.constant 5 : index
    %c0_30 = arith.constant 0 : index
    %c0_31 = arith.constant 0 : index
    %102 = vector.load %arg3[%c5_29, %c0_30, %c0_31] : memref<8x2x32xf32, #tpu.memory_space<vmem>>, vector<1x2x32xf32>
    %103 = vector.shape_cast %102 : vector<1x2x32xf32> to vector<2x32xf32>
    %104 = vector.shape_cast %101 : vector<2x32xf32> to vector<1x2x32xf32>
    tpu.vector_store %arg3[%c5_29, %c0_30, %c0_31], %104 {strides = array<i32>} : memref<8x2x32xf32, #tpu.memory_space<vmem>>, vector<1x2x32xf32>,
    %c4 = arith.constant 4 : index
    %c0_32 = arith.constant 0 : index
    %c0_33 = arith.constant 0 : index
    %105 = vector.load %arg1[%c4, %c0_32, %c0_33] : memref<8x2x128xf32, #tpu.memory_space<vmem>>, vector<1x2x128xf32>
    %106 = vector.shape_cast %105 : vector<1x2x128xf32> to vector<2x128xf32>
    %107 = arith.truncf %101 : vector<2x32xf32> to vector<2x32xbf16>
    %cst_34 = arith.constant dense<0.000000e+00> : vector<2x128xf32>
    %108 = tpu.matmul %107, %5, %cst_34 {dimension_numbers = #tpu.dot_dimension_numbers<[1], [0], [0], [1], [0, 0, 1, 1], [], []>} : vector<2x32xbf16>, vector<32x128xbf16>, vector<2x128xf32> -> vector<2x128xf32>
    %109 = arith.addf %106, %108 : vector<2x128xf32>
    %110 = vector.extract_strided_slice %109 {offsets = [0, 0], sizes = [2, 32], strides = [1, 1]} : vector<2x128xf32> to vector<2x32xf32>
    %111 = arith.negf %110 : vector<2x32xf32>
    %112 = math.exp %111 : vector<2x32xf32>
    %cst_35 = arith.constant 1.000000e+00 : f32
    %113 = vector.broadcast %cst_35 : f32 to vector<2x32xf32>
    %114 = arith.addf %113, %112 : vector<2x32xf32>
    %115 = arith.divf %113, %114 : vector<2x32xf32>
    %116 = vector.extract_strided_slice %109 {offsets = [0, 32], sizes = [2, 32], strides = [1, 1]} : vector<2x128xf32> to vector<2x32xf32>
    %117 = arith.negf %116 : vector<2x32xf32>
    %118 = math.exp %117 : vector<2x32xf32>
    %cst_36 = arith.constant 1.000000e+00 : f32
    %119 = vector.broadcast %cst_36 : f32 to vector<2x32xf32>
    %120 = arith.addf %119, %118 : vector<2x32xf32>
    %121 = arith.divf %119, %120 : vector<2x32xf32>
    %122 = vector.extract_strided_slice %109 {offsets = [0, 64], sizes = [2, 32], strides = [1, 1]} : vector<2x128xf32> to vector<2x32xf32>
    %123 = math.tanh %122 : vector<2x32xf32>
    %124 = vector.extract_strided_slice %109 {offsets = [0, 96], sizes = [2, 32], strides = [1, 1]} : vector<2x128xf32> to vector<2x32xf32>
    %125 = arith.negf %124 : vector<2x32xf32>
    %126 = math.exp %125 : vector<2x32xf32>
    %cst_37 = arith.constant 1.000000e+00 : f32
    %127 = vector.broadcast %cst_37 : f32 to vector<2x32xf32>
    %128 = arith.addf %127, %126 : vector<2x32xf32>
    %129 = arith.divf %127, %128 : vector<2x32xf32>
    %130 = arith.mulf %121, %99 : vector<2x32xf32>
    %131 = arith.mulf %115, %123 : vector<2x32xf32>
    %132 = arith.addf %130, %131 : vector<2x32xf32>
    %133 = math.tanh %132 : vector<2x32xf32>
    %134 = arith.mulf %129, %133 : vector<2x32xf32>
    %c4_38 = arith.constant 4 : index
    %c0_39 = arith.constant 0 : index
    %c0_40 = arith.constant 0 : index
    %135 = vector.load %arg3[%c4_38, %c0_39, %c0_40] : memref<8x2x32xf32, #tpu.memory_space<vmem>>, vector<1x2x32xf32>
    %136 = vector.shape_cast %135 : vector<1x2x32xf32> to vector<2x32xf32>
    %137 = vector.shape_cast %134 : vector<2x32xf32> to vector<1x2x32xf32>
    tpu.vector_store %arg3[%c4_38, %c0_39, %c0_40], %137 {strides = array<i32>} : memref<8x2x32xf32, #tpu.memory_space<vmem>>, vector<1x2x32xf32>,
    %c3 = arith.constant 3 : index
    %c0_41 = arith.constant 0 : index
    %c0_42 = arith.constant 0 : index
    %138 = vector.load %arg1[%c3, %c0_41, %c0_42] : memref<8x2x128xf32, #tpu.memory_space<vmem>>, vector<1x2x128xf32>
    %139 = vector.shape_cast %138 : vector<1x2x128xf32> to vector<2x128xf32>
    %140 = arith.truncf %134 : vector<2x32xf32> to vector<2x32xbf16>
    %cst_43 = arith.constant dense<0.000000e+00> : vector<2x128xf32>
    %141 = tpu.matmul %140, %5, %cst_43 {dimension_numbers = #tpu.dot_dimension_numbers<[1], [0], [0], [1], [0, 0, 1, 1], [], []>} : vector<2x32xbf16>, vector<32x128xbf16>, vector<2x128xf32> -> vector<2x128xf32>
    %142 = arith.addf %139, %141 : vector<2x128xf32>
    %143 = vector.extract_strided_slice %142 {offsets = [0, 0], sizes = [2, 32], strides = [1, 1]} : vector<2x128xf32> to vector<2x32xf32>
    %144 = arith.negf %143 : vector<2x32xf32>
    %145 = math.exp %144 : vector<2x32xf32>
    %cst_44 = arith.constant 1.000000e+00 : f32
    %146 = vector.broadcast %cst_44 : f32 to vector<2x32xf32>
    %147 = arith.addf %146, %145 : vector<2x32xf32>
    %148 = arith.divf %146, %147 : vector<2x32xf32>
    %149 = vector.extract_strided_slice %142 {offsets = [0, 32], sizes = [2, 32], strides = [1, 1]} : vector<2x128xf32> to vector<2x32xf32>
    %150 = arith.negf %149 : vector<2x32xf32>
    %151 = math.exp %150 : vector<2x32xf32>
    %cst_45 = arith.constant 1.000000e+00 : f32
    %152 = vector.broadcast %cst_45 : f32 to vector<2x32xf32>
    %153 = arith.addf %152, %151 : vector<2x32xf32>
    %154 = arith.divf %152, %153 : vector<2x32xf32>
    %155 = vector.extract_strided_slice %142 {offsets = [0, 64], sizes = [2, 32], strides = [1, 1]} : vector<2x128xf32> to vector<2x32xf32>
    %156 = math.tanh %155 : vector<2x32xf32>
    %157 = vector.extract_strided_slice %142 {offsets = [0, 96], sizes = [2, 32], strides = [1, 1]} : vector<2x128xf32> to vector<2x32xf32>
    %158 = arith.negf %157 : vector<2x32xf32>
    %159 = math.exp %158 : vector<2x32xf32>
    %cst_46 = arith.constant 1.000000e+00 : f32
    %160 = vector.broadcast %cst_46 : f32 to vector<2x32xf32>
    %161 = arith.addf %160, %159 : vector<2x32xf32>
    %162 = arith.divf %160, %161 : vector<2x32xf32>
    %163 = arith.mulf %154, %132 : vector<2x32xf32>
    %164 = arith.mulf %148, %156 : vector<2x32xf32>
    %165 = arith.addf %163, %164 : vector<2x32xf32>
    %166 = math.tanh %165 : vector<2x32xf32>
    %167 = arith.mulf %162, %166 : vector<2x32xf32>
    %c3_47 = arith.constant 3 : index
    %c0_48 = arith.constant 0 : index
    %c0_49 = arith.constant 0 : index
    %168 = vector.load %arg3[%c3_47, %c0_48, %c0_49] : memref<8x2x32xf32, #tpu.memory_space<vmem>>, vector<1x2x32xf32>
    %169 = vector.shape_cast %168 : vector<1x2x32xf32> to vector<2x32xf32>
    %170 = vector.shape_cast %167 : vector<2x32xf32> to vector<1x2x32xf32>
    tpu.vector_store %arg3[%c3_47, %c0_48, %c0_49], %170 {strides = array<i32>} : memref<8x2x32xf32, #tpu.memory_space<vmem>>, vector<1x2x32xf32>,
    %c2 = arith.constant 2 : index
    %c0_50 = arith.constant 0 : index
    %c0_51 = arith.constant 0 : index
    %171 = vector.load %arg1[%c2, %c0_50, %c0_51] : memref<8x2x128xf32, #tpu.memory_space<vmem>>, vector<1x2x128xf32>
    %172 = vector.shape_cast %171 : vector<1x2x128xf32> to vector<2x128xf32>
    %173 = arith.truncf %167 : vector<2x32xf32> to vector<2x32xbf16>
    %cst_52 = arith.constant dense<0.000000e+00> : vector<2x128xf32>
    %174 = tpu.matmul %173, %5, %cst_52 {dimension_numbers = #tpu.dot_dimension_numbers<[1], [0], [0], [1], [0, 0, 1, 1], [], []>} : vector<2x32xbf16>, vector<32x128xbf16>, vector<2x128xf32> -> vector<2x128xf32>
    %175 = arith.addf %172, %174 : vector<2x128xf32>
    %176 = vector.extract_strided_slice %175 {offsets = [0, 0], sizes = [2, 32], strides = [1, 1]} : vector<2x128xf32> to vector<2x32xf32>
    %177 = arith.negf %176 : vector<2x32xf32>
    %178 = math.exp %177 : vector<2x32xf32>
    %cst_53 = arith.constant 1.000000e+00 : f32
    %179 = vector.broadcast %cst_53 : f32 to vector<2x32xf32>
    %180 = arith.addf %179, %178 : vector<2x32xf32>
    %181 = arith.divf %179, %180 : vector<2x32xf32>
    %182 = vector.extract_strided_slice %175 {offsets = [0, 32], sizes = [2, 32], strides = [1, 1]} : vector<2x128xf32> to vector<2x32xf32>
    %183 = arith.negf %182 : vector<2x32xf32>
    %184 = math.exp %183 : vector<2x32xf32>
    %cst_54 = arith.constant 1.000000e+00 : f32
    %185 = vector.broadcast %cst_54 : f32 to vector<2x32xf32>
    %186 = arith.addf %185, %184 : vector<2x32xf32>
    %187 = arith.divf %185, %186 : vector<2x32xf32>
    %188 = vector.extract_strided_slice %175 {offsets = [0, 64], sizes = [2, 32], strides = [1, 1]} : vector<2x128xf32> to vector<2x32xf32>
    %189 = math.tanh %188 : vector<2x32xf32>
    %190 = vector.extract_strided_slice %175 {offsets = [0, 96], sizes = [2, 32], strides = [1, 1]} : vector<2x128xf32> to vector<2x32xf32>
    %191 = arith.negf %190 : vector<2x32xf32>
    %192 = math.exp %191 : vector<2x32xf32>
    %cst_55 = arith.constant 1.000000e+00 : f32
    %193 = vector.broadcast %cst_55 : f32 to vector<2x32xf32>
    %194 = arith.addf %193, %192 : vector<2x32xf32>
    %195 = arith.divf %193, %194 : vector<2x32xf32>
    %196 = arith.mulf %187, %165 : vector<2x32xf32>
    %197 = arith.mulf %181, %189 : vector<2x32xf32>
    %198 = arith.addf %196, %197 : vector<2x32xf32>
    %199 = math.tanh %198 : vector<2x32xf32>
    %200 = arith.mulf %195, %199 : vector<2x32xf32>
    %c2_56 = arith.constant 2 : index
    %c0_57 = arith.constant 0 : index
    %c0_58 = arith.constant 0 : index
    %201 = vector.load %arg3[%c2_56, %c0_57, %c0_58] : memref<8x2x32xf32, #tpu.memory_space<vmem>>, vector<1x2x32xf32>
    %202 = vector.shape_cast %201 : vector<1x2x32xf32> to vector<2x32xf32>
    %203 = vector.shape_cast %200 : vector<2x32xf32> to vector<1x2x32xf32>
    tpu.vector_store %arg3[%c2_56, %c0_57, %c0_58], %203 {strides = array<i32>} : memref<8x2x32xf32, #tpu.memory_space<vmem>>, vector<1x2x32xf32>,
    %c1 = arith.constant 1 : index
    %c0_59 = arith.constant 0 : index
    %c0_60 = arith.constant 0 : index
    %204 = vector.load %arg1[%c1, %c0_59, %c0_60] : memref<8x2x128xf32, #tpu.memory_space<vmem>>, vector<1x2x128xf32>
    %205 = vector.shape_cast %204 : vector<1x2x128xf32> to vector<2x128xf32>
    %206 = arith.truncf %200 : vector<2x32xf32> to vector<2x32xbf16>
    %cst_61 = arith.constant dense<0.000000e+00> : vector<2x128xf32>
    %207 = tpu.matmul %206, %5, %cst_61 {dimension_numbers = #tpu.dot_dimension_numbers<[1], [0], [0], [1], [0, 0, 1, 1], [], []>} : vector<2x32xbf16>, vector<32x128xbf16>, vector<2x128xf32> -> vector<2x128xf32>
    %208 = arith.addf %205, %207 : vector<2x128xf32>
    %209 = vector.extract_strided_slice %208 {offsets = [0, 0], sizes = [2, 32], strides = [1, 1]} : vector<2x128xf32> to vector<2x32xf32>
    %210 = arith.negf %209 : vector<2x32xf32>
    %211 = math.exp %210 : vector<2x32xf32>
    %cst_62 = arith.constant 1.000000e+00 : f32
    %212 = vector.broadcast %cst_62 : f32 to vector<2x32xf32>
    %213 = arith.addf %212, %211 : vector<2x32xf32>
    %214 = arith.divf %212, %213 : vector<2x32xf32>
    %215 = vector.extract_strided_slice %208 {offsets = [0, 32], sizes = [2, 32], strides = [1, 1]} : vector<2x128xf32> to vector<2x32xf32>
    %216 = arith.negf %215 : vector<2x32xf32>
    %217 = math.exp %216 : vector<2x32xf32>
    %cst_63 = arith.constant 1.000000e+00 : f32
    %218 = vector.broadcast %cst_63 : f32 to vector<2x32xf32>
    %219 = arith.addf %218, %217 : vector<2x32xf32>
    %220 = arith.divf %218, %219 : vector<2x32xf32>
    %221 = vector.extract_strided_slice %208 {offsets = [0, 64], sizes = [2, 32], strides = [1, 1]} : vector<2x128xf32> to vector<2x32xf32>
    %222 = math.tanh %221 : vector<2x32xf32>
    %223 = vector.extract_strided_slice %208 {offsets = [0, 96], sizes = [2, 32], strides = [1, 1]} : vector<2x128xf32> to vector<2x32xf32>
    %224 = arith.negf %223 : vector<2x32xf32>
    %225 = math.exp %224 : vector<2x32xf32>
    %cst_64 = arith.constant 1.000000e+00 : f32
    %226 = vector.broadcast %cst_64 : f32 to vector<2x32xf32>
    %227 = arith.addf %226, %225 : vector<2x32xf32>
    %228 = arith.divf %226, %227 : vector<2x32xf32>
    %229 = arith.mulf %220, %198 : vector<2x32xf32>
    %230 = arith.mulf %214, %222 : vector<2x32xf32>
    %231 = arith.addf %229, %230 : vector<2x32xf32>
    %232 = math.tanh %231 : vector<2x32xf32>
    %233 = arith.mulf %228, %232 : vector<2x32xf32>
    %c1_65 = arith.constant 1 : index
    %c0_66 = arith.constant 0 : index
    %c0_67 = arith.constant 0 : index
    %234 = vector.load %arg3[%c1_65, %c0_66, %c0_67] : memref<8x2x32xf32, #tpu.memory_space<vmem>>, vector<1x2x32xf32>
    %235 = vector.shape_cast %234 : vector<1x2x32xf32> to vector<2x32xf32>
    %236 = vector.shape_cast %233 : vector<2x32xf32> to vector<1x2x32xf32>
    tpu.vector_store %arg3[%c1_65, %c0_66, %c0_67], %236 {strides = array<i32>} : memref<8x2x32xf32, #tpu.memory_space<vmem>>, vector<1x2x32xf32>,
    %c0_68 = arith.constant 0 : index
    %c0_69 = arith.constant 0 : index
    %c0_70 = arith.constant 0 : index
    %237 = vector.load %arg1[%c0_68, %c0_69, %c0_70] : memref<8x2x128xf32, #tpu.memory_space<vmem>>, vector<1x2x128xf32>
    %238 = vector.shape_cast %237 : vector<1x2x128xf32> to vector<2x128xf32>
    %239 = arith.truncf %233 : vector<2x32xf32> to vector<2x32xbf16>
    %cst_71 = arith.constant dense<0.000000e+00> : vector<2x128xf32>
    %240 = tpu.matmul %239, %5, %cst_71 {dimension_numbers = #tpu.dot_dimension_numbers<[1], [0], [0], [1], [0, 0, 1, 1], [], []>} : vector<2x32xbf16>, vector<32x128xbf16>, vector<2x128xf32> -> vector<2x128xf32>
    %241 = arith.addf %238, %240 : vector<2x128xf32>
    %242 = vector.extract_strided_slice %241 {offsets = [0, 0], sizes = [2, 32], strides = [1, 1]} : vector<2x128xf32> to vector<2x32xf32>
    %243 = arith.negf %242 : vector<2x32xf32>
    %244 = math.exp %243 : vector<2x32xf32>
    %cst_72 = arith.constant 1.000000e+00 : f32
    %245 = vector.broadcast %cst_72 : f32 to vector<2x32xf32>
    %246 = arith.addf %245, %244 : vector<2x32xf32>
    %247 = arith.divf %245, %246 : vector<2x32xf32>
    %248 = vector.extract_strided_slice %241 {offsets = [0, 32], sizes = [2, 32], strides = [1, 1]} : vector<2x128xf32> to vector<2x32xf32>
    %249 = arith.negf %248 : vector<2x32xf32>
    %250 = math.exp %249 : vector<2x32xf32>
    %cst_73 = arith.constant 1.000000e+00 : f32
    %251 = vector.broadcast %cst_73 : f32 to vector<2x32xf32>
    %252 = arith.addf %251, %250 : vector<2x32xf32>
    %253 = arith.divf %251, %252 : vector<2x32xf32>
    %254 = vector.extract_strided_slice %241 {offsets = [0, 64], sizes = [2, 32], strides = [1, 1]} : vector<2x128xf32> to vector<2x32xf32>
    %255 = math.tanh %254 : vector<2x32xf32>
    %256 = vector.extract_strided_slice %241 {offsets = [0, 96], sizes = [2, 32], strides = [1, 1]} : vector<2x128xf32> to vector<2x32xf32>
    %257 = arith.negf %256 : vector<2x32xf32>
    %258 = math.exp %257 : vector<2x32xf32>
    %cst_74 = arith.constant 1.000000e+00 : f32
    %259 = vector.broadcast %cst_74 : f32 to vector<2x32xf32>
    %260 = arith.addf %259, %258 : vector<2x32xf32>
    %261 = arith.divf %259, %260 : vector<2x32xf32>
    %262 = arith.mulf %253, %231 : vector<2x32xf32>
    %263 = arith.mulf %247, %255 : vector<2x32xf32>
    %264 = arith.addf %262, %263 : vector<2x32xf32>
    %265 = math.tanh %264 : vector<2x32xf32>
    %266 = arith.mulf %261, %265 : vector<2x32xf32>
    %c0_75 = arith.constant 0 : index
    %c0_76 = arith.constant 0 : index
    %c0_77 = arith.constant 0 : index
    %267 = vector.load %arg3[%c0_75, %c0_76, %c0_77] : memref<8x2x32xf32, #tpu.memory_space<vmem>>, vector<1x2x32xf32>
    %268 = vector.shape_cast %267 : vector<1x2x32xf32> to vector<2x32xf32>
    %269 = vector.shape_cast %266 : vector<2x32xf32> to vector<1x2x32xf32>
    tpu.vector_store %arg3[%c0_75, %c0_76, %c0_77], %269 {strides = array<i32>} : memref<8x2x32xf32, #tpu.memory_space<vmem>>, vector<1x2x32xf32>,
    %c0_78 = arith.constant 0 : index
    %c0_79 = arith.constant 0 : index
    %270 = vector.load %arg4[%c0_78, %c0_79] : memref<2x32xf32, #tpu.memory_space<vmem>>, vector<2x32xf32>
    tpu.vector_store %arg4[%c0_78, %c0_79], %266 {strides = array<i32>} : memref<2x32xf32, #tpu.memory_space<vmem>>, vector<2x32xf32>,
    %c0_80 = arith.constant 0 : index
    %c0_81 = arith.constant 0 : index
    %271 = vector.load %arg5[%c0_80, %c0_81] : memref<2x32xf32, #tpu.memory_space<vmem>>, vector<2x32xf32>
    tpu.vector_store %arg5[%c0_80, %c0_81], %264 {strides = array<i32>} : memref<2x32xf32, #tpu.memory_space<vmem>>, vector<2x32xf32>,
    return
  }
  func.func @transform_0(%arg0: i32) -> (i32, i32, i32) {
    %c0_i32 = arith.constant 0 : i32
    %0 = arith.subi %c0_i32, %arg0 : i32
    %c0_i32_0 = arith.constant 0 : i32
    %c0_i32_1 = arith.constant 0 : i32
    %c0_i32_2 = arith.constant 0 : i32
    return %0, %c0_i32_0, %c0_i32_1 : i32, i32, i32
  }
  func.func @transform_1(%arg0: i32) -> (i32, i32) {
    %c0_i32 = arith.constant 0 : i32
    %c0_i32_0 = arith.constant 0 : i32
    %c0_i32_1 = arith.constant 0 : i32
    return %c0_i32, %c0_i32_0 : i32, i32
  }
  func.func @transform_2(%arg0: i32) -> (i32, i32, i32) {
    %c0_i32 = arith.constant 0 : i32
    %0 = arith.subi %c0_i32, %arg0 : i32
    %c0_i32_0 = arith.constant 0 : i32
    %c0_i32_1 = arith.constant 0 : i32
    %c0_i32_2 = arith.constant 0 : i32
    return %0, %c0_i32_0, %c0_i32_1 : i32, i32, i32
  }
}

module attributes {stable_mosaic.version = 11 : i64} {
  func.func @_proj1_kernel(%arg0: memref<16x16xf32, #tpu.memory_space<vmem>>, %arg1: memref<16x128xbf16, #tpu.memory_space<vmem>>, %arg2: memref<1x128xf32, #tpu.memory_space<vmem>>, %arg3: memref<16x128xf32, #tpu.memory_space<vmem>>) attributes {dimension_semantics = [], scalar_prefetch = 0 : i64, scratch_operands = 0 : i64, tpu.core_type = #tpu.core_type<tc>} {
    %c0 = arith.constant 0 : index
    %c0_0 = arith.constant 0 : index
    %0 = vector.load %arg0[%c0, %c0_0] : memref<16x16xf32, #tpu.memory_space<vmem>>, vector<16x16xf32>
    %1 = arith.truncf %0 : vector<16x16xf32> to vector<16x16xbf16>
    %c0_1 = arith.constant 0 : index
    %c0_2 = arith.constant 0 : index
    %2 = vector.load %arg1[%c0_1, %c0_2] : memref<16x128xbf16, #tpu.memory_space<vmem>>, vector<16x128xbf16>
    %cst = arith.constant dense<0.000000e+00> : vector<16x128xf32>
    %3 = tpu.matmul %1, %2, %cst {dimension_numbers = #tpu.dot_dimension_numbers<[1], [0], [0], [1], [0, 0, 1, 1], [], []>} : vector<16x16xbf16>, vector<16x128xbf16>, vector<16x128xf32> -> vector<16x128xf32>
    %c0_3 = arith.constant 0 : index
    %c0_4 = arith.constant 0 : index
    %4 = vector.load %arg2[%c0_3, %c0_4] : memref<1x128xf32, #tpu.memory_space<vmem>>, vector<1x128xf32>
    %5 = vector.broadcast %4 : vector<1x128xf32> to vector<16x128xf32>
    %6 = arith.addf %3, %5 : vector<16x128xf32>
    %c0_5 = arith.constant 0 : index
    %c0_6 = arith.constant 0 : index
    %7 = vector.load %arg3[%c0_5, %c0_6] : memref<16x128xf32, #tpu.memory_space<vmem>>, vector<16x128xf32>
    tpu.vector_store %arg3[%c0_5, %c0_6], %6 {strides = array<i32>} : memref<16x128xf32, #tpu.memory_space<vmem>>, vector<16x128xf32>,
    return
  }
}

module attributes {stable_mosaic.version = 11 : i64} {
  func.func @kernel(%arg0: i32, %arg1: memref<8x2x128xf32, #tpu.memory_space<vmem>>, %arg2: memref<32x128xbf16, #tpu.memory_space<vmem>>, %arg3: memref<8x2x32xf32, #tpu.memory_space<vmem>>, %arg4: memref<2x32xf32, #tpu.memory_space<vmem>>, %arg5: memref<2x32xf32, #tpu.memory_space<vmem>>) attributes {dimension_semantics = [#tpu.dimension_semantics<arbitrary>], iteration_bounds = array<i64: 1>, scalar_prefetch = 0 : i64, scratch_operands = 2 : i64, tpu.core_type = #tpu.core_type<tc>, window_params = [{transform_indices = @transform_0, window_bounds = array<i64: 8, 2, 128>}, {pipeline_mode = #tpu.pipeline_mode<synchronous>, transform_indices = @transform_1, window_bounds = array<i64: 32, 128>}, {transform_indices = @transform_2, window_bounds = array<i64: 8, 2, 32>}]} {
    %c0_i32 = arith.constant 0 : i32
    %0 = arith.cmpi eq, %arg0, %c0_i32 : i32
    %1 = arith.extui %0 : i1 to i32
    %c0_i32_0 = arith.constant 0 : i32
    %2 = arith.cmpi ne, %1, %c0_i32_0 : i32
    scf.if %2 {
      %cst_82 = arith.constant 0.000000e+00 : f32
      %272 = vector.broadcast %cst_82 : f32 to vector<2x32xf32>
      %c0_83 = arith.constant 0 : index
      %c0_84 = arith.constant 0 : index
      %273 = vector.load %arg4[%c0_83, %c0_84] : memref<2x32xf32, #tpu.memory_space<vmem>>, vector<2x32xf32>
      tpu.vector_store %arg4[%c0_83, %c0_84], %272 {strides = array<i32>} : memref<2x32xf32, #tpu.memory_space<vmem>>, vector<2x32xf32>,
      %cst_85 = arith.constant 0.000000e+00 : f32
      %274 = vector.broadcast %cst_85 : f32 to vector<2x32xf32>
      %c0_86 = arith.constant 0 : index
      %c0_87 = arith.constant 0 : index
      %275 = vector.load %arg5[%c0_86, %c0_87] : memref<2x32xf32, #tpu.memory_space<vmem>>, vector<2x32xf32>
      tpu.vector_store %arg5[%c0_86, %c0_87], %274 {strides = array<i32>} : memref<2x32xf32, #tpu.memory_space<vmem>>, vector<2x32xf32>,
    } else {
    }
    %c0 = arith.constant 0 : index
    %c0_1 = arith.constant 0 : index
    %3 = vector.load %arg4[%c0, %c0_1] : memref<2x32xf32, #tpu.memory_space<vmem>>, vector<2x32xf32>
    %c0_2 = arith.constant 0 : index
    %c0_3 = arith.constant 0 : index
    %4 = vector.load %arg5[%c0_2, %c0_3] : memref<2x32xf32, #tpu.memory_space<vmem>>, vector<2x32xf32>
    %c0_4 = arith.constant 0 : index
    %c0_5 = arith.constant 0 : index
    %5 = vector.load %arg2[%c0_4, %c0_5] : memref<32x128xbf16, #tpu.memory_space<vmem>>, vector<32x128xbf16>
    %c0_6 = arith.constant 0 : index
    %c0_7 = arith.constant 0 : index
    %c0_8 = arith.constant 0 : index
    %6 = vector.load %arg1[%c0_6, %c0_7, %c0_8] : memref<8x2x128xf32, #tpu.memory_space<vmem>>, vector<1x2x128xf32>
    %7 = vector.shape_cast %6 : vector<1x2x128xf32> to vector<2x128xf32>
    %8 = arith.truncf %3 : vector<2x32xf32> to vector<2x32xbf16>
    %cst = arith.constant dense<0.000000e+00> : vector<2x128xf32>
    %9 = tpu.matmul %8, %5, %cst {dimension_numbers = #tpu.dot_dimension_numbers<[1], [0], [0], [1], [0, 0, 1, 1], [], []>} : vector<2x32xbf16>, vector<32x128xbf16>, vector<2x128xf32> -> vector<2x128xf32>
    %10 = arith.addf %7, %9 : vector<2x128xf32>
    %11 = vector.extract_strided_slice %10 {offsets = [0, 0], sizes = [2, 32], strides = [1, 1]} : vector<2x128xf32> to vector<2x32xf32>
    %12 = arith.negf %11 : vector<2x32xf32>
    %13 = math.exp %12 : vector<2x32xf32>
    %cst_9 = arith.constant 1.000000e+00 : f32
    %14 = vector.broadcast %cst_9 : f32 to vector<2x32xf32>
    %15 = arith.addf %14, %13 : vector<2x32xf32>
    %16 = arith.divf %14, %15 : vector<2x32xf32>
    %17 = vector.extract_strided_slice %10 {offsets = [0, 32], sizes = [2, 32], strides = [1, 1]} : vector<2x128xf32> to vector<2x32xf32>
    %18 = arith.negf %17 : vector<2x32xf32>
    %19 = math.exp %18 : vector<2x32xf32>
    %cst_10 = arith.constant 1.000000e+00 : f32
    %20 = vector.broadcast %cst_10 : f32 to vector<2x32xf32>
    %21 = arith.addf %20, %19 : vector<2x32xf32>
    %22 = arith.divf %20, %21 : vector<2x32xf32>
    %23 = vector.extract_strided_slice %10 {offsets = [0, 64], sizes = [2, 32], strides = [1, 1]} : vector<2x128xf32> to vector<2x32xf32>
    %24 = math.tanh %23 : vector<2x32xf32>
    %25 = vector.extract_strided_slice %10 {offsets = [0, 96], sizes = [2, 32], strides = [1, 1]} : vector<2x128xf32> to vector<2x32xf32>
    %26 = arith.negf %25 : vector<2x32xf32>
    %27 = math.exp %26 : vector<2x32xf32>
    %cst_11 = arith.constant 1.000000e+00 : f32
    %28 = vector.broadcast %cst_11 : f32 to vector<2x32xf32>
    %29 = arith.addf %28, %27 : vector<2x32xf32>
    %30 = arith.divf %28, %29 : vector<2x32xf32>
    %31 = arith.mulf %22, %4 : vector<2x32xf32>
    %32 = arith.mulf %16, %24 : vector<2x32xf32>
    %33 = arith.addf %31, %32 : vector<2x32xf32>
    %34 = math.tanh %33 : vector<2x32xf32>
    %35 = arith.mulf %30, %34 : vector<2x32xf32>
    %c0_12 = arith.constant 0 : index
    %c0_13 = arith.constant 0 : index
    %c0_14 = arith.constant 0 : index
    %36 = vector.load %arg3[%c0_12, %c0_13, %c0_14] : memref<8x2x32xf32, #tpu.memory_space<vmem>>, vector<1x2x32xf32>
    %37 = vector.shape_cast %36 : vector<1x2x32xf32> to vector<2x32xf32>
    %38 = vector.shape_cast %35 : vector<2x32xf32> to vector<1x2x32xf32>
    tpu.vector_store %arg3[%c0_12, %c0_13, %c0_14], %38 {strides = array<i32>} : memref<8x2x32xf32, #tpu.memory_space<vmem>>, vector<1x2x32xf32>,
    %c1 = arith.constant 1 : index
    %c0_15 = arith.constant 0 : index
    %c0_16 = arith.constant 0 : index
    %39 = vector.load %arg1[%c1, %c0_15, %c0_16] : memref<8x2x128xf32, #tpu.memory_space<vmem>>, vector<1x2x128xf32>
    %40 = vector.shape_cast %39 : vector<1x2x128xf32> to vector<2x128xf32>
    %41 = arith.truncf %35 : vector<2x32xf32> to vector<2x32xbf16>
    %cst_17 = arith.constant dense<0.000000e+00> : vector<2x128xf32>
    %42 = tpu.matmul %41, %5, %cst_17 {dimension_numbers = #tpu.dot_dimension_numbers<[1], [0], [0], [1], [0, 0, 1, 1], [], []>} : vector<2x32xbf16>, vector<32x128xbf16>, vector<2x128xf32> -> vector<2x128xf32>
    %43 = arith.addf %40, %42 : vector<2x128xf32>
    %44 = vector.extract_strided_slice %43 {offsets = [0, 0], sizes = [2, 32], strides = [1, 1]} : vector<2x128xf32> to vector<2x32xf32>
    %45 = arith.negf %44 : vector<2x32xf32>
    %46 = math.exp %45 : vector<2x32xf32>
    %cst_18 = arith.constant 1.000000e+00 : f32
    %47 = vector.broadcast %cst_18 : f32 to vector<2x32xf32>
    %48 = arith.addf %47, %46 : vector<2x32xf32>
    %49 = arith.divf %47, %48 : vector<2x32xf32>
    %50 = vector.extract_strided_slice %43 {offsets = [0, 32], sizes = [2, 32], strides = [1, 1]} : vector<2x128xf32> to vector<2x32xf32>
    %51 = arith.negf %50 : vector<2x32xf32>
    %52 = math.exp %51 : vector<2x32xf32>
    %cst_19 = arith.constant 1.000000e+00 : f32
    %53 = vector.broadcast %cst_19 : f32 to vector<2x32xf32>
    %54 = arith.addf %53, %52 : vector<2x32xf32>
    %55 = arith.divf %53, %54 : vector<2x32xf32>
    %56 = vector.extract_strided_slice %43 {offsets = [0, 64], sizes = [2, 32], strides = [1, 1]} : vector<2x128xf32> to vector<2x32xf32>
    %57 = math.tanh %56 : vector<2x32xf32>
    %58 = vector.extract_strided_slice %43 {offsets = [0, 96], sizes = [2, 32], strides = [1, 1]} : vector<2x128xf32> to vector<2x32xf32>
    %59 = arith.negf %58 : vector<2x32xf32>
    %60 = math.exp %59 : vector<2x32xf32>
    %cst_20 = arith.constant 1.000000e+00 : f32
    %61 = vector.broadcast %cst_20 : f32 to vector<2x32xf32>
    %62 = arith.addf %61, %60 : vector<2x32xf32>
    %63 = arith.divf %61, %62 : vector<2x32xf32>
    %64 = arith.mulf %55, %33 : vector<2x32xf32>
    %65 = arith.mulf %49, %57 : vector<2x32xf32>
    %66 = arith.addf %64, %65 : vector<2x32xf32>
    %67 = math.tanh %66 : vector<2x32xf32>
    %68 = arith.mulf %63, %67 : vector<2x32xf32>
    %c1_21 = arith.constant 1 : index
    %c0_22 = arith.constant 0 : index
    %c0_23 = arith.constant 0 : index
    %69 = vector.load %arg3[%c1_21, %c0_22, %c0_23] : memref<8x2x32xf32, #tpu.memory_space<vmem>>, vector<1x2x32xf32>
    %70 = vector.shape_cast %69 : vector<1x2x32xf32> to vector<2x32xf32>
    %71 = vector.shape_cast %68 : vector<2x32xf32> to vector<1x2x32xf32>
    tpu.vector_store %arg3[%c1_21, %c0_22, %c0_23], %71 {strides = array<i32>} : memref<8x2x32xf32, #tpu.memory_space<vmem>>, vector<1x2x32xf32>,
    %c2 = arith.constant 2 : index
    %c0_24 = arith.constant 0 : index
    %c0_25 = arith.constant 0 : index
    %72 = vector.load %arg1[%c2, %c0_24, %c0_25] : memref<8x2x128xf32, #tpu.memory_space<vmem>>, vector<1x2x128xf32>
    %73 = vector.shape_cast %72 : vector<1x2x128xf32> to vector<2x128xf32>
    %74 = arith.truncf %68 : vector<2x32xf32> to vector<2x32xbf16>
    %cst_26 = arith.constant dense<0.000000e+00> : vector<2x128xf32>
    %75 = tpu.matmul %74, %5, %cst_26 {dimension_numbers = #tpu.dot_dimension_numbers<[1], [0], [0], [1], [0, 0, 1, 1], [], []>} : vector<2x32xbf16>, vector<32x128xbf16>, vector<2x128xf32> -> vector<2x128xf32>
    %76 = arith.addf %73, %75 : vector<2x128xf32>
    %77 = vector.extract_strided_slice %76 {offsets = [0, 0], sizes = [2, 32], strides = [1, 1]} : vector<2x128xf32> to vector<2x32xf32>
    %78 = arith.negf %77 : vector<2x32xf32>
    %79 = math.exp %78 : vector<2x32xf32>
    %cst_27 = arith.constant 1.000000e+00 : f32
    %80 = vector.broadcast %cst_27 : f32 to vector<2x32xf32>
    %81 = arith.addf %80, %79 : vector<2x32xf32>
    %82 = arith.divf %80, %81 : vector<2x32xf32>
    %83 = vector.extract_strided_slice %76 {offsets = [0, 32], sizes = [2, 32], strides = [1, 1]} : vector<2x128xf32> to vector<2x32xf32>
    %84 = arith.negf %83 : vector<2x32xf32>
    %85 = math.exp %84 : vector<2x32xf32>
    %cst_28 = arith.constant 1.000000e+00 : f32
    %86 = vector.broadcast %cst_28 : f32 to vector<2x32xf32>
    %87 = arith.addf %86, %85 : vector<2x32xf32>
    %88 = arith.divf %86, %87 : vector<2x32xf32>
    %89 = vector.extract_strided_slice %76 {offsets = [0, 64], sizes = [2, 32], strides = [1, 1]} : vector<2x128xf32> to vector<2x32xf32>
    %90 = math.tanh %89 : vector<2x32xf32>
    %91 = vector.extract_strided_slice %76 {offsets = [0, 96], sizes = [2, 32], strides = [1, 1]} : vector<2x128xf32> to vector<2x32xf32>
    %92 = arith.negf %91 : vector<2x32xf32>
    %93 = math.exp %92 : vector<2x32xf32>
    %cst_29 = arith.constant 1.000000e+00 : f32
    %94 = vector.broadcast %cst_29 : f32 to vector<2x32xf32>
    %95 = arith.addf %94, %93 : vector<2x32xf32>
    %96 = arith.divf %94, %95 : vector<2x32xf32>
    %97 = arith.mulf %88, %66 : vector<2x32xf32>
    %98 = arith.mulf %82, %90 : vector<2x32xf32>
    %99 = arith.addf %97, %98 : vector<2x32xf32>
    %100 = math.tanh %99 : vector<2x32xf32>
    %101 = arith.mulf %96, %100 : vector<2x32xf32>
    %c2_30 = arith.constant 2 : index
    %c0_31 = arith.constant 0 : index
    %c0_32 = arith.constant 0 : index
    %102 = vector.load %arg3[%c2_30, %c0_31, %c0_32] : memref<8x2x32xf32, #tpu.memory_space<vmem>>, vector<1x2x32xf32>
    %103 = vector.shape_cast %102 : vector<1x2x32xf32> to vector<2x32xf32>
    %104 = vector.shape_cast %101 : vector<2x32xf32> to vector<1x2x32xf32>
    tpu.vector_store %arg3[%c2_30, %c0_31, %c0_32], %104 {strides = array<i32>} : memref<8x2x32xf32, #tpu.memory_space<vmem>>, vector<1x2x32xf32>,
    %c3 = arith.constant 3 : index
    %c0_33 = arith.constant 0 : index
    %c0_34 = arith.constant 0 : index
    %105 = vector.load %arg1[%c3, %c0_33, %c0_34] : memref<8x2x128xf32, #tpu.memory_space<vmem>>, vector<1x2x128xf32>
    %106 = vector.shape_cast %105 : vector<1x2x128xf32> to vector<2x128xf32>
    %107 = arith.truncf %101 : vector<2x32xf32> to vector<2x32xbf16>
    %cst_35 = arith.constant dense<0.000000e+00> : vector<2x128xf32>
    %108 = tpu.matmul %107, %5, %cst_35 {dimension_numbers = #tpu.dot_dimension_numbers<[1], [0], [0], [1], [0, 0, 1, 1], [], []>} : vector<2x32xbf16>, vector<32x128xbf16>, vector<2x128xf32> -> vector<2x128xf32>
    %109 = arith.addf %106, %108 : vector<2x128xf32>
    %110 = vector.extract_strided_slice %109 {offsets = [0, 0], sizes = [2, 32], strides = [1, 1]} : vector<2x128xf32> to vector<2x32xf32>
    %111 = arith.negf %110 : vector<2x32xf32>
    %112 = math.exp %111 : vector<2x32xf32>
    %cst_36 = arith.constant 1.000000e+00 : f32
    %113 = vector.broadcast %cst_36 : f32 to vector<2x32xf32>
    %114 = arith.addf %113, %112 : vector<2x32xf32>
    %115 = arith.divf %113, %114 : vector<2x32xf32>
    %116 = vector.extract_strided_slice %109 {offsets = [0, 32], sizes = [2, 32], strides = [1, 1]} : vector<2x128xf32> to vector<2x32xf32>
    %117 = arith.negf %116 : vector<2x32xf32>
    %118 = math.exp %117 : vector<2x32xf32>
    %cst_37 = arith.constant 1.000000e+00 : f32
    %119 = vector.broadcast %cst_37 : f32 to vector<2x32xf32>
    %120 = arith.addf %119, %118 : vector<2x32xf32>
    %121 = arith.divf %119, %120 : vector<2x32xf32>
    %122 = vector.extract_strided_slice %109 {offsets = [0, 64], sizes = [2, 32], strides = [1, 1]} : vector<2x128xf32> to vector<2x32xf32>
    %123 = math.tanh %122 : vector<2x32xf32>
    %124 = vector.extract_strided_slice %109 {offsets = [0, 96], sizes = [2, 32], strides = [1, 1]} : vector<2x128xf32> to vector<2x32xf32>
    %125 = arith.negf %124 : vector<2x32xf32>
    %126 = math.exp %125 : vector<2x32xf32>
    %cst_38 = arith.constant 1.000000e+00 : f32
    %127 = vector.broadcast %cst_38 : f32 to vector<2x32xf32>
    %128 = arith.addf %127, %126 : vector<2x32xf32>
    %129 = arith.divf %127, %128 : vector<2x32xf32>
    %130 = arith.mulf %121, %99 : vector<2x32xf32>
    %131 = arith.mulf %115, %123 : vector<2x32xf32>
    %132 = arith.addf %130, %131 : vector<2x32xf32>
    %133 = math.tanh %132 : vector<2x32xf32>
    %134 = arith.mulf %129, %133 : vector<2x32xf32>
    %c3_39 = arith.constant 3 : index
    %c0_40 = arith.constant 0 : index
    %c0_41 = arith.constant 0 : index
    %135 = vector.load %arg3[%c3_39, %c0_40, %c0_41] : memref<8x2x32xf32, #tpu.memory_space<vmem>>, vector<1x2x32xf32>
    %136 = vector.shape_cast %135 : vector<1x2x32xf32> to vector<2x32xf32>
    %137 = vector.shape_cast %134 : vector<2x32xf32> to vector<1x2x32xf32>
    tpu.vector_store %arg3[%c3_39, %c0_40, %c0_41], %137 {strides = array<i32>} : memref<8x2x32xf32, #tpu.memory_space<vmem>>, vector<1x2x32xf32>,
    %c4 = arith.constant 4 : index
    %c0_42 = arith.constant 0 : index
    %c0_43 = arith.constant 0 : index
    %138 = vector.load %arg1[%c4, %c0_42, %c0_43] : memref<8x2x128xf32, #tpu.memory_space<vmem>>, vector<1x2x128xf32>
    %139 = vector.shape_cast %138 : vector<1x2x128xf32> to vector<2x128xf32>
    %140 = arith.truncf %134 : vector<2x32xf32> to vector<2x32xbf16>
    %cst_44 = arith.constant dense<0.000000e+00> : vector<2x128xf32>
    %141 = tpu.matmul %140, %5, %cst_44 {dimension_numbers = #tpu.dot_dimension_numbers<[1], [0], [0], [1], [0, 0, 1, 1], [], []>} : vector<2x32xbf16>, vector<32x128xbf16>, vector<2x128xf32> -> vector<2x128xf32>
    %142 = arith.addf %139, %141 : vector<2x128xf32>
    %143 = vector.extract_strided_slice %142 {offsets = [0, 0], sizes = [2, 32], strides = [1, 1]} : vector<2x128xf32> to vector<2x32xf32>
    %144 = arith.negf %143 : vector<2x32xf32>
    %145 = math.exp %144 : vector<2x32xf32>
    %cst_45 = arith.constant 1.000000e+00 : f32
    %146 = vector.broadcast %cst_45 : f32 to vector<2x32xf32>
    %147 = arith.addf %146, %145 : vector<2x32xf32>
    %148 = arith.divf %146, %147 : vector<2x32xf32>
    %149 = vector.extract_strided_slice %142 {offsets = [0, 32], sizes = [2, 32], strides = [1, 1]} : vector<2x128xf32> to vector<2x32xf32>
    %150 = arith.negf %149 : vector<2x32xf32>
    %151 = math.exp %150 : vector<2x32xf32>
    %cst_46 = arith.constant 1.000000e+00 : f32
    %152 = vector.broadcast %cst_46 : f32 to vector<2x32xf32>
    %153 = arith.addf %152, %151 : vector<2x32xf32>
    %154 = arith.divf %152, %153 : vector<2x32xf32>
    %155 = vector.extract_strided_slice %142 {offsets = [0, 64], sizes = [2, 32], strides = [1, 1]} : vector<2x128xf32> to vector<2x32xf32>
    %156 = math.tanh %155 : vector<2x32xf32>
    %157 = vector.extract_strided_slice %142 {offsets = [0, 96], sizes = [2, 32], strides = [1, 1]} : vector<2x128xf32> to vector<2x32xf32>
    %158 = arith.negf %157 : vector<2x32xf32>
    %159 = math.exp %158 : vector<2x32xf32>
    %cst_47 = arith.constant 1.000000e+00 : f32
    %160 = vector.broadcast %cst_47 : f32 to vector<2x32xf32>
    %161 = arith.addf %160, %159 : vector<2x32xf32>
    %162 = arith.divf %160, %161 : vector<2x32xf32>
    %163 = arith.mulf %154, %132 : vector<2x32xf32>
    %164 = arith.mulf %148, %156 : vector<2x32xf32>
    %165 = arith.addf %163, %164 : vector<2x32xf32>
    %166 = math.tanh %165 : vector<2x32xf32>
    %167 = arith.mulf %162, %166 : vector<2x32xf32>
    %c4_48 = arith.constant 4 : index
    %c0_49 = arith.constant 0 : index
    %c0_50 = arith.constant 0 : index
    %168 = vector.load %arg3[%c4_48, %c0_49, %c0_50] : memref<8x2x32xf32, #tpu.memory_space<vmem>>, vector<1x2x32xf32>
    %169 = vector.shape_cast %168 : vector<1x2x32xf32> to vector<2x32xf32>
    %170 = vector.shape_cast %167 : vector<2x32xf32> to vector<1x2x32xf32>
    tpu.vector_store %arg3[%c4_48, %c0_49, %c0_50], %170 {strides = array<i32>} : memref<8x2x32xf32, #tpu.memory_space<vmem>>, vector<1x2x32xf32>,
    %c5 = arith.constant 5 : index
    %c0_51 = arith.constant 0 : index
    %c0_52 = arith.constant 0 : index
    %171 = vector.load %arg1[%c5, %c0_51, %c0_52] : memref<8x2x128xf32, #tpu.memory_space<vmem>>, vector<1x2x128xf32>
    %172 = vector.shape_cast %171 : vector<1x2x128xf32> to vector<2x128xf32>
    %173 = arith.truncf %167 : vector<2x32xf32> to vector<2x32xbf16>
    %cst_53 = arith.constant dense<0.000000e+00> : vector<2x128xf32>
    %174 = tpu.matmul %173, %5, %cst_53 {dimension_numbers = #tpu.dot_dimension_numbers<[1], [0], [0], [1], [0, 0, 1, 1], [], []>} : vector<2x32xbf16>, vector<32x128xbf16>, vector<2x128xf32> -> vector<2x128xf32>
    %175 = arith.addf %172, %174 : vector<2x128xf32>
    %176 = vector.extract_strided_slice %175 {offsets = [0, 0], sizes = [2, 32], strides = [1, 1]} : vector<2x128xf32> to vector<2x32xf32>
    %177 = arith.negf %176 : vector<2x32xf32>
    %178 = math.exp %177 : vector<2x32xf32>
    %cst_54 = arith.constant 1.000000e+00 : f32
    %179 = vector.broadcast %cst_54 : f32 to vector<2x32xf32>
    %180 = arith.addf %179, %178 : vector<2x32xf32>
    %181 = arith.divf %179, %180 : vector<2x32xf32>
    %182 = vector.extract_strided_slice %175 {offsets = [0, 32], sizes = [2, 32], strides = [1, 1]} : vector<2x128xf32> to vector<2x32xf32>
    %183 = arith.negf %182 : vector<2x32xf32>
    %184 = math.exp %183 : vector<2x32xf32>
    %cst_55 = arith.constant 1.000000e+00 : f32
    %185 = vector.broadcast %cst_55 : f32 to vector<2x32xf32>
    %186 = arith.addf %185, %184 : vector<2x32xf32>
    %187 = arith.divf %185, %186 : vector<2x32xf32>
    %188 = vector.extract_strided_slice %175 {offsets = [0, 64], sizes = [2, 32], strides = [1, 1]} : vector<2x128xf32> to vector<2x32xf32>
    %189 = math.tanh %188 : vector<2x32xf32>
    %190 = vector.extract_strided_slice %175 {offsets = [0, 96], sizes = [2, 32], strides = [1, 1]} : vector<2x128xf32> to vector<2x32xf32>
    %191 = arith.negf %190 : vector<2x32xf32>
    %192 = math.exp %191 : vector<2x32xf32>
    %cst_56 = arith.constant 1.000000e+00 : f32
    %193 = vector.broadcast %cst_56 : f32 to vector<2x32xf32>
    %194 = arith.addf %193, %192 : vector<2x32xf32>
    %195 = arith.divf %193, %194 : vector<2x32xf32>
    %196 = arith.mulf %187, %165 : vector<2x32xf32>
    %197 = arith.mulf %181, %189 : vector<2x32xf32>
    %198 = arith.addf %196, %197 : vector<2x32xf32>
    %199 = math.tanh %198 : vector<2x32xf32>
    %200 = arith.mulf %195, %199 : vector<2x32xf32>
    %c5_57 = arith.constant 5 : index
    %c0_58 = arith.constant 0 : index
    %c0_59 = arith.constant 0 : index
    %201 = vector.load %arg3[%c5_57, %c0_58, %c0_59] : memref<8x2x32xf32, #tpu.memory_space<vmem>>, vector<1x2x32xf32>
    %202 = vector.shape_cast %201 : vector<1x2x32xf32> to vector<2x32xf32>
    %203 = vector.shape_cast %200 : vector<2x32xf32> to vector<1x2x32xf32>
    tpu.vector_store %arg3[%c5_57, %c0_58, %c0_59], %203 {strides = array<i32>} : memref<8x2x32xf32, #tpu.memory_space<vmem>>, vector<1x2x32xf32>,
    %c6 = arith.constant 6 : index
    %c0_60 = arith.constant 0 : index
    %c0_61 = arith.constant 0 : index
    %204 = vector.load %arg1[%c6, %c0_60, %c0_61] : memref<8x2x128xf32, #tpu.memory_space<vmem>>, vector<1x2x128xf32>
    %205 = vector.shape_cast %204 : vector<1x2x128xf32> to vector<2x128xf32>
    %206 = arith.truncf %200 : vector<2x32xf32> to vector<2x32xbf16>
    %cst_62 = arith.constant dense<0.000000e+00> : vector<2x128xf32>
    %207 = tpu.matmul %206, %5, %cst_62 {dimension_numbers = #tpu.dot_dimension_numbers<[1], [0], [0], [1], [0, 0, 1, 1], [], []>} : vector<2x32xbf16>, vector<32x128xbf16>, vector<2x128xf32> -> vector<2x128xf32>
    %208 = arith.addf %205, %207 : vector<2x128xf32>
    %209 = vector.extract_strided_slice %208 {offsets = [0, 0], sizes = [2, 32], strides = [1, 1]} : vector<2x128xf32> to vector<2x32xf32>
    %210 = arith.negf %209 : vector<2x32xf32>
    %211 = math.exp %210 : vector<2x32xf32>
    %cst_63 = arith.constant 1.000000e+00 : f32
    %212 = vector.broadcast %cst_63 : f32 to vector<2x32xf32>
    %213 = arith.addf %212, %211 : vector<2x32xf32>
    %214 = arith.divf %212, %213 : vector<2x32xf32>
    %215 = vector.extract_strided_slice %208 {offsets = [0, 32], sizes = [2, 32], strides = [1, 1]} : vector<2x128xf32> to vector<2x32xf32>
    %216 = arith.negf %215 : vector<2x32xf32>
    %217 = math.exp %216 : vector<2x32xf32>
    %cst_64 = arith.constant 1.000000e+00 : f32
    %218 = vector.broadcast %cst_64 : f32 to vector<2x32xf32>
    %219 = arith.addf %218, %217 : vector<2x32xf32>
    %220 = arith.divf %218, %219 : vector<2x32xf32>
    %221 = vector.extract_strided_slice %208 {offsets = [0, 64], sizes = [2, 32], strides = [1, 1]} : vector<2x128xf32> to vector<2x32xf32>
    %222 = math.tanh %221 : vector<2x32xf32>
    %223 = vector.extract_strided_slice %208 {offsets = [0, 96], sizes = [2, 32], strides = [1, 1]} : vector<2x128xf32> to vector<2x32xf32>
    %224 = arith.negf %223 : vector<2x32xf32>
    %225 = math.exp %224 : vector<2x32xf32>
    %cst_65 = arith.constant 1.000000e+00 : f32
    %226 = vector.broadcast %cst_65 : f32 to vector<2x32xf32>
    %227 = arith.addf %226, %225 : vector<2x32xf32>
    %228 = arith.divf %226, %227 : vector<2x32xf32>
    %229 = arith.mulf %220, %198 : vector<2x32xf32>
    %230 = arith.mulf %214, %222 : vector<2x32xf32>
    %231 = arith.addf %229, %230 : vector<2x32xf32>
    %232 = math.tanh %231 : vector<2x32xf32>
    %233 = arith.mulf %228, %232 : vector<2x32xf32>
    %c6_66 = arith.constant 6 : index
    %c0_67 = arith.constant 0 : index
    %c0_68 = arith.constant 0 : index
    %234 = vector.load %arg3[%c6_66, %c0_67, %c0_68] : memref<8x2x32xf32, #tpu.memory_space<vmem>>, vector<1x2x32xf32>
    %235 = vector.shape_cast %234 : vector<1x2x32xf32> to vector<2x32xf32>
    %236 = vector.shape_cast %233 : vector<2x32xf32> to vector<1x2x32xf32>
    tpu.vector_store %arg3[%c6_66, %c0_67, %c0_68], %236 {strides = array<i32>} : memref<8x2x32xf32, #tpu.memory_space<vmem>>, vector<1x2x32xf32>,
    %c7 = arith.constant 7 : index
    %c0_69 = arith.constant 0 : index
    %c0_70 = arith.constant 0 : index
    %237 = vector.load %arg1[%c7, %c0_69, %c0_70] : memref<8x2x128xf32, #tpu.memory_space<vmem>>, vector<1x2x128xf32>
    %238 = vector.shape_cast %237 : vector<1x2x128xf32> to vector<2x128xf32>
    %239 = arith.truncf %233 : vector<2x32xf32> to vector<2x32xbf16>
    %cst_71 = arith.constant dense<0.000000e+00> : vector<2x128xf32>
    %240 = tpu.matmul %239, %5, %cst_71 {dimension_numbers = #tpu.dot_dimension_numbers<[1], [0], [0], [1], [0, 0, 1, 1], [], []>} : vector<2x32xbf16>, vector<32x128xbf16>, vector<2x128xf32> -> vector<2x128xf32>
    %241 = arith.addf %238, %240 : vector<2x128xf32>
    %242 = vector.extract_strided_slice %241 {offsets = [0, 0], sizes = [2, 32], strides = [1, 1]} : vector<2x128xf32> to vector<2x32xf32>
    %243 = arith.negf %242 : vector<2x32xf32>
    %244 = math.exp %243 : vector<2x32xf32>
    %cst_72 = arith.constant 1.000000e+00 : f32
    %245 = vector.broadcast %cst_72 : f32 to vector<2x32xf32>
    %246 = arith.addf %245, %244 : vector<2x32xf32>
    %247 = arith.divf %245, %246 : vector<2x32xf32>
    %248 = vector.extract_strided_slice %241 {offsets = [0, 32], sizes = [2, 32], strides = [1, 1]} : vector<2x128xf32> to vector<2x32xf32>
    %249 = arith.negf %248 : vector<2x32xf32>
    %250 = math.exp %249 : vector<2x32xf32>
    %cst_73 = arith.constant 1.000000e+00 : f32
    %251 = vector.broadcast %cst_73 : f32 to vector<2x32xf32>
    %252 = arith.addf %251, %250 : vector<2x32xf32>
    %253 = arith.divf %251, %252 : vector<2x32xf32>
    %254 = vector.extract_strided_slice %241 {offsets = [0, 64], sizes = [2, 32], strides = [1, 1]} : vector<2x128xf32> to vector<2x32xf32>
    %255 = math.tanh %254 : vector<2x32xf32>
    %256 = vector.extract_strided_slice %241 {offsets = [0, 96], sizes = [2, 32], strides = [1, 1]} : vector<2x128xf32> to vector<2x32xf32>
    %257 = arith.negf %256 : vector<2x32xf32>
    %258 = math.exp %257 : vector<2x32xf32>
    %cst_74 = arith.constant 1.000000e+00 : f32
    %259 = vector.broadcast %cst_74 : f32 to vector<2x32xf32>
    %260 = arith.addf %259, %258 : vector<2x32xf32>
    %261 = arith.divf %259, %260 : vector<2x32xf32>
    %262 = arith.mulf %253, %231 : vector<2x32xf32>
    %263 = arith.mulf %247, %255 : vector<2x32xf32>
    %264 = arith.addf %262, %263 : vector<2x32xf32>
    %265 = math.tanh %264 : vector<2x32xf32>
    %266 = arith.mulf %261, %265 : vector<2x32xf32>
    %c7_75 = arith.constant 7 : index
    %c0_76 = arith.constant 0 : index
    %c0_77 = arith.constant 0 : index
    %267 = vector.load %arg3[%c7_75, %c0_76, %c0_77] : memref<8x2x32xf32, #tpu.memory_space<vmem>>, vector<1x2x32xf32>
    %268 = vector.shape_cast %267 : vector<1x2x32xf32> to vector<2x32xf32>
    %269 = vector.shape_cast %266 : vector<2x32xf32> to vector<1x2x32xf32>
    tpu.vector_store %arg3[%c7_75, %c0_76, %c0_77], %269 {strides = array<i32>} : memref<8x2x32xf32, #tpu.memory_space<vmem>>, vector<1x2x32xf32>,
    %c0_78 = arith.constant 0 : index
    %c0_79 = arith.constant 0 : index
    %270 = vector.load %arg4[%c0_78, %c0_79] : memref<2x32xf32, #tpu.memory_space<vmem>>, vector<2x32xf32>
    tpu.vector_store %arg4[%c0_78, %c0_79], %266 {strides = array<i32>} : memref<2x32xf32, #tpu.memory_space<vmem>>, vector<2x32xf32>,
    %c0_80 = arith.constant 0 : index
    %c0_81 = arith.constant 0 : index
    %271 = vector.load %arg5[%c0_80, %c0_81] : memref<2x32xf32, #tpu.memory_space<vmem>>, vector<2x32xf32>
    tpu.vector_store %arg5[%c0_80, %c0_81], %264 {strides = array<i32>} : memref<2x32xf32, #tpu.memory_space<vmem>>, vector<2x32xf32>,
    return
  }
  func.func @transform_0(%arg0: i32) -> (i32, i32, i32) {
    %c0_i32 = arith.constant 0 : i32
    %c0_i32_0 = arith.constant 0 : i32
    %c0_i32_1 = arith.constant 0 : i32
    return %arg0, %c0_i32, %c0_i32_0 : i32, i32, i32
  }
  func.func @transform_1(%arg0: i32) -> (i32, i32) {
    %c0_i32 = arith.constant 0 : i32
    %c0_i32_0 = arith.constant 0 : i32
    %c0_i32_1 = arith.constant 0 : i32
    return %c0_i32, %c0_i32_0 : i32, i32
  }
  func.func @transform_2(%arg0: i32) -> (i32, i32, i32) {
    %c0_i32 = arith.constant 0 : i32
    %c0_i32_0 = arith.constant 0 : i32
    %c0_i32_1 = arith.constant 0 : i32
    return %arg0, %c0_i32, %c0_i32_0 : i32, i32, i32
  }
}

module attributes {stable_mosaic.version = 11 : i64} {
  func.func @_proj2_kernel(%arg0: memref<16x32xf32, #tpu.memory_space<vmem>>, %arg1: memref<16x32xf32, #tpu.memory_space<vmem>>, %arg2: memref<32x128xbf16, #tpu.memory_space<vmem>>, %arg3: memref<32x128xbf16, #tpu.memory_space<vmem>>, %arg4: memref<1x128xf32, #tpu.memory_space<vmem>>, %arg5: memref<16x128xf32, #tpu.memory_space<vmem>>) attributes {dimension_semantics = [], scalar_prefetch = 0 : i64, scratch_operands = 0 : i64, tpu.core_type = #tpu.core_type<tc>} {
    %c0 = arith.constant 0 : index
    %c0_0 = arith.constant 0 : index
    %0 = vector.load %arg0[%c0, %c0_0] : memref<16x32xf32, #tpu.memory_space<vmem>>, vector<16x32xf32>
    %1 = arith.truncf %0 : vector<16x32xf32> to vector<16x32xbf16>
    %c0_1 = arith.constant 0 : index
    %c0_2 = arith.constant 0 : index
    %2 = vector.load %arg2[%c0_1, %c0_2] : memref<32x128xbf16, #tpu.memory_space<vmem>>, vector<32x128xbf16>
    %cst = arith.constant dense<0.000000e+00> : vector<16x128xf32>
    %3 = tpu.matmul %1, %2, %cst {dimension_numbers = #tpu.dot_dimension_numbers<[1], [0], [0], [1], [0, 0, 1, 1], [], []>} : vector<16x32xbf16>, vector<32x128xbf16>, vector<16x128xf32> -> vector<16x128xf32>
    %c0_3 = arith.constant 0 : index
    %c0_4 = arith.constant 0 : index
    %4 = vector.load %arg1[%c0_3, %c0_4] : memref<16x32xf32, #tpu.memory_space<vmem>>, vector<16x32xf32>
    %5 = arith.truncf %4 : vector<16x32xf32> to vector<16x32xbf16>
    %c0_5 = arith.constant 0 : index
    %c0_6 = arith.constant 0 : index
    %6 = vector.load %arg3[%c0_5, %c0_6] : memref<32x128xbf16, #tpu.memory_space<vmem>>, vector<32x128xbf16>
    %cst_7 = arith.constant dense<0.000000e+00> : vector<16x128xf32>
    %7 = tpu.matmul %5, %6, %cst_7 {dimension_numbers = #tpu.dot_dimension_numbers<[1], [0], [0], [1], [0, 0, 1, 1], [], []>} : vector<16x32xbf16>, vector<32x128xbf16>, vector<16x128xf32> -> vector<16x128xf32>
    %8 = arith.addf %3, %7 : vector<16x128xf32>
    %c0_8 = arith.constant 0 : index
    %c0_9 = arith.constant 0 : index
    %9 = vector.load %arg4[%c0_8, %c0_9] : memref<1x128xf32, #tpu.memory_space<vmem>>, vector<1x128xf32>
    %10 = vector.broadcast %9 : vector<1x128xf32> to vector<16x128xf32>
    %11 = arith.addf %8, %10 : vector<16x128xf32>
    %c0_10 = arith.constant 0 : index
    %c0_11 = arith.constant 0 : index
    %12 = vector.load %arg5[%c0_10, %c0_11] : memref<16x128xf32, #tpu.memory_space<vmem>>, vector<16x128xf32>
    tpu.vector_store %arg5[%c0_10, %c0_11], %11 {strides = array<i32>} : memref<16x128xf32, #tpu.memory_space<vmem>>, vector<16x128xf32>,
    return
  }
}

module attributes {stable_mosaic.version = 11 : i64} {
  func.func @kernel(%arg0: i32, %arg1: memref<8x2x128xf32, #tpu.memory_space<vmem>>, %arg2: memref<32x128xbf16, #tpu.memory_space<vmem>>, %arg3: memref<2x32xf32, #tpu.memory_space<vmem>>, %arg4: memref<2x32xf32, #tpu.memory_space<vmem>>, %arg5: memref<2x32xf32, #tpu.memory_space<vmem>>) attributes {dimension_semantics = [#tpu.dimension_semantics<arbitrary>], iteration_bounds = array<i64: 1>, scalar_prefetch = 0 : i64, scratch_operands = 2 : i64, tpu.core_type = #tpu.core_type<tc>, window_params = [{transform_indices = @transform_0, window_bounds = array<i64: 8, 2, 128>}, {pipeline_mode = #tpu.pipeline_mode<synchronous>, transform_indices = @transform_1, window_bounds = array<i64: 32, 128>}, {pipeline_mode = #tpu.pipeline_mode<synchronous>, transform_indices = @transform_2, window_bounds = array<i64: 2, 32>}]} {
    %c0_i32 = arith.constant 0 : i32
    %0 = arith.cmpi eq, %arg0, %c0_i32 : i32
    %1 = arith.extui %0 : i1 to i32
    %c0_i32_0 = arith.constant 0 : i32
    %2 = arith.cmpi ne, %1, %c0_i32_0 : i32
    scf.if %2 {
      %cst_60 = arith.constant 0.000000e+00 : f32
      %249 = vector.broadcast %cst_60 : f32 to vector<2x32xf32>
      %c0_61 = arith.constant 0 : index
      %c0_62 = arith.constant 0 : index
      %250 = vector.load %arg4[%c0_61, %c0_62] : memref<2x32xf32, #tpu.memory_space<vmem>>, vector<2x32xf32>
      tpu.vector_store %arg4[%c0_61, %c0_62], %249 {strides = array<i32>} : memref<2x32xf32, #tpu.memory_space<vmem>>, vector<2x32xf32>,
      %cst_63 = arith.constant 0.000000e+00 : f32
      %251 = vector.broadcast %cst_63 : f32 to vector<2x32xf32>
      %c0_64 = arith.constant 0 : index
      %c0_65 = arith.constant 0 : index
      %252 = vector.load %arg5[%c0_64, %c0_65] : memref<2x32xf32, #tpu.memory_space<vmem>>, vector<2x32xf32>
      tpu.vector_store %arg5[%c0_64, %c0_65], %251 {strides = array<i32>} : memref<2x32xf32, #tpu.memory_space<vmem>>, vector<2x32xf32>,
    } else {
    }
    %c0 = arith.constant 0 : index
    %c0_1 = arith.constant 0 : index
    %3 = vector.load %arg4[%c0, %c0_1] : memref<2x32xf32, #tpu.memory_space<vmem>>, vector<2x32xf32>
    %c0_2 = arith.constant 0 : index
    %c0_3 = arith.constant 0 : index
    %4 = vector.load %arg5[%c0_2, %c0_3] : memref<2x32xf32, #tpu.memory_space<vmem>>, vector<2x32xf32>
    %c0_4 = arith.constant 0 : index
    %c0_5 = arith.constant 0 : index
    %5 = vector.load %arg2[%c0_4, %c0_5] : memref<32x128xbf16, #tpu.memory_space<vmem>>, vector<32x128xbf16>
    %c0_6 = arith.constant 0 : index
    %c0_7 = arith.constant 0 : index
    %c0_8 = arith.constant 0 : index
    %6 = vector.load %arg1[%c0_6, %c0_7, %c0_8] : memref<8x2x128xf32, #tpu.memory_space<vmem>>, vector<1x2x128xf32>
    %7 = vector.shape_cast %6 : vector<1x2x128xf32> to vector<2x128xf32>
    %8 = arith.truncf %3 : vector<2x32xf32> to vector<2x32xbf16>
    %cst = arith.constant dense<0.000000e+00> : vector<2x128xf32>
    %9 = tpu.matmul %8, %5, %cst {dimension_numbers = #tpu.dot_dimension_numbers<[1], [0], [0], [1], [0, 0, 1, 1], [], []>} : vector<2x32xbf16>, vector<32x128xbf16>, vector<2x128xf32> -> vector<2x128xf32>
    %10 = arith.addf %7, %9 : vector<2x128xf32>
    %11 = vector.extract_strided_slice %10 {offsets = [0, 0], sizes = [2, 32], strides = [1, 1]} : vector<2x128xf32> to vector<2x32xf32>
    %12 = arith.negf %11 : vector<2x32xf32>
    %13 = math.exp %12 : vector<2x32xf32>
    %cst_9 = arith.constant 1.000000e+00 : f32
    %14 = vector.broadcast %cst_9 : f32 to vector<2x32xf32>
    %15 = arith.addf %14, %13 : vector<2x32xf32>
    %16 = arith.divf %14, %15 : vector<2x32xf32>
    %17 = vector.extract_strided_slice %10 {offsets = [0, 32], sizes = [2, 32], strides = [1, 1]} : vector<2x128xf32> to vector<2x32xf32>
    %18 = arith.negf %17 : vector<2x32xf32>
    %19 = math.exp %18 : vector<2x32xf32>
    %cst_10 = arith.constant 1.000000e+00 : f32
    %20 = vector.broadcast %cst_10 : f32 to vector<2x32xf32>
    %21 = arith.addf %20, %19 : vector<2x32xf32>
    %22 = arith.divf %20, %21 : vector<2x32xf32>
    %23 = vector.extract_strided_slice %10 {offsets = [0, 64], sizes = [2, 32], strides = [1, 1]} : vector<2x128xf32> to vector<2x32xf32>
    %24 = math.tanh %23 : vector<2x32xf32>
    %25 = vector.extract_strided_slice %10 {offsets = [0, 96], sizes = [2, 32], strides = [1, 1]} : vector<2x128xf32> to vector<2x32xf32>
    %26 = arith.negf %25 : vector<2x32xf32>
    %27 = math.exp %26 : vector<2x32xf32>
    %cst_11 = arith.constant 1.000000e+00 : f32
    %28 = vector.broadcast %cst_11 : f32 to vector<2x32xf32>
    %29 = arith.addf %28, %27 : vector<2x32xf32>
    %30 = arith.divf %28, %29 : vector<2x32xf32>
    %31 = arith.mulf %22, %4 : vector<2x32xf32>
    %32 = arith.mulf %16, %24 : vector<2x32xf32>
    %33 = arith.addf %31, %32 : vector<2x32xf32>
    %34 = math.tanh %33 : vector<2x32xf32>
    %35 = arith.mulf %30, %34 : vector<2x32xf32>
    %c1 = arith.constant 1 : index
    %c0_12 = arith.constant 0 : index
    %c0_13 = arith.constant 0 : index
    %36 = vector.load %arg1[%c1, %c0_12, %c0_13] : memref<8x2x128xf32, #tpu.memory_space<vmem>>, vector<1x2x128xf32>
    %37 = vector.shape_cast %36 : vector<1x2x128xf32> to vector<2x128xf32>
    %38 = arith.truncf %35 : vector<2x32xf32> to vector<2x32xbf16>
    %cst_14 = arith.constant dense<0.000000e+00> : vector<2x128xf32>
    %39 = tpu.matmul %38, %5, %cst_14 {dimension_numbers = #tpu.dot_dimension_numbers<[1], [0], [0], [1], [0, 0, 1, 1], [], []>} : vector<2x32xbf16>, vector<32x128xbf16>, vector<2x128xf32> -> vector<2x128xf32>
    %40 = arith.addf %37, %39 : vector<2x128xf32>
    %41 = vector.extract_strided_slice %40 {offsets = [0, 0], sizes = [2, 32], strides = [1, 1]} : vector<2x128xf32> to vector<2x32xf32>
    %42 = arith.negf %41 : vector<2x32xf32>
    %43 = math.exp %42 : vector<2x32xf32>
    %cst_15 = arith.constant 1.000000e+00 : f32
    %44 = vector.broadcast %cst_15 : f32 to vector<2x32xf32>
    %45 = arith.addf %44, %43 : vector<2x32xf32>
    %46 = arith.divf %44, %45 : vector<2x32xf32>
    %47 = vector.extract_strided_slice %40 {offsets = [0, 32], sizes = [2, 32], strides = [1, 1]} : vector<2x128xf32> to vector<2x32xf32>
    %48 = arith.negf %47 : vector<2x32xf32>
    %49 = math.exp %48 : vector<2x32xf32>
    %cst_16 = arith.constant 1.000000e+00 : f32
    %50 = vector.broadcast %cst_16 : f32 to vector<2x32xf32>
    %51 = arith.addf %50, %49 : vector<2x32xf32>
    %52 = arith.divf %50, %51 : vector<2x32xf32>
    %53 = vector.extract_strided_slice %40 {offsets = [0, 64], sizes = [2, 32], strides = [1, 1]} : vector<2x128xf32> to vector<2x32xf32>
    %54 = math.tanh %53 : vector<2x32xf32>
    %55 = vector.extract_strided_slice %40 {offsets = [0, 96], sizes = [2, 32], strides = [1, 1]} : vector<2x128xf32> to vector<2x32xf32>
    %56 = arith.negf %55 : vector<2x32xf32>
    %57 = math.exp %56 : vector<2x32xf32>
    %cst_17 = arith.constant 1.000000e+00 : f32
    %58 = vector.broadcast %cst_17 : f32 to vector<2x32xf32>
    %59 = arith.addf %58, %57 : vector<2x32xf32>
    %60 = arith.divf %58, %59 : vector<2x32xf32>
    %61 = arith.mulf %52, %33 : vector<2x32xf32>
    %62 = arith.mulf %46, %54 : vector<2x32xf32>
    %63 = arith.addf %61, %62 : vector<2x32xf32>
    %64 = math.tanh %63 : vector<2x32xf32>
    %65 = arith.mulf %60, %64 : vector<2x32xf32>
    %c2 = arith.constant 2 : index
    %c0_18 = arith.constant 0 : index
    %c0_19 = arith.constant 0 : index
    %66 = vector.load %arg1[%c2, %c0_18, %c0_19] : memref<8x2x128xf32, #tpu.memory_space<vmem>>, vector<1x2x128xf32>
    %67 = vector.shape_cast %66 : vector<1x2x128xf32> to vector<2x128xf32>
    %68 = arith.truncf %65 : vector<2x32xf32> to vector<2x32xbf16>
    %cst_20 = arith.constant dense<0.000000e+00> : vector<2x128xf32>
    %69 = tpu.matmul %68, %5, %cst_20 {dimension_numbers = #tpu.dot_dimension_numbers<[1], [0], [0], [1], [0, 0, 1, 1], [], []>} : vector<2x32xbf16>, vector<32x128xbf16>, vector<2x128xf32> -> vector<2x128xf32>
    %70 = arith.addf %67, %69 : vector<2x128xf32>
    %71 = vector.extract_strided_slice %70 {offsets = [0, 0], sizes = [2, 32], strides = [1, 1]} : vector<2x128xf32> to vector<2x32xf32>
    %72 = arith.negf %71 : vector<2x32xf32>
    %73 = math.exp %72 : vector<2x32xf32>
    %cst_21 = arith.constant 1.000000e+00 : f32
    %74 = vector.broadcast %cst_21 : f32 to vector<2x32xf32>
    %75 = arith.addf %74, %73 : vector<2x32xf32>
    %76 = arith.divf %74, %75 : vector<2x32xf32>
    %77 = vector.extract_strided_slice %70 {offsets = [0, 32], sizes = [2, 32], strides = [1, 1]} : vector<2x128xf32> to vector<2x32xf32>
    %78 = arith.negf %77 : vector<2x32xf32>
    %79 = math.exp %78 : vector<2x32xf32>
    %cst_22 = arith.constant 1.000000e+00 : f32
    %80 = vector.broadcast %cst_22 : f32 to vector<2x32xf32>
    %81 = arith.addf %80, %79 : vector<2x32xf32>
    %82 = arith.divf %80, %81 : vector<2x32xf32>
    %83 = vector.extract_strided_slice %70 {offsets = [0, 64], sizes = [2, 32], strides = [1, 1]} : vector<2x128xf32> to vector<2x32xf32>
    %84 = math.tanh %83 : vector<2x32xf32>
    %85 = vector.extract_strided_slice %70 {offsets = [0, 96], sizes = [2, 32], strides = [1, 1]} : vector<2x128xf32> to vector<2x32xf32>
    %86 = arith.negf %85 : vector<2x32xf32>
    %87 = math.exp %86 : vector<2x32xf32>
    %cst_23 = arith.constant 1.000000e+00 : f32
    %88 = vector.broadcast %cst_23 : f32 to vector<2x32xf32>
    %89 = arith.addf %88, %87 : vector<2x32xf32>
    %90 = arith.divf %88, %89 : vector<2x32xf32>
    %91 = arith.mulf %82, %63 : vector<2x32xf32>
    %92 = arith.mulf %76, %84 : vector<2x32xf32>
    %93 = arith.addf %91, %92 : vector<2x32xf32>
    %94 = math.tanh %93 : vector<2x32xf32>
    %95 = arith.mulf %90, %94 : vector<2x32xf32>
    %c3 = arith.constant 3 : index
    %c0_24 = arith.constant 0 : index
    %c0_25 = arith.constant 0 : index
    %96 = vector.load %arg1[%c3, %c0_24, %c0_25] : memref<8x2x128xf32, #tpu.memory_space<vmem>>, vector<1x2x128xf32>
    %97 = vector.shape_cast %96 : vector<1x2x128xf32> to vector<2x128xf32>
    %98 = arith.truncf %95 : vector<2x32xf32> to vector<2x32xbf16>
    %cst_26 = arith.constant dense<0.000000e+00> : vector<2x128xf32>
    %99 = tpu.matmul %98, %5, %cst_26 {dimension_numbers = #tpu.dot_dimension_numbers<[1], [0], [0], [1], [0, 0, 1, 1], [], []>} : vector<2x32xbf16>, vector<32x128xbf16>, vector<2x128xf32> -> vector<2x128xf32>
    %100 = arith.addf %97, %99 : vector<2x128xf32>
    %101 = vector.extract_strided_slice %100 {offsets = [0, 0], sizes = [2, 32], strides = [1, 1]} : vector<2x128xf32> to vector<2x32xf32>
    %102 = arith.negf %101 : vector<2x32xf32>
    %103 = math.exp %102 : vector<2x32xf32>
    %cst_27 = arith.constant 1.000000e+00 : f32
    %104 = vector.broadcast %cst_27 : f32 to vector<2x32xf32>
    %105 = arith.addf %104, %103 : vector<2x32xf32>
    %106 = arith.divf %104, %105 : vector<2x32xf32>
    %107 = vector.extract_strided_slice %100 {offsets = [0, 32], sizes = [2, 32], strides = [1, 1]} : vector<2x128xf32> to vector<2x32xf32>
    %108 = arith.negf %107 : vector<2x32xf32>
    %109 = math.exp %108 : vector<2x32xf32>
    %cst_28 = arith.constant 1.000000e+00 : f32
    %110 = vector.broadcast %cst_28 : f32 to vector<2x32xf32>
    %111 = arith.addf %110, %109 : vector<2x32xf32>
    %112 = arith.divf %110, %111 : vector<2x32xf32>
    %113 = vector.extract_strided_slice %100 {offsets = [0, 64], sizes = [2, 32], strides = [1, 1]} : vector<2x128xf32> to vector<2x32xf32>
    %114 = math.tanh %113 : vector<2x32xf32>
    %115 = vector.extract_strided_slice %100 {offsets = [0, 96], sizes = [2, 32], strides = [1, 1]} : vector<2x128xf32> to vector<2x32xf32>
    %116 = arith.negf %115 : vector<2x32xf32>
    %117 = math.exp %116 : vector<2x32xf32>
    %cst_29 = arith.constant 1.000000e+00 : f32
    %118 = vector.broadcast %cst_29 : f32 to vector<2x32xf32>
    %119 = arith.addf %118, %117 : vector<2x32xf32>
    %120 = arith.divf %118, %119 : vector<2x32xf32>
    %121 = arith.mulf %112, %93 : vector<2x32xf32>
    %122 = arith.mulf %106, %114 : vector<2x32xf32>
    %123 = arith.addf %121, %122 : vector<2x32xf32>
    %124 = math.tanh %123 : vector<2x32xf32>
    %125 = arith.mulf %120, %124 : vector<2x32xf32>
    %c4 = arith.constant 4 : index
    %c0_30 = arith.constant 0 : index
    %c0_31 = arith.constant 0 : index
    %126 = vector.load %arg1[%c4, %c0_30, %c0_31] : memref<8x2x128xf32, #tpu.memory_space<vmem>>, vector<1x2x128xf32>
    %127 = vector.shape_cast %126 : vector<1x2x128xf32> to vector<2x128xf32>
    %128 = arith.truncf %125 : vector<2x32xf32> to vector<2x32xbf16>
    %cst_32 = arith.constant dense<0.000000e+00> : vector<2x128xf32>
    %129 = tpu.matmul %128, %5, %cst_32 {dimension_numbers = #tpu.dot_dimension_numbers<[1], [0], [0], [1], [0, 0, 1, 1], [], []>} : vector<2x32xbf16>, vector<32x128xbf16>, vector<2x128xf32> -> vector<2x128xf32>
    %130 = arith.addf %127, %129 : vector<2x128xf32>
    %131 = vector.extract_strided_slice %130 {offsets = [0, 0], sizes = [2, 32], strides = [1, 1]} : vector<2x128xf32> to vector<2x32xf32>
    %132 = arith.negf %131 : vector<2x32xf32>
    %133 = math.exp %132 : vector<2x32xf32>
    %cst_33 = arith.constant 1.000000e+00 : f32
    %134 = vector.broadcast %cst_33 : f32 to vector<2x32xf32>
    %135 = arith.addf %134, %133 : vector<2x32xf32>
    %136 = arith.divf %134, %135 : vector<2x32xf32>
    %137 = vector.extract_strided_slice %130 {offsets = [0, 32], sizes = [2, 32], strides = [1, 1]} : vector<2x128xf32> to vector<2x32xf32>
    %138 = arith.negf %137 : vector<2x32xf32>
    %139 = math.exp %138 : vector<2x32xf32>
    %cst_34 = arith.constant 1.000000e+00 : f32
    %140 = vector.broadcast %cst_34 : f32 to vector<2x32xf32>
    %141 = arith.addf %140, %139 : vector<2x32xf32>
    %142 = arith.divf %140, %141 : vector<2x32xf32>
    %143 = vector.extract_strided_slice %130 {offsets = [0, 64], sizes = [2, 32], strides = [1, 1]} : vector<2x128xf32> to vector<2x32xf32>
    %144 = math.tanh %143 : vector<2x32xf32>
    %145 = vector.extract_strided_slice %130 {offsets = [0, 96], sizes = [2, 32], strides = [1, 1]} : vector<2x128xf32> to vector<2x32xf32>
    %146 = arith.negf %145 : vector<2x32xf32>
    %147 = math.exp %146 : vector<2x32xf32>
    %cst_35 = arith.constant 1.000000e+00 : f32
    %148 = vector.broadcast %cst_35 : f32 to vector<2x32xf32>
    %149 = arith.addf %148, %147 : vector<2x32xf32>
    %150 = arith.divf %148, %149 : vector<2x32xf32>
    %151 = arith.mulf %142, %123 : vector<2x32xf32>
    %152 = arith.mulf %136, %144 : vector<2x32xf32>
    %153 = arith.addf %151, %152 : vector<2x32xf32>
    %154 = math.tanh %153 : vector<2x32xf32>
    %155 = arith.mulf %150, %154 : vector<2x32xf32>
    %c5 = arith.constant 5 : index
    %c0_36 = arith.constant 0 : index
    %c0_37 = arith.constant 0 : index
    %156 = vector.load %arg1[%c5, %c0_36, %c0_37] : memref<8x2x128xf32, #tpu.memory_space<vmem>>, vector<1x2x128xf32>
    %157 = vector.shape_cast %156 : vector<1x2x128xf32> to vector<2x128xf32>
    %158 = arith.truncf %155 : vector<2x32xf32> to vector<2x32xbf16>
    %cst_38 = arith.constant dense<0.000000e+00> : vector<2x128xf32>
    %159 = tpu.matmul %158, %5, %cst_38 {dimension_numbers = #tpu.dot_dimension_numbers<[1], [0], [0], [1], [0, 0, 1, 1], [], []>} : vector<2x32xbf16>, vector<32x128xbf16>, vector<2x128xf32> -> vector<2x128xf32>
    %160 = arith.addf %157, %159 : vector<2x128xf32>
    %161 = vector.extract_strided_slice %160 {offsets = [0, 0], sizes = [2, 32], strides = [1, 1]} : vector<2x128xf32> to vector<2x32xf32>
    %162 = arith.negf %161 : vector<2x32xf32>
    %163 = math.exp %162 : vector<2x32xf32>
    %cst_39 = arith.constant 1.000000e+00 : f32
    %164 = vector.broadcast %cst_39 : f32 to vector<2x32xf32>
    %165 = arith.addf %164, %163 : vector<2x32xf32>
    %166 = arith.divf %164, %165 : vector<2x32xf32>
    %167 = vector.extract_strided_slice %160 {offsets = [0, 32], sizes = [2, 32], strides = [1, 1]} : vector<2x128xf32> to vector<2x32xf32>
    %168 = arith.negf %167 : vector<2x32xf32>
    %169 = math.exp %168 : vector<2x32xf32>
    %cst_40 = arith.constant 1.000000e+00 : f32
    %170 = vector.broadcast %cst_40 : f32 to vector<2x32xf32>
    %171 = arith.addf %170, %169 : vector<2x32xf32>
    %172 = arith.divf %170, %171 : vector<2x32xf32>
    %173 = vector.extract_strided_slice %160 {offsets = [0, 64], sizes = [2, 32], strides = [1, 1]} : vector<2x128xf32> to vector<2x32xf32>
    %174 = math.tanh %173 : vector<2x32xf32>
    %175 = vector.extract_strided_slice %160 {offsets = [0, 96], sizes = [2, 32], strides = [1, 1]} : vector<2x128xf32> to vector<2x32xf32>
    %176 = arith.negf %175 : vector<2x32xf32>
    %177 = math.exp %176 : vector<2x32xf32>
    %cst_41 = arith.constant 1.000000e+00 : f32
    %178 = vector.broadcast %cst_41 : f32 to vector<2x32xf32>
    %179 = arith.addf %178, %177 : vector<2x32xf32>
    %180 = arith.divf %178, %179 : vector<2x32xf32>
    %181 = arith.mulf %172, %153 : vector<2x32xf32>
    %182 = arith.mulf %166, %174 : vector<2x32xf32>
    %183 = arith.addf %181, %182 : vector<2x32xf32>
    %184 = math.tanh %183 : vector<2x32xf32>
    %185 = arith.mulf %180, %184 : vector<2x32xf32>
    %c6 = arith.constant 6 : index
    %c0_42 = arith.constant 0 : index
    %c0_43 = arith.constant 0 : index
    %186 = vector.load %arg1[%c6, %c0_42, %c0_43] : memref<8x2x128xf32, #tpu.memory_space<vmem>>, vector<1x2x128xf32>
    %187 = vector.shape_cast %186 : vector<1x2x128xf32> to vector<2x128xf32>
    %188 = arith.truncf %185 : vector<2x32xf32> to vector<2x32xbf16>
    %cst_44 = arith.constant dense<0.000000e+00> : vector<2x128xf32>
    %189 = tpu.matmul %188, %5, %cst_44 {dimension_numbers = #tpu.dot_dimension_numbers<[1], [0], [0], [1], [0, 0, 1, 1], [], []>} : vector<2x32xbf16>, vector<32x128xbf16>, vector<2x128xf32> -> vector<2x128xf32>
    %190 = arith.addf %187, %189 : vector<2x128xf32>
    %191 = vector.extract_strided_slice %190 {offsets = [0, 0], sizes = [2, 32], strides = [1, 1]} : vector<2x128xf32> to vector<2x32xf32>
    %192 = arith.negf %191 : vector<2x32xf32>
    %193 = math.exp %192 : vector<2x32xf32>
    %cst_45 = arith.constant 1.000000e+00 : f32
    %194 = vector.broadcast %cst_45 : f32 to vector<2x32xf32>
    %195 = arith.addf %194, %193 : vector<2x32xf32>
    %196 = arith.divf %194, %195 : vector<2x32xf32>
    %197 = vector.extract_strided_slice %190 {offsets = [0, 32], sizes = [2, 32], strides = [1, 1]} : vector<2x128xf32> to vector<2x32xf32>
    %198 = arith.negf %197 : vector<2x32xf32>
    %199 = math.exp %198 : vector<2x32xf32>
    %cst_46 = arith.constant 1.000000e+00 : f32
    %200 = vector.broadcast %cst_46 : f32 to vector<2x32xf32>
    %201 = arith.addf %200, %199 : vector<2x32xf32>
    %202 = arith.divf %200, %201 : vector<2x32xf32>
    %203 = vector.extract_strided_slice %190 {offsets = [0, 64], sizes = [2, 32], strides = [1, 1]} : vector<2x128xf32> to vector<2x32xf32>
    %204 = math.tanh %203 : vector<2x32xf32>
    %205 = vector.extract_strided_slice %190 {offsets = [0, 96], sizes = [2, 32], strides = [1, 1]} : vector<2x128xf32> to vector<2x32xf32>
    %206 = arith.negf %205 : vector<2x32xf32>
    %207 = math.exp %206 : vector<2x32xf32>
    %cst_47 = arith.constant 1.000000e+00 : f32
    %208 = vector.broadcast %cst_47 : f32 to vector<2x32xf32>
    %209 = arith.addf %208, %207 : vector<2x32xf32>
    %210 = arith.divf %208, %209 : vector<2x32xf32>
    %211 = arith.mulf %202, %183 : vector<2x32xf32>
    %212 = arith.mulf %196, %204 : vector<2x32xf32>
    %213 = arith.addf %211, %212 : vector<2x32xf32>
    %214 = math.tanh %213 : vector<2x32xf32>
    %215 = arith.mulf %210, %214 : vector<2x32xf32>
    %c7 = arith.constant 7 : index
    %c0_48 = arith.constant 0 : index
    %c0_49 = arith.constant 0 : index
    %216 = vector.load %arg1[%c7, %c0_48, %c0_49] : memref<8x2x128xf32, #tpu.memory_space<vmem>>, vector<1x2x128xf32>
    %217 = vector.shape_cast %216 : vector<1x2x128xf32> to vector<2x128xf32>
    %218 = arith.truncf %215 : vector<2x32xf32> to vector<2x32xbf16>
    %cst_50 = arith.constant dense<0.000000e+00> : vector<2x128xf32>
    %219 = tpu.matmul %218, %5, %cst_50 {dimension_numbers = #tpu.dot_dimension_numbers<[1], [0], [0], [1], [0, 0, 1, 1], [], []>} : vector<2x32xbf16>, vector<32x128xbf16>, vector<2x128xf32> -> vector<2x128xf32>
    %220 = arith.addf %217, %219 : vector<2x128xf32>
    %221 = vector.extract_strided_slice %220 {offsets = [0, 0], sizes = [2, 32], strides = [1, 1]} : vector<2x128xf32> to vector<2x32xf32>
    %222 = arith.negf %221 : vector<2x32xf32>
    %223 = math.exp %222 : vector<2x32xf32>
    %cst_51 = arith.constant 1.000000e+00 : f32
    %224 = vector.broadcast %cst_51 : f32 to vector<2x32xf32>
    %225 = arith.addf %224, %223 : vector<2x32xf32>
    %226 = arith.divf %224, %225 : vector<2x32xf32>
    %227 = vector.extract_strided_slice %220 {offsets = [0, 32], sizes = [2, 32], strides = [1, 1]} : vector<2x128xf32> to vector<2x32xf32>
    %228 = arith.negf %227 : vector<2x32xf32>
    %229 = math.exp %228 : vector<2x32xf32>
    %cst_52 = arith.constant 1.000000e+00 : f32
    %230 = vector.broadcast %cst_52 : f32 to vector<2x32xf32>
    %231 = arith.addf %230, %229 : vector<2x32xf32>
    %232 = arith.divf %230, %231 : vector<2x32xf32>
    %233 = vector.extract_strided_slice %220 {offsets = [0, 64], sizes = [2, 32], strides = [1, 1]} : vector<2x128xf32> to vector<2x32xf32>
    %234 = math.tanh %233 : vector<2x32xf32>
    %235 = vector.extract_strided_slice %220 {offsets = [0, 96], sizes = [2, 32], strides = [1, 1]} : vector<2x128xf32> to vector<2x32xf32>
    %236 = arith.negf %235 : vector<2x32xf32>
    %237 = math.exp %236 : vector<2x32xf32>
    %cst_53 = arith.constant 1.000000e+00 : f32
    %238 = vector.broadcast %cst_53 : f32 to vector<2x32xf32>
    %239 = arith.addf %238, %237 : vector<2x32xf32>
    %240 = arith.divf %238, %239 : vector<2x32xf32>
    %241 = arith.mulf %232, %213 : vector<2x32xf32>
    %242 = arith.mulf %226, %234 : vector<2x32xf32>
    %243 = arith.addf %241, %242 : vector<2x32xf32>
    %244 = math.tanh %243 : vector<2x32xf32>
    %245 = arith.mulf %240, %244 : vector<2x32xf32>
    %c0_54 = arith.constant 0 : index
    %c0_55 = arith.constant 0 : index
    %246 = vector.load %arg4[%c0_54, %c0_55] : memref<2x32xf32, #tpu.memory_space<vmem>>, vector<2x32xf32>
    tpu.vector_store %arg4[%c0_54, %c0_55], %245 {strides = array<i32>} : memref<2x32xf32, #tpu.memory_space<vmem>>, vector<2x32xf32>,
    %c0_56 = arith.constant 0 : index
    %c0_57 = arith.constant 0 : index
    %247 = vector.load %arg5[%c0_56, %c0_57] : memref<2x32xf32, #tpu.memory_space<vmem>>, vector<2x32xf32>
    tpu.vector_store %arg5[%c0_56, %c0_57], %243 {strides = array<i32>} : memref<2x32xf32, #tpu.memory_space<vmem>>, vector<2x32xf32>,
    %c0_58 = arith.constant 0 : index
    %c0_59 = arith.constant 0 : index
    %248 = vector.load %arg3[%c0_58, %c0_59] : memref<2x32xf32, #tpu.memory_space<vmem>>, vector<2x32xf32>
    tpu.vector_store %arg3[%c0_58, %c0_59], %245 {strides = array<i32>} : memref<2x32xf32, #tpu.memory_space<vmem>>, vector<2x32xf32>,
    return
  }
  func.func @transform_0(%arg0: i32) -> (i32, i32, i32) {
    %c0_i32 = arith.constant 0 : i32
    %c0_i32_0 = arith.constant 0 : i32
    %c0_i32_1 = arith.constant 0 : i32
    return %arg0, %c0_i32, %c0_i32_0 : i32, i32, i32
  }
  func.func @transform_1(%arg0: i32) -> (i32, i32) {
    %c0_i32 = arith.constant 0 : i32
    %c0_i32_0 = arith.constant 0 : i32
    %c0_i32_1 = arith.constant 0 : i32
    return %c0_i32, %c0_i32_0 : i32, i32
  }
  func.func @transform_2(%arg0: i32) -> (i32, i32) {
    %c0_i32 = arith.constant 0 : i32
    %c0_i32_0 = arith.constant 0 : i32
    %c0_i32_1 = arith.constant 0 : i32
    return %c0_i32, %c0_i32_0 : i32, i32
  }
}

module attributes {stable_mosaic.version = 11 : i64} {
  func.func @_head_kernel(%arg0: memref<2x32xf32, #tpu.memory_space<vmem>>, %arg1: memref<2x128xf32, #tpu.memory_space<vmem>>, %arg2: memref<32x8xf32, #tpu.memory_space<vmem>>, %arg3: memref<32x8xf32, #tpu.memory_space<vmem>>, %arg4: memref<1x8xf32, #tpu.memory_space<vmem>>, %arg5: memref<2x8xf32, #tpu.memory_space<vmem>>) attributes {dimension_semantics = [], scalar_prefetch = 0 : i64, scratch_operands = 0 : i64, tpu.core_type = #tpu.core_type<tc>} {
    %c0 = arith.constant 0 : index
    %c0_0 = arith.constant 0 : index
    %0 = vector.load %arg1[%c0, %c0_0] : memref<2x128xf32, #tpu.memory_space<vmem>>, vector<2x128xf32>
    %1 = vector.extract_strided_slice %0 {offsets = [0, 0], sizes = [2, 32], strides = [1, 1]} : vector<2x128xf32> to vector<2x32xf32>
    %2 = arith.negf %1 : vector<2x32xf32>
    %3 = math.exp %2 : vector<2x32xf32>
    %cst = arith.constant 1.000000e+00 : f32
    %4 = vector.broadcast %cst : f32 to vector<2x32xf32>
    %5 = arith.addf %4, %3 : vector<2x32xf32>
    %6 = arith.divf %4, %5 : vector<2x32xf32>
    %7 = vector.extract_strided_slice %0 {offsets = [0, 64], sizes = [2, 32], strides = [1, 1]} : vector<2x128xf32> to vector<2x32xf32>
    %8 = math.tanh %7 : vector<2x32xf32>
    %9 = vector.extract_strided_slice %0 {offsets = [0, 96], sizes = [2, 32], strides = [1, 1]} : vector<2x128xf32> to vector<2x32xf32>
    %10 = arith.negf %9 : vector<2x32xf32>
    %11 = math.exp %10 : vector<2x32xf32>
    %cst_1 = arith.constant 1.000000e+00 : f32
    %12 = vector.broadcast %cst_1 : f32 to vector<2x32xf32>
    %13 = arith.addf %12, %11 : vector<2x32xf32>
    %14 = arith.divf %12, %13 : vector<2x32xf32>
    %15 = arith.mulf %6, %8 : vector<2x32xf32>
    %16 = math.tanh %15 : vector<2x32xf32>
    %17 = arith.mulf %14, %16 : vector<2x32xf32>
    %c0_2 = arith.constant 0 : index
    %c0_3 = arith.constant 0 : index
    %18 = vector.load %arg0[%c0_2, %c0_3] : memref<2x32xf32, #tpu.memory_space<vmem>>, vector<2x32xf32>
    %c0_4 = arith.constant 0 : index
    %c0_5 = arith.constant 0 : index
    %19 = vector.load %arg2[%c0_4, %c0_5] : memref<32x8xf32, #tpu.memory_space<vmem>>, vector<32x8xf32>
    %cst_6 = arith.constant dense<0.000000e+00> : vector<2x8xf32>
    %20 = tpu.matmul %18, %19, %cst_6 {dimension_numbers = #tpu.dot_dimension_numbers<[1], [0], [0], [1], [0, 0, 1, 1], [], []>} : vector<2x32xf32>, vector<32x8xf32>, vector<2x8xf32> -> vector<2x8xf32>
    %c0_7 = arith.constant 0 : index
    %c0_8 = arith.constant 0 : index
    %21 = vector.load %arg3[%c0_7, %c0_8] : memref<32x8xf32, #tpu.memory_space<vmem>>, vector<32x8xf32>
    %cst_9 = arith.constant dense<0.000000e+00> : vector<2x8xf32>
    %22 = tpu.matmul %17, %21, %cst_9 {dimension_numbers = #tpu.dot_dimension_numbers<[1], [0], [0], [1], [0, 0, 1, 1], [], []>} : vector<2x32xf32>, vector<32x8xf32>, vector<2x8xf32> -> vector<2x8xf32>
    %23 = arith.addf %20, %22 : vector<2x8xf32>
    %c0_10 = arith.constant 0 : index
    %c0_11 = arith.constant 0 : index
    %24 = vector.load %arg4[%c0_10, %c0_11] : memref<1x8xf32, #tpu.memory_space<vmem>>, vector<1x8xf32>
    %25 = vector.broadcast %24 : vector<1x8xf32> to vector<2x8xf32>
    %26 = arith.addf %23, %25 : vector<2x8xf32>
    %c0_12 = arith.constant 0 : index
    %c0_13 = arith.constant 0 : index
    %27 = vector.load %arg5[%c0_12, %c0_13] : memref<2x8xf32, #tpu.memory_space<vmem>>, vector<2x8xf32>
    tpu.vector_store %arg5[%c0_12, %c0_13], %26 {strides = array<i32>} : memref<2x8xf32, #tpu.memory_space<vmem>>, vector<2x8xf32>,
    return
  }
}

</mosaic_0001>

<llo_original>
// kernel: bilstm_forward.9
$region0: #{bilstm_forward.9}
  #allocation0 [shape = 'u32[]', space=smem, size = 0x4, offset = 0x4, fixed_abs, tag = 'smem constant byte address 0x4 - core index']
  #allocation1 [shape = 'u32[144,128]{1,0:T(1,128)}', space=vmem, size = 0x12000, scoped, tag = 'internal scratch']
  %s0 = inlined_call_operand.vmem [shape: f32[16,16], index: 0, kind: input, shape index: {}]
  %s1 = inlined_call_operand.vmem [shape: bf16[16,128], index: 1, kind: input, shape index: {}]
  %s2 = inlined_call_operand.vmem [shape: f32[1,128], index: 2, kind: input, shape index: {}]
  %s3 = inlined_call_operand.vmem [shape: f32[16,128], index: 3, kind: output, shape index: {}]
  %s4 = sld [smem:[#allocation0]]
  $region22: #{bilstm_forward.9} parent=0
    _
  %s6 = ssub.s32 1, %s4
  %s7 = scalar_select 0, %s6, %s4
  // Predicated region
  $region2: #{bilstm_forward.9} parent=0 // pred_check
    _
  $region3: #{bilstm_forward.9} parent=0 // pred_check_branch
    %9 = sbr.rel (0) target = $region5
  $region4: #{bilstm_forward.9} parent=0 // pred_region
    _
  $region5: #{bilstm_forward.9} parent=0 // pred_fallthru
    _
  // Predicated region
  $region6: #{bilstm_forward.9} parent=0 // pred_check
    _
  $region7: #{bilstm_forward.9} parent=0 // pred_check_branch
    %11 = sbr.rel (0) target = $region9
  $region8: #{bilstm_forward.9} parent=0 // pred_region
    _
  $region9: #{bilstm_forward.9} parent=0 // pred_fallthru
    _
  // Predicated region
  $region10: #{bilstm_forward.9} parent=0 // pred_check
    _
  $region11: #{bilstm_forward.9} parent=0 // pred_check_branch
    %13 = sbr.rel (0) target = $region13
  $region12: #{bilstm_forward.9} parent=0 // pred_region
    _
  $region13: #{bilstm_forward.9} parent=0 // pred_fallthru
    _
  %v15 = vld [vmem:[%s0] sm:$0xff]
  %v16 = vld [vmem:[%s0 + $0x8] sm:$0xff]
  %v17 = vpack.c.bf16 %v16, %v15
  %v18 = vld [vmem:[%s1] sm:$0xf]
  %v19 = vld [vmem:[%s1 + $0x4] sm:$0xf]
  %v20 = vld [vmem:[%s2] sm:$0x1]
  %v22 = vlaneseq
  %v23 = vshrl.u32 %v22, 7
  %v24 = vsub.s32 0, %v23
  %v25 = vrot.slane %v20, %v24
  %v29 = vunpack.c.l.b16 %v18
  %v30 = vunpack.c.l.b16 %v19
  %v31 = vpack.c.b16 %v30, %v29
  %vm33 = vcmask 130048
  %v35 = vsel %vm33, %v17, 0
  %37 = vmatprep.subr.bf16.mxu0 0
  %38 = vmatpush1.bf16.msra.mxu0 0
  %39 = vmatprep.subr.bf16.mxu0 0
  %40 = vmatpush1.bf16.msra.mxu0 0
  %41 = vmatprep.subr.bf16.mxu0 0
  %42 = vmatpush1.bf16.msra.mxu0 0
  %43 = vmatprep.subr.bf16.mxu0 0
  %44 = vmatpush1.bf16.msra.mxu0 0
  %45 = vmatprep.subr.bf16.mxu0 0
  %46 = vmatpush1.bf16.msra.mxu0 0
  %47 = vmatprep.subr.bf16.mxu0 0
  %48 = vmatpush1.bf16.msra.mxu0 0
  %49 = vmatprep.subr.bf16.mxu0 0
  %50 = vmatpush1.bf16.msra.mxu0 0
  %51 = vmatprep.subr.bf16.mxu0 0
  %52 = vmatpush1.bf16.msra.mxu0 %v31
  %53 = vmatprep.subr.bf16.mxu0 0
  %54 = vmatpush2.bf16.msra.mxu0 0
  %55 = vmatprep.subr.bf16.mxu0 0
  %56 = vmatpush2.bf16.msra.mxu0 0
  %57 = vmatprep.subr.bf16.mxu0 0
  %58 = vmatpush2.bf16.msra.mxu0 0
  %59 = vmatprep.subr.bf16.mxu0 0
  %60 = vmatpush2.bf16.msra.mxu0 0
  %61 = vmatprep.subr.bf16.mxu0 0
  %62 = vmatpush2.bf16.msra.mxu0 0
  %63 = vmatprep.subr.bf16.mxu0 0
  %64 = vmatpush2.bf16.msra.mxu0 0
  %65 = vmatprep.subr.bf16.mxu0 0
  %66 = vmatpush2.bf16.msra.mxu0 0
  %67 = vmatprep.subr.bf16.mxu0 0
  %68 = vmatpush2.bf16.msra.mxu0 0
  %69 = vmatprep.mubr.bf16.mxu0 0
  %70 = vmatmul.mubr.bf16.gmra.mxu0 %v35
  %v71 = vpop.f32.mrf.mxu0
  %v72 = vadd.f32 %v25, %v71
  %v73 = vpop.f32.mrf.mxu0
  %v74 = vpop.f32.mrf.mxu0
  %v75 = vadd.f32 %v25, %v74
  %v76 = vpop.f32.mrf.mxu0
  %77 = vdwg.mxu0
  %78 = vst [vmem:[%s3] sm:$0xff] %v72
  %79 = vst [vmem:[%s3 + $0x8] sm:$0xff] %v75
  // Predicated region
  $region14: #{bilstm_forward.9} parent=0 // pred_check
    _
  $region15: #{bilstm_forward.9} parent=0 // pred_check_branch
    %81 = sbr.rel (0) target = $region17
  $region16: #{bilstm_forward.9} parent=0 // pred_region
    _
  $region17: #{bilstm_forward.9} parent=0 // pred_fallthru
    _
  // Predicated region
  $region18: #{bilstm_forward.9} parent=0 // pred_check
    _
  $region19: #{bilstm_forward.9} parent=0 // pred_check_branch
    %83 = sbr.rel (0) target = $region21
  $region20: #{bilstm_forward.9} parent=0 // pred_region
    _
  $region21: #{bilstm_forward.9} parent=0 // pred_fallthru
    _

// kernel: bilstm_forward.14
$region0: #{bilstm_forward.14}
  #allocation0 [shape = 'u32[]', space=smem, size = 0x4, offset = 0x4, fixed_abs, tag = 'smem constant byte address 0x4 - core index']
  #allocation1 [shape = 'u32[144,128]{1,0:T(1,128)}', space=vmem, size = 0x12000, scoped, tag = 'internal scratch']
  %s0 = inlined_call_operand.vmem [shape: f32[2,32], index: 0, kind: input, shape index: {}]
  %s1 = inlined_call_operand.vmem [shape: f32[2,32], index: 1, kind: input, shape index: {}]
  %s2 = inlined_call_operand.vmem [shape: bf16[32,128], index: 2, kind: input, shape index: {}]
  %s3 = inlined_call_operand.vmem [shape: bf16[32,128], index: 3, kind: input, shape index: {}]
  %s4 = inlined_call_operand.vmem [shape: f32[1,128], index: 4, kind: input, shape index: {}]
  %s5 = inlined_call_operand.vmem [shape: f32[2,128], index: 5, kind: output, shape index: {}]
  %s6 = sld [smem:[#allocation0]]
  $region30: #{bilstm_forward.14} parent=0
    _
  %s8 = ssub.s32 1, %s6
  %s9 = scalar_select 0, %s8, %s6
  // Predicated region
  $region2: #{bilstm_forward.14} parent=0 // pred_check
    _
  $region3: #{bilstm_forward.14} parent=0 // pred_check_branch
    %11 = sbr.rel (0) target = $region5
  $region4: #{bilstm_forward.14} parent=0 // pred_region
    _
  $region5: #{bilstm_forward.14} parent=0 // pred_fallthru
    _
  // Predicated region
  $region6: #{bilstm_forward.14} parent=0 // pred_check
    _
  $region7: #{bilstm_forward.14} parent=0 // pred_check_branch
    %13 = sbr.rel (0) target = $region9
  $region8: #{bilstm_forward.14} parent=0 // pred_region
    _
  $region9: #{bilstm_forward.14} parent=0 // pred_fallthru
    _
  // Predicated region
  $region10: #{bilstm_forward.14} parent=0 // pred_check
    _
  $region11: #{bilstm_forward.14} parent=0 // pred_check_branch
    %15 = sbr.rel (0) target = $region13
  $region12: #{bilstm_forward.14} parent=0 // pred_region
    _
  $region13: #{bilstm_forward.14} parent=0 // pred_fallthru
    _
  // Predicated region
  $region14: #{bilstm_forward.14} parent=0 // pred_check
    _
  $region15: #{bilstm_forward.14} parent=0 // pred_check_branch
    %17 = sbr.rel (0) target = $region17
  $region16: #{bilstm_forward.14} parent=0 // pred_region
    _
  $region17: #{bilstm_forward.14} parent=0 // pred_fallthru
    _
  // Predicated region
  $region18: #{bilstm_forward.14} parent=0 // pred_check
    _
  $region19: #{bilstm_forward.14} parent=0 // pred_check_branch
    %19 = sbr.rel (0) target = $region21
  $region20: #{bilstm_forward.14} parent=0 // pred_region
    _
  $region21: #{bilstm_forward.14} parent=0 // pred_fallthru
    _
  %v21 = vld [vmem:[%s0] sm:$0x3]
  %v22 = vpack.c.bf16 %v21, %v21
  %v23 = vld [vmem:[%s2] sm:$0xf]
  %v24 = vld [vmem:[%s2 + $0x4] sm:$0xf]
  %v25 = vld [vmem:[%s2 + $0x8] sm:$0xf]
  %v26 = vld [vmem:[%s2 + $0xc] sm:$0xf]
  %v27 = vld [vmem:[%s1] sm:$0x3]
  %v28 = vpack.c.bf16 %v27, %v27
  %v29 = vld [vmem:[%s3] sm:$0xf]
  %v30 = vld [vmem:[%s3 + $0x4] sm:$0xf]
  %v31 = vld [vmem:[%s3 + $0x8] sm:$0xf]
  %v32 = vld [vmem:[%s3 + $0xc] sm:$0xf]
  %v37 = vunpack.c.l.b16 %v29
  %v38 = vunpack.c.l.b16 %v30
  %v39 = vunpack.c.l.b16 %v31
  %v40 = vunpack.c.l.b16 %v32
  %v41 = vpack.c.b16 %v38, %v37
  %v42 = vpack.c.b16 %v40, %v39
  %vm45 = vcmask 261120
  %v47 = vsel %vm45, %v28, 0
  %49 = vmatprep.subr.bf16.mxu0 0
  %50 = vmatpush1.bf16.msra.mxu0 0
  %51 = vmatprep.subr.bf16.mxu0 0
  %52 = vmatpush1.bf16.msra.mxu0 0
  %53 = vmatprep.subr.bf16.mxu0 0
  %54 = vmatpush1.bf16.msra.mxu0 0
  %55 = vmatprep.subr.bf16.mxu0 0
  %56 = vmatpush1.bf16.msra.mxu0 0
  %57 = vmatprep.subr.bf16.mxu0 0
  %58 = vmatpush1.bf16.msra.mxu0 0
  %59 = vmatprep.subr.bf16.mxu0 0
  %60 = vmatpush1.bf16.msra.mxu0 0
  %61 = vmatprep.subr.bf16.mxu0 0
  %62 = vmatpush1.bf16.msra.mxu0 %v42
  %63 = vmatprep.subr.bf16.mxu0 0
  %64 = vmatpush1.bf16.msra.mxu0 %v41
  %65 = vmatprep.subr.bf16.mxu0 0
  %66 = vmatpush2.bf16.msra.mxu0 0
  %67 = vmatprep.subr.bf16.mxu0 0
  %68 = vmatpush2.bf16.msra.mxu0 0
  %69 = vmatprep.subr.bf16.mxu0 0
  %70 = vmatpush2.bf16.msra.mxu0 0
  %71 = vmatprep.subr.bf16.mxu0 0
  %72 = vmatpush2.bf16.msra.mxu0 0
  %73 = vmatprep.subr.bf16.mxu0 0
  %74 = vmatpush2.bf16.msra.mxu0 0
  %75 = vmatprep.subr.bf16.mxu0 0
  %76 = vmatpush2.bf16.msra.mxu0 0
  %77 = vmatprep.subr.bf16.mxu0 0
  %78 = vmatpush2.bf16.msra.mxu0 0
  %79 = vmatprep.subr.bf16.mxu0 0
  %80 = vmatpush2.bf16.msra.mxu0 0
  %81 = vmatprep.mubr.bf16.mxu0 0
  %82 = vmatmul.mubr.bf16.gmra.mxu0 %v47
  %v83 = vpop.f32.mrf.mxu0
  %v84 = vadd.f32 0.0, %v83
  %v85 = vpop.f32.mrf.mxu0
  %v86 = vpop.f32.mrf.mxu0
  %v87 = vpop.f32.mrf.mxu0
  %88 = vdwg.mxu0
  %v93 = vunpack.c.l.b16 %v23
  %v94 = vunpack.c.l.b16 %v24
  %v95 = vunpack.c.l.b16 %v25
  %v96 = vunpack.c.l.b16 %v26
  %v97 = vpack.c.b16 %v94, %v93
  %v98 = vpack.c.b16 %v96, %v95
  %v102 = vsel %vm45, %v22, 0
  %104 = vmatprep.subr.bf16.mxu0 0
  %105 = vmatpush1.bf16.msra.mxu0 0
  %106 = vmatprep.subr.bf16.mxu0 0
  %107 = vmatpush1.bf16.msra.mxu0 0
  %108 = vmatprep.subr.bf16.mxu0 0
  %109 = vmatpush1.bf16.msra.mxu0 0
  %110 = vmatprep.subr.bf16.mxu0 0
  %111 = vmatpush1.bf16.msra.mxu0 0
  %112 = vmatprep.subr.bf16.mxu0 0
  %113 = vmatpush1.bf16.msra.mxu0 0
  %114 = vmatprep.subr.bf16.mxu0 0
  %115 = vmatpush1.bf16.msra.mxu0 0
  %116 = vmatprep.subr.bf16.mxu0 0
  %117 = vmatpush1.bf16.msra.mxu0 %v98
  %118 = vmatprep.subr.bf16.mxu0 0
  %119 = vmatpush1.bf16.msra.mxu0 %v97
  %120 = vmatprep.subr.bf16.mxu0 0
  %121 = vmatpush2.bf16.msra.mxu0 0
  %122 = vmatprep.subr.bf16.mxu0 0
  %123 = vmatpush2.bf16.msra.mxu0 0
  %124 = vmatprep.subr.bf16.mxu0 0
  %125 = vmatpush2.bf16.msra.mxu0 0
  %126 = vmatprep.subr.bf16.mxu0 0
  %127 = vmatpush2.bf16.msra.mxu0 0
  %128 = vmatprep.subr.bf16.mxu0 0
  %129 = vmatpush2.bf16.msra.mxu0 0
  %130 = vmatprep.subr.bf16.mxu0 0
  %131 = vmatpush2.bf16.msra.mxu0 0
  %132 = vmatprep.subr.bf16.mxu0 0
  %133 = vmatpush2.bf16.msra.mxu0 0
  %134 = vmatprep.subr.bf16.mxu0 0
  %135 = vmatpush2.bf16.msra.mxu0 0
  %136 = vmatprep.mubr.bf16.mxu0 0
  %137 = vmatmul.mubr.bf16.gmra.mxu0 %v102
  %v138 = vpop.f32.mrf.mxu0
  %v139 = vadd.f32 %v84, %v138
  %v140 = vpop.f32.mrf.mxu0
  %v141 = vpop.f32.mrf.mxu0
  %v142 = vpop.f32.mrf.mxu0
  %143 = vdwg.mxu0
  %v144 = vld [vmem:[%s4] sm:$0x1]
  %v146 = vlaneseq
  %v147 = vshrl.u32 %v146, 7
  %v148 = vsub.s32 0, %v147
  %v149 = vrot.slane %v144, %v148
  %v151 = vadd.f32 %v139, %v149
  %152 = vst [vmem:[%s5] sm:$0x3] %v151
  // Predicated region
  $region22: #{bilstm_forward.14} parent=0 // pred_check
    _
  $region23: #{bilstm_forward.14} parent=0 // pred_check_branch
    %154 = sbr.rel (0) target = $region25
  $region24: #{bilstm_forward.14} parent=0 // pred_region
    _
  $region25: #{bilstm_forward.14} parent=0 // pred_fallthru
    _
  // Predicated region
  $region26: #{bilstm_forward.14} parent=0 // pred_check
    _
  $region27: #{bilstm_forward.14} parent=0 // pred_check_branch
    %156 = sbr.rel (0) target = $region29
  $region28: #{bilstm_forward.14} parent=0 // pred_region
    _
  $region29: #{bilstm_forward.14} parent=0 // pred_fallthru
    _

// kernel: bilstm_forward.10
$region0: #{bilstm_forward.10}
  #allocation0 [shape = 'u32[]', space=smem, size = 0x4, offset = 0x4, fixed_abs, tag = 'smem constant byte address 0x4 - core index']
  #allocation1 [shape = 'u32[144,128]{1,0:T(1,128)}', space=vmem, size = 0x12000, scoped, tag = 'internal scratch']
  #allocation2 [shape = 'f32[2,32]{1,0:T(2,128)}', space=vmem, size = 0x400, scoped, tag = 'scratch operand']
  #allocation3 [shape = 'f32[2,32]{1,0:T(2,128)}', space=vmem, size = 0x400, scoped, tag = 'scratch operand']
  %s0 = inlined_call_operand.vmem [shape: f32[8,2,128], index: 0, kind: input, shape index: {}]
  %s1 = inlined_call_operand.vmem [shape: bf16[32,128], index: 1, kind: input, shape index: {}]
  %s2 = inlined_call_operand.vmem [shape: f32[8,2,32], index: 2, kind: output, shape index: {}]
  %s3 = sld [smem:[#allocation0]]
  $region22: #{bilstm_forward.10} parent=0
    _
  %s5 = ssub.s32 1, %s3
  %s6 = scalar_select 0, %s5, %s3
  // Predicated region
  $region2: #{bilstm_forward.10} parent=0 // pred_check
    _
  $region3: #{bilstm_forward.10} parent=0 // pred_check_branch
    %8 = sbr.rel (0) target = $region5
  $region4: #{bilstm_forward.10} parent=0 // pred_region
    _
  $region5: #{bilstm_forward.10} parent=0 // pred_fallthru
    _
  // Predicated region
  $region6: #{bilstm_forward.10} parent=0 // pred_check
    _
  $region7: #{bilstm_forward.10} parent=0 // pred_check_branch
    %10 = sbr.rel (0) target = $region9
  $region8: #{bilstm_forward.10} parent=0 // pred_region
    _
  $region9: #{bilstm_forward.10} parent=0 // pred_fallthru
    _
  %p12 = scmp.eq.s32.totalorder 0, 0
  // Predicated region
  $region10: #{bilstm_forward.10} parent=0 // pred_check
    %p13 = pneg %p12
  $region11: #{bilstm_forward.10} parent=0 // pred_check_branch
    %15 = sbr.rel (%p13) target = $region13
  $region12: #{bilstm_forward.10} parent=0 // pred_region
    %vm16 = vcmask 254976
    %17 = vst.msk [vmem:[#allocation2] sm:$0x3] %vm16, 0.0
    %18 = vst.msk [vmem:[#allocation3] sm:$0x3] %vm16, 0.0
  $region13: #{bilstm_forward.10} parent=0 // pred_fallthru
    _
  %v19 = vld [vmem:[#allocation2] sm:$0x3]
  %v20 = vld [vmem:[#allocation3] sm:$0x3]
  %v21 = vld [vmem:[%s1] sm:$0xf]
  %v22 = vld [vmem:[%s1 + $0x4] sm:$0xf]
  %v23 = vld [vmem:[%s1 + $0x8] sm:$0xf]
  %v24 = vld [vmem:[%s1 + $0xc] sm:$0xf]
  %v25 = vld [vmem:[%s0] sm:$0x3]
  %v26 = vpack.c.bf16 %v19, %v19
  %v31 = vunpack.c.l.b16 %v21
  %v32 = vunpack.c.l.b16 %v22
  %v33 = vunpack.c.l.b16 %v23
  %v34 = vunpack.c.l.b16 %v24
  %v35 = vpack.c.b16 %v32, %v31
  %v36 = vpack.c.b16 %v34, %v33
  %vm39 = vcmask 261120
  %v41 = vsel %vm39, %v26, 0
  %43 = vmatprep.subr.bf16.mxu0 0
  %44 = vmatpush1.bf16.msra.mxu0 0
  %45 = vmatprep.subr.bf16.mxu0 0
  %46 = vmatpush1.bf16.msra.mxu0 0
  %47 = vmatprep.subr.bf16.mxu0 0
  %48 = vmatpush1.bf16.msra.mxu0 0
  %49 = vmatprep.subr.bf16.mxu0 0
  %50 = vmatpush1.bf16.msra.mxu0 0
  %51 = vmatprep.subr.bf16.mxu0 0
  %52 = vmatpush1.bf16.msra.mxu0 0
  %53 = vmatprep.subr.bf16.mxu0 0
  %54 = vmatpush1.bf16.msra.mxu0 0
  %55 = vmatprep.subr.bf16.mxu0 0
  %56 = vmatpush1.bf16.msra.mxu0 %v36
  %57 = vmatprep.subr.bf16.mxu0 0
  %58 = vmatpush1.bf16.msra.mxu0 %v35
  %59 = vmatprep.subr.bf16.mxu0 0
  %60 = vmatpush2.bf16.msra.mxu0 0
  %61 = vmatprep.subr.bf16.mxu0 0
  %62 = vmatpush2.bf16.msra.mxu0 0
  %63 = vmatprep.subr.bf16.mxu0 0
  %64 = vmatpush2.bf16.msra.mxu0 0
  %65 = vmatprep.subr.bf16.mxu0 0
  %66 = vmatpush2.bf16.msra.mxu0 0
  %67 = vmatprep.subr.bf16.mxu0 0
  %68 = vmatpush2.bf16.msra.mxu0 0
  %69 = vmatprep.subr.bf16.mxu0 0
  %70 = vmatpush2.bf16.msra.mxu0 0
  %71 = vmatprep.subr.bf16.mxu0 0
  %72 = vmatpush2.bf16.msra.mxu0 0
  %73 = vmatprep.subr.bf16.mxu0 0
  %74 = vmatpush2.bf16.msra.mxu0 0
  %75 = vmatprep.mubr.bf16.mxu0 0
  %76 = vmatmul.mubr.bf16.gmra.mxu0 %v41
  %v77 = vpop.f32.mrf.mxu0
  %v78 = vadd.f32 0.0, %v77
  %v79 = vpop.f32.mrf.mxu0
  %v80 = vpop.f32.mrf.mxu0
  %v81 = vpop.f32.mrf.mxu0
  %82 = vdwg.mxu0
  %v83 = vadd.f32 %v25, %v78
  %v84 = vxor.u32 %v83, 2147483648
  %v85 = vmul.f32 %v84, 1.442695
  %v86 = vpow.pop %v85
  %v87 = vadd.f32 %v86, 1.0
  %v88 = vrcp.pop %v87
  %v89 = vmul.f32 1.0, %v88
  %v90 = vtanh.pop %v83
  %92 = vrot.lane.b32.xlu0 %v20, 32
  %v93 = vpop.permute.xlu0 %92
  %v95 = vmul.f32 %v89, %v93
  %97 = vrot.lane.b32.xlu0 %v90, 64
  %v98 = vpop.permute.xlu0 %97
  %v100 = vmul.f32 %v89, %v98
  %102 = vrot.lane.b32.xlu0 %v100, 32
  %v103 = vpop.permute.xlu0 %102
  %v105 = vadd.f32 %v95, %v103
  %v106 = vtanh.pop %v105
  %108 = vrot.lane.b32.xlu0 %v106, 64
  %v109 = vpop.permute.xlu0 %108
  %v111 = vmul.f32 %v89, %v109
  %113 = vrot.lane.b32.xlu0 %v111, 32
  %v114 = vpop.permute.xlu0 %113
  %vm116 = vcmask 254976
  %117 = vst.msk [vmem:[%s2] sm:$0x3] %vm116, %v114
  %s118 = scalar_lea.vmem %s0, 2
  %v119 = vld [vmem:[%s118] sm:$0x3]
  %v120 = vpack.c.bf16 %v111, %v111
  %122 = vrot.lane.b32.xlu0 %v120, 32
  %v123 = vpop.permute.xlu0 %122
  %v125 = vsel %vm39, %v123, 0
  %127 = vmatprep.subr.bf16.mxu0 0
  %128 = vmatpush1.bf16.msra.mxu0 0
  %129 = vmatprep.subr.bf16.mxu0 0
  %130 = vmatpush1.bf16.msra.mxu0 0
  %131 = vmatprep.subr.bf16.mxu0 0
  %132 = vmatpush1.bf16.msra.mxu0 0
  %133 = vmatprep.subr.bf16.mxu0 0
  %134 = vmatpush1.bf16.msra.mxu0 0
  %135 = vmatprep.subr.bf16.mxu0 0
  %136 = vmatpush1.bf16.msra.mxu0 0
  %137 = vmatprep.subr.bf16.mxu0 0
  %138 = vmatpush1.bf16.msra.mxu0 0
  %139 = vmatprep.subr.bf16.mxu0 0
  %140 = vmatpush1.bf16.msra.mxu0 %v36
  %141 = vmatprep.subr.bf16.mxu0 0
  %142 = vmatpush1.bf16.msra.mxu0 %v35
  %143 = vmatprep.subr.bf16.mxu0 0
  %144 = vmatpush2.bf16.msra.mxu0 0
  %145 = vmatprep.subr.bf16.mxu0 0
  %146 = vmatpush2.bf16.msra.mxu0 0
  %147 = vmatprep.subr.bf16.mxu0 0
  %148 = vmatpush2.bf16.msra.mxu0 0
  %149 = vmatprep.subr.bf16.mxu0 0
  %150 = vmatpush2.bf16.msra.mxu0 0
  %151 = vmatprep.subr.bf16.mxu0 0
  %152 = vmatpush2.bf16.msra.mxu0 0
  %153 = vmatprep.subr.bf16.mxu0 0
  %154 = vmatpush2.bf16.msra.mxu0 0
  %155 = vmatprep.subr.bf16.mxu0 0
  %156 = vmatpush2.bf16.msra.mxu0 0
  %157 = vmatprep.subr.bf16.mxu0 0
  %158 = vmatpush2.bf16.msra.mxu0 0
  %159 = vmatprep.mubr.bf16.mxu0 0
  %160 = vmatmul.mubr.bf16.gmra.mxu0 %v125
  %v161 = vpop.f32.mrf.mxu0
  %v162 = vadd.f32 0.0, %v161
  %v163 = vpop.f32.mrf.mxu0
  %v164 = vpop.f32.mrf.mxu0
  %v165 = vpop.f32.mrf.mxu0
  %166 = vdwg.mxu0
  %v167 = vadd.f32 %v119, %v162
  %v168 = vxor.u32 %v167, 2147483648
  %v169 = vmul.f32 %v168, 1.442695
  %v170 = vpow.pop %v169
  %v171 = vadd.f32 %v170, 1.0
  %v172 = vrcp.pop %v171
  %v173 = vmul.f32 1.0, %v172
  %v174 = vtanh.pop %v167
  %v175 = vmul.f32 %v173, %v105
  %177 = vrot.lane.b32.xlu0 %v174, 64
  %v178 = vpop.permute.xlu0 %177
  %v180 = vmul.f32 %v173, %v178
  %182 = vrot.lane.b32.xlu0 %v180, 32
  %v183 = vpop.permute.xlu0 %182
  %v185 = vadd.f32 %v175, %v183
  %v186 = vtanh.pop %v185
  %188 = vrot.lane.b32.xlu0 %v186, 64
  %v189 = vpop.permute.xlu0 %188
  %v191 = vmul.f32 %v173, %v189
  %193 = vrot.lane.b32.xlu0 %v191, 32
  %v194 = vpop.permute.xlu0 %193
  %s196 = scalar_lea.vmem %s2, 2
  %197 = vst.msk [vmem:[%s196] sm:$0x3] %vm116, %v194
  %s198 = scalar_lea.vmem %s0, 4
  %v199 = vld [vmem:[%s198] sm:$0x3]
  %v200 = vpack.c.bf16 %v191, %v191
  %202 = vrot.lane.b32.xlu0 %v200, 32
  %v203 = vpop.permute.xlu0 %202
  %v205 = vsel %vm39, %v203, 0
  %207 = vmatprep.subr.bf16.mxu0 0
  %208 = vmatpush1.bf16.msra.mxu0 0
  %209 = vmatprep.subr.bf16.mxu0 0
  %210 = vmatpush1.bf16.msra.mxu0 0
  %211 = vmatprep.subr.bf16.mxu0 0
  %212 = vmatpush1.bf16.msra.mxu0 0
  %213 = vmatprep.subr.bf16.mxu0 0
  %214 = vmatpush1.bf16.msra.mxu0 0
  %215 = vmatprep.subr.bf16.mxu0 0
  %216 = vmatpush1.bf16.msra.mxu0 0
  %217 = vmatprep.subr.bf16.mxu0 0
  %218 = vmatpush1.bf16.msra.mxu0 0
  %219 = vmatprep.subr.bf16.mxu0 0
  %220 = vmatpush1.bf16.msra.mxu0 %v36
  %221 = vmatprep.subr.bf16.mxu0 0
  %222 = vmatpush1.bf16.msra.mxu0 %v35
  %223 = vmatprep.subr.bf16.mxu0 0
  %224 = vmatpush2.bf16.msra.mxu0 0
  %225 = vmatprep.subr.bf16.mxu0 0
  %226 = vmatpush2.bf16.msra.mxu0 0
  %227 = vmatprep.subr.bf16.mxu0 0
  %228 = vmatpush2.bf16.msra.mxu0 0
  %229 = vmatprep.subr.bf16.mxu0 0
  %230 = vmatpush2.bf16.msra.mxu0 0
  %231 = vmatprep.subr.bf16.mxu0 0
  %232 = vmatpush2.bf16.msra.mxu0 0
  %233 = vmatprep.subr.bf16.mxu0 0
  %234 = vmatpush2.bf16.msra.mxu0 0
  %235 = vmatprep.subr.bf16.mxu0 0
  %236 = vmatpush2.bf16.msra.mxu0 0
  %237 = vmatprep.subr.bf16.mxu0 0
  %238 = vmatpush2.bf16.msra.mxu0 0
  %239 = vmatprep.mubr.bf16.mxu0 0
  %240 = vmatmul.mubr.bf16.gmra.mxu0 %v205
  %v241 = vpop.f32.mrf.mxu0
  %v242 = vadd.f32 0.0, %v241
  %v243 = vpop.f32.mrf.mxu0
  %v244 = vpop.f32.mrf.mxu0
  %v245 = vpop.f32.mrf.mxu0
  %246 = vdwg.mxu0
  %v247 = vadd.f32 %v199, %v242
  %v248 = vxor.u32 %v247, 2147483648
  %v249 = vmul.f32 %v248, 1.442695
  %v250 = vpow.pop %v249
  %v251 = vadd.f32 %v250, 1.0
  %v252 = vrcp.pop %v251
  %v253 = vmul.f32 1.0, %v252
  %v254 = vtanh.pop %v247
  %v255 = vmul.f32 %v253, %v185
  %257 = vrot.lane.b32.xlu0 %v254, 64
  %v258 = vpop.permute.xlu0 %257
  %v260 = vmul.f32 %v253, %v258
  %262 = vrot.lane.b32.xlu0 %v260, 32
  %v263 = vpop.permute.xlu0 %262
  %v265 = vadd.f32 %v255, %v263
  %v266 = vtanh.pop %v265
  %268 = vrot.lane.b32.xlu0 %v266, 64
  %v269 = vpop.permute.xlu0 %268
  %v271 = vmul.f32 %v253, %v269
  %273 = vrot.lane.b32.xlu0 %v271, 32
  %v274 = vpop.permute.xlu0 %273
  %s276 = scalar_lea.vmem %s2, 4
  %277 = vst.msk [vmem:[%s276] sm:$0x3] %vm116, %v274
  %s278 = scalar_lea.vmem %s0, 6
  %v279 = vld [vmem:[%s278] sm:$0x3]
  %v280 = vpack.c.bf16 %v271, %v271
  %282 = vrot.lane.b32.xlu0 %v280, 32
  %v283 = vpop.permute.xlu0 %282
  %v285 = vsel %vm39, %v283, 0
  %287 = vmatprep.subr.bf16.mxu0 0
  %288 = vmatpush1.bf16.msra.mxu0 0
  %289 = vmatprep.subr.bf16.mxu0 0
  %290 = vmatpush1.bf16.msra.mxu0 0
  %291 = vmatprep.subr.bf16.mxu0 0
  %292 = vmatpush1.bf16.msra.mxu0 0
  %293 = vmatprep.subr.bf16.mxu0 0
  %294 = vmatpush1.bf16.msra.mxu0 0
  %295 = vmatprep.subr.bf16.mxu0 0
  %296 = vmatpush1.bf16.msra.mxu0 0
  %297 = vmatprep.subr.bf16.mxu0 0
  %298 = vmatpush1.bf16.msra.mxu0 0
  %299 = vmatprep.subr.bf16.mxu0 0
  %300 = vmatpush1.bf16.msra.mxu0 %v36
  %301 = vmatprep.subr.bf16.mxu0 0
  %302 = vmatpush1.bf16.msra.mxu0 %v35
  %303 = vmatprep.subr.bf16.mxu0 0
  %304 = vmatpush2.bf16.msra.mxu0 0
  %305 = vmatprep.subr.bf16.mxu0 0
  %306 = vmatpush2.bf16.msra.mxu0 0
  %307 = vmatprep.subr.bf16.mxu0 0
  %308 = vmatpush2.bf16.msra.mxu0 0
  %309 = vmatprep.subr.bf16.mxu0 0
  %310 = vmatpush2.bf16.msra.mxu0 0
  %311 = vmatprep.subr.bf16.mxu0 0
  %312 = vmatpush2.bf16.msra.mxu0 0
  %313 = vmatprep.subr.bf16.mxu0 0
  %314 = vmatpush2.bf16.msra.mxu0 0
  %315 = vmatprep.subr.bf16.mxu0 0
  %316 = vmatpush2.bf16.msra.mxu0 0
  %317 = vmatprep.subr.bf16.mxu0 0
  %318 = vmatpush2.bf16.msra.mxu0 0
  %319 = vmatprep.mubr.bf16.mxu0 0
  %320 = vmatmul.mubr.bf16.gmra.mxu0 %v285
  %v321 = vpop.f32.mrf.mxu0
  %v322 = vadd.f32 0.0, %v321
  %v323 = vpop.f32.mrf.mxu0
  %v324 = vpop.f32.mrf.mxu0
  %v325 = vpop.f32.mrf.mxu0
  %326 = vdwg.mxu0
  %v327 = vadd.f32 %v279, %v322
  %v328 = vxor.u32 %v327, 2147483648
  %v329 = vmul.f32 %v328, 1.442695
  %v330 = vpow.pop %v329
  %v331 = vadd.f32 %v330, 1.0
  %v332 = vrcp.pop %v331
  %v333 = vmul.f32 1.0, %v332
  %v334 = vtanh.pop %v327
  %v335 = vmul.f32 %v333, %v265
  %337 = vrot.lane.b32.xlu0 %v334, 64
  %v338 = vpop.permute.xlu0 %337
  %v340 = vmul.f32 %v333, %v338
  %342 = vrot.lane.b32.xlu0 %v340, 32
  %v343 = vpop.permute.xlu0 %342
  %v345 = vadd.f32 %v335, %v343
  %v346 = vtanh.pop %v345
  %348 = vrot.lane.b32.xlu0 %v346, 64
  %v349 = vpop.permute.xlu0 %348
  %v351 = vmul.f32 %v333, %v349
  %353 = vrot.lane.b32.xlu0 %v351, 32
  %v354 = vpop.permute.xlu0 %353
  %s356 = scalar_lea.vmem %s2, 6
  %357 = vst.msk [vmem:[%s356] sm:$0x3] %vm116, %v354
  %s358 = scalar_lea.vmem %s0, 8
  %v359 = vld [vmem:[%s358] sm:$0x3]
  %v360 = vpack.c.bf16 %v351, %v351
  %362 = vrot.lane.b32.xlu0 %v360, 32
  %v363 = vpop.permute.xlu0 %362
  %v365 = vsel %vm39, %v363, 0
  %367 = vmatprep.subr.bf16.mxu0 0
  %368 = vmatpush1.bf16.msra.mxu0 0
  %369 = vmatprep.subr.bf16.mxu0 0
  %370 = vmatpush1.bf16.msra.mxu0 0
  %371 = vmatprep.subr.bf16.mxu0 0
  %372 = vmatpush1.bf16.msra.mxu0 0
  %373 = vmatprep.subr.bf16.mxu0 0
  %374 = vmatpush1.bf16.msra.mxu0 0
  %375 = vmatprep.subr.bf16.mxu0 0
  %376 = vmatpush1.bf16.msra.mxu0 0
  %377 = vmatprep.subr.bf16.mxu0 0
  %378 = vmatpush1.bf16.msra.mxu0 0
  %379 = vmatprep.subr.bf16.mxu0 0
  %380 = vmatpush1.bf16.msra.mxu0 %v36
  %381 = vmatprep.subr.bf16.mxu0 0
  %382 = vmatpush1.bf16.msra.mxu0 %v35
  %383 = vmatprep.subr.bf16.mxu0 0
  %384 = vmatpush2.bf16.msra.mxu0 0
  %385 = vmatprep.subr.bf16.mxu0 0
  %386 = vmatpush2.bf16.msra.mxu0 0
  %387 = vmatprep.subr.bf16.mxu0 0
  %388 = vmatpush2.bf16.msra.mxu0 0
  %389 = vmatprep.subr.bf16.mxu0 0
  %390 = vmatpush2.bf16.msra.mxu0 0
  %391 = vmatprep.subr.bf16.mxu0 0
  %392 = vmatpush2.bf16.msra.mxu0 0
  %393 = vmatprep.subr.bf16.mxu0 0
  %394 = vmatpush2.bf16.msra.mxu0 0
  %395 = vmatprep.subr.bf16.mxu0 0
  %396 = vmatpush2.bf16.msra.mxu0 0
  %397 = vmatprep.subr.bf16.mxu0 0
  %398 = vmatpush2.bf16.msra.mxu0 0
  %399 = vmatprep.mubr.bf16.mxu0 0
  %400 = vmatmul.mubr.bf16.gmra.mxu0 %v365
  %v401 = vpop.f32.mrf.mxu0
  %v402 = vadd.f32 0.0, %v401
  %v403 = vpop.f32.mrf.mxu0
  %v404 = vpop.f32.mrf.mxu0
  %v405 = vpop.f32.mrf.mxu0
  %406 = vdwg.mxu0
  %v407 = vadd.f32 %v359, %v402
  %v408 = vxor.u32 %v407, 2147483648
  %v409 = vmul.f32 %v408, 1.442695
  %v410 = vpow.pop %v409
  %v411 = vadd.f32 %v410, 1.0
  %v412 = vrcp.pop %v411
  %v413 = vmul.f32 1.0, %v412
  %v414 = vtanh.pop %v407
  %v415 = vmul.f32 %v413, %v345
  %417 = vrot.lane.b32.xlu0 %v414, 64
  %v418 = vpop.permute.xlu0 %417
  %v420 = vmul.f32 %v413, %v418
  %422 = vrot.lane.b32.xlu0 %v420, 32
  %v423 = vpop.permute.xlu0 %422
  %v425 = vadd.f32 %v415, %v423
  %v426 = vtanh.pop %v425
  %428 = vrot.lane.b32.xlu0 %v426, 64
  %v429 = vpop.permute.xlu0 %428
  %v431 = vmul.f32 %v413, %v429
  %433 = vrot.lane.b32.xlu0 %v431, 32
  %v434 = vpop.permute.xlu0 %433
  %s436 = scalar_lea.vmem %s2, 8
  %437 = vst.msk [vmem:[%s436] sm:$0x3] %vm116, %v434
  %s438 = scalar_lea.vmem %s0, 10
  %v439 = vld [vmem:[%s438] sm:$0x3]
  %v440 = vpack.c.bf16 %v431, %v431
  %442 = vrot.lane.b32.xlu0 %v440, 32
  %v443 = vpop.permute.xlu0 %442
  %v445 = vsel %vm39, %v443, 0
  %447 = vmatprep.subr.bf16.mxu0 0
  %448 = vmatpush1.bf16.msra.mxu0 0
  %449 = vmatprep.subr.bf16.mxu0 0
  %450 = vmatpush1.bf16.msra.mxu0 0
  %451 = vmatprep.subr.bf16.mxu0 0
  %452 = vmatpush1.bf16.msra.mxu0 0
  %453 = vmatprep.subr.bf16.mxu0 0
  %454 = vmatpush1.bf16.msra.mxu0 0
  %455 = vmatprep.subr.bf16.mxu0 0
  %456 = vmatpush1.bf16.msra.mxu0 0
  %457 = vmatprep.subr.bf16.mxu0 0
  %458 = vmatpush1.bf16.msra.mxu0 0
  %459 = vmatprep.subr.bf16.mxu0 0
  %460 = vmatpush1.bf16.msra.mxu0 %v36
  %461 = vmatprep.subr.bf16.mxu0 0
  %462 = vmatpush1.bf16.msra.mxu0 %v35
  %463 = vmatprep.subr.bf16.mxu0 0
  %464 = vmatpush2.bf16.msra.mxu0 0
  %465 = vmatprep.subr.bf16.mxu0 0
  %466 = vmatpush2.bf16.msra.mxu0 0
  %467 = vmatprep.subr.bf16.mxu0 0
  %468 = vmatpush2.bf16.msra.mxu0 0
  %469 = vmatprep.subr.bf16.mxu0 0
  %470 = vmatpush2.bf16.msra.mxu0 0
  %471 = vmatprep.subr.bf16.mxu0 0
  %472 = vmatpush2.bf16.msra.mxu0 0
  %473 = vmatprep.subr.bf16.mxu0 0
  %474 = vmatpush2.bf16.msra.mxu0 0
  %475 = vmatprep.subr.bf16.mxu0 0
  %476 = vmatpush2.bf16.msra.mxu0 0
  %477 = vmatprep.subr.bf16.mxu0 0
  %478 = vmatpush2.bf16.msra.mxu0 0
  %479 = vmatprep.mubr.bf16.mxu0 0
  %480 = vmatmul.mubr.bf16.gmra.mxu0 %v445
  %v481 = vpop.f32.mrf.mxu0
  %v482 = vadd.f32 0.0, %v481
  %v483 = vpop.f32.mrf.mxu0
  %v484 = vpop.f32.mrf.mxu0
  %v485 = vpop.f32.mrf.mxu0
  %486 = vdwg.mxu0
  %v487 = vadd.f32 %v439, %v482
  %v488 = vxor.u32 %v487, 2147483648
  %v489 = vmul.f32 %v488, 1.442695
  %v490 = vpow.pop %v489
  %v491 = vadd.f32 %v490, 1.0
  %v492 = vrcp.pop %v491
  %v493 = vmul.f32 1.0, %v492
  %v494 = vtanh.pop %v487
  %v495 = vmul.f32 %v493, %v425
  %497 = vrot.lane.b32.xlu0 %v494, 64
  %v498 = vpop.permute.xlu0 %497
  %v500 = vmul.f32 %v493, %v498
  %502 = vrot.lane.b32.xlu0 %v500, 32
  %v503 = vpop.permute.xlu0 %502
  %v505 = vadd.f32 %v495, %v503
  %v506 = vtanh.pop %v505
  %508 = vrot.lane.b32.xlu0 %v506, 64
  %v509 = vpop.permute.xlu0 %508
  %v511 = vmul.f32 %v493, %v509
  %513 = vrot.lane.b32.xlu0 %v511, 32
  %v514 = vpop.permute.xlu0 %513
  %s516 = scalar_lea.vmem %s2, 10
  %517 = vst.msk [vmem:[%s516] sm:$0x3] %vm116, %v514
  %s518 = scalar_lea.vmem %s0, 12
  %v519 = vld [vmem:[%s518] sm:$0x3]
  %v520 = vpack.c.bf16 %v511, %v511
  %522 = vrot.lane.b32.xlu0 %v520, 32
  %v523 = vpop.permute.xlu0 %522
  %v525 = vsel %vm39, %v523, 0
  %527 = vmatprep.subr.bf16.mxu0 0
  %528 = vmatpush1.bf16.msra.mxu0 0
  %529 = vmatprep.subr.bf16.mxu0 0
  %530 = vmatpush1.bf16.msra.mxu0 0
  %531 = vmatprep.subr.bf16.mxu0 0
  %532 = vmatpush1.bf16.msra.mxu0 0
  %533 = vmatprep.subr.bf16.mxu0 0
  %534 = vmatpush1.bf16.msra.mxu0 0
  %535 = vmatprep.subr.bf16.mxu0 0
  %536 = vmatpush1.bf16.msra.mxu0 0
  %537 = vmatprep.subr.bf16.mxu0 0
  %538 = vmatpush1.bf16.msra.mxu0 0
  %539 = vmatprep.subr.bf16.mxu0 0
  %540 = vmatpush1.bf16.msra.mxu0 %v36
  %541 = vmatprep.subr.bf16.mxu0 0
  %542 = vmatpush1.bf16.msra.mxu0 %v35
  %543 = vmatprep.subr.bf16.mxu0 0
  %544 = vmatpush2.bf16.msra.mxu0 0
  %545 = vmatprep.subr.bf16.mxu0 0
  %546 = vmatpush2.bf16.msra.mxu0 0
  %547 = vmatprep.subr.bf16.mxu0 0
  %548 = vmatpush2.bf16.msra.mxu0 0
  %549 = vmatprep.subr.bf16.mxu0 0
  %550 = vmatpush2.bf16.msra.mxu0 0
  %551 = vmatprep.subr.bf16.mxu0 0
  %552 = vmatpush2.bf16.msra.mxu0 0
  %553 = vmatprep.subr.bf16.mxu0 0
  %554 = vmatpush2.bf16.msra.mxu0 0
  %555 = vmatprep.subr.bf16.mxu0 0
  %556 = vmatpush2.bf16.msra.mxu0 0
  %557 = vmatprep.subr.bf16.mxu0 0
  %558 = vmatpush2.bf16.msra.mxu0 0
  %559 = vmatprep.mubr.bf16.mxu0 0
  %560 = vmatmul.mubr.bf16.gmra.mxu0 %v525
  %v561 = vpop.f32.mrf.mxu0
  %v562 = vadd.f32 0.0, %v561
  %v563 = vpop.f32.mrf.mxu0
  %v564 = vpop.f32.mrf.mxu0
  %v565 = vpop.f32.mrf.mxu0
  %566 = vdwg.mxu0
  %v567 = vadd.f32 %v519, %v562
  %v568 = vxor.u32 %v567, 2147483648
  %v569 = vmul.f32 %v568, 1.442695
  %v570 = vpow.pop %v569
  %v571 = vadd.f32 %v570, 1.0
  %v572 = vrcp.pop %v571
  %v573 = vmul.f32 1.0, %v572
  %v574 = vtanh.pop %v567
  %v575 = vmul.f32 %v573, %v505
  %577 = vrot.lane.b32.xlu0 %v574, 64
  %v578 = vpop.permute.xlu0 %577
  %v580 = vmul.f32 %v573, %v578
  %582 = vrot.lane.b32.xlu0 %v580, 32
  %v583 = vpop.permute.xlu0 %582
  %v585 = vadd.f32 %v575, %v583
  %v586 = vtanh.pop %v585
  %588 = vrot.lane.b32.xlu0 %v586, 64
  %v589 = vpop.permute.xlu0 %588
  %v591 = vmul.f32 %v573, %v589
  %593 = vrot.lane.b32.xlu0 %v591, 32
  %v594 = vpop.permute.xlu0 %593
  %s596 = scalar_lea.vmem %s2, 12
  %597 = vst.msk [vmem:[%s596] sm:$0x3] %vm116, %v594
  %s598 = scalar_lea.vmem %s0, 14
  %v599 = vld [vmem:[%s598] sm:$0x3]
  %v600 = vpack.c.bf16 %v591, %v591
  %602 = vrot.lane.b32.xlu0 %v600, 32
  %v603 = vpop.permute.xlu0 %602
  %v605 = vsel %vm39, %v603, 0
  %607 = vmatprep.subr.bf16.mxu0 0
  %608 = vmatpush1.bf16.msra.mxu0 0
  %609 = vmatprep.subr.bf16.mxu0 0
  %610 = vmatpush1.bf16.msra.mxu0 0
  %611 = vmatprep.subr.bf16.mxu0 0
  %612 = vmatpush1.bf16.msra.mxu0 0
  %613 = vmatprep.subr.bf16.mxu0 0
  %614 = vmatpush1.bf16.msra.mxu0 0
  %615 = vmatprep.subr.bf16.mxu0 0
  %616 = vmatpush1.bf16.msra.mxu0 0
  %617 = vmatprep.subr.bf16.mxu0 0
  %618 = vmatpush1.bf16.msra.mxu0 0
  %619 = vmatprep.subr.bf16.mxu0 0
  %620 = vmatpush1.bf16.msra.mxu0 %v36
  %621 = vmatprep.subr.bf16.mxu0 0
  %622 = vmatpush1.bf16.msra.mxu0 %v35
  %623 = vmatprep.subr.bf16.mxu0 0
  %624 = vmatpush2.bf16.msra.mxu0 0
  %625 = vmatprep.subr.bf16.mxu0 0
  %626 = vmatpush2.bf16.msra.mxu0 0
  %627 = vmatprep.subr.bf16.mxu0 0
  %628 = vmatpush2.bf16.msra.mxu0 0
  %629 = vmatprep.subr.bf16.mxu0 0
  %630 = vmatpush2.bf16.msra.mxu0 0
  %631 = vmatprep.subr.bf16.mxu0 0
  %632 = vmatpush2.bf16.msra.mxu0 0
  %633 = vmatprep.subr.bf16.mxu0 0
  %634 = vmatpush2.bf16.msra.mxu0 0
  %635 = vmatprep.subr.bf16.mxu0 0
  %636 = vmatpush2.bf16.msra.mxu0 0
  %637 = vmatprep.subr.bf16.mxu0 0
  %638 = vmatpush2.bf16.msra.mxu0 0
  %639 = vmatprep.mubr.bf16.mxu0 0
  %640 = vmatmul.mubr.bf16.gmra.mxu0 %v605
  %v641 = vpop.f32.mrf.mxu0
  %v642 = vadd.f32 0.0, %v641
  %v643 = vpop.f32.mrf.mxu0
  %v644 = vpop.f32.mrf.mxu0
  %v645 = vpop.f32.mrf.mxu0
  %646 = vdwg.mxu0
  %v647 = vadd.f32 %v599, %v642
  %v648 = vxor.u32 %v647, 2147483648
  %v649 = vmul.f32 %v648, 1.442695
  %v650 = vpow.pop %v649
  %v651 = vadd.f32 %v650, 1.0
  %v652 = vrcp.pop %v651
  %v653 = vmul.f32 1.0, %v652
  %v654 = vtanh.pop %v647
  %v655 = vmul.f32 %v653, %v585
  %657 = vrot.lane.b32.xlu0 %v654, 64
  %v658 = vpop.permute.xlu0 %657
  %v660 = vmul.f32 %v653, %v658
  %662 = vrot.lane.b32.xlu0 %v660, 32
  %v663 = vpop.permute.xlu0 %662
  %v665 = vadd.f32 %v655, %v663
  %v666 = vtanh.pop %v665
  %668 = vrot.lane.b32.xlu0 %v666, 64
  %v669 = vpop.permute.xlu0 %668
  %v671 = vmul.f32 %v653, %v669
  %673 = vrot.lane.b32.xlu0 %v671, 32
  %v674 = vpop.permute.xlu0 %673
  %s676 = scalar_lea.vmem %s2, 14
  %677 = vst.msk [vmem:[%s676] sm:$0x3] %vm116, %v674
  %678 = vst.msk [vmem:[#allocation2] sm:$0x3] %vm116, %v674
  %680 = vrot.lane.b32.xlu0 %v665, 96
  %v681 = vpop.permute.xlu0 %680
  %683 = vst.msk [vmem:[#allocation3] sm:$0x3] %vm116, %v681
  // Predicated region
  $region14: #{bilstm_forward.10} parent=0 // pred_check
    _
  $region15: #{bilstm_forward.10} parent=0 // pred_check_branch
    %685 = sbr.rel (0) target = $region17
  $region16: #{bilstm_forward.10} parent=0 // pred_region
    _
  $region17: #{bilstm_forward.10} parent=0 // pred_fallthru
    _
  // Predicated region
  $region18: #{bilstm_forward.10} parent=0 // pred_check
    _
  $region19: #{bilstm_forward.10} parent=0 // pred_check_branch
    %687 = sbr.rel (0) target = $region21
  $region20: #{bilstm_forward.10} parent=0 // pred_region
    _
  $region21: #{bilstm_forward.10} parent=0 // pred_fallthru
    _

// kernel: bilstm_forward.11
$region0: #{bilstm_forward.11}
  #allocation0 [shape = 'u32[]', space=smem, size = 0x4, offset = 0x4, fixed_abs, tag = 'smem constant byte address 0x4 - core index']
  #allocation1 [shape = 'u32[144,128]{1,0:T(1,128)}', space=vmem, size = 0x12000, scoped, tag = 'internal scratch']
  #allocation2 [shape = 'f32[2,32]{1,0:T(2,128)}', space=vmem, size = 0x400, scoped, tag = 'scratch operand']
  #allocation3 [shape = 'f32[2,32]{1,0:T(2,128)}', space=vmem, size = 0x400, scoped, tag = 'scratch operand']
  %s0 = inlined_call_operand.vmem [shape: f32[8,2,128], index: 0, kind: input, shape index: {}]
  %s1 = inlined_call_operand.vmem [shape: bf16[32,128], index: 1, kind: input, shape index: {}]
  %s2 = inlined_call_operand.vmem [shape: f32[8,2,32], index: 2, kind: output, shape index: {}]
  %s3 = sld [smem:[#allocation0]]
  $region22: #{bilstm_forward.11} parent=0
    _
  %s5 = ssub.s32 1, %s3
  %s6 = scalar_select 0, %s5, %s3
  // Predicated region
  $region2: #{bilstm_forward.11} parent=0 // pred_check
    _
  $region3: #{bilstm_forward.11} parent=0 // pred_check_branch
    %8 = sbr.rel (0) target = $region5
  $region4: #{bilstm_forward.11} parent=0 // pred_region
    %s9 = ssub.s32 0, 0
    %s10 = smul.u32 8, %s9
    %p11 = scmp.lt.s32.totalorder %s10, 7
    %s12 = scalar_select %p11, %s10, 7
    %s13 = smul.addr %s12, 2
    %s14 = scalar_lea.vmem %s0, %s13
    %s15 = ssub.s32 0, 0
    %s16 = smul.u32 8, %s15
  $region5: #{bilstm_forward.11} parent=0 // pred_fallthru
    _
  // Predicated region
  $region6: #{bilstm_forward.11} parent=0 // pred_check
    _
  $region7: #{bilstm_forward.11} parent=0 // pred_check_branch
    %18 = sbr.rel (0) target = $region9
  $region8: #{bilstm_forward.11} parent=0 // pred_region
    _
  $region9: #{bilstm_forward.11} parent=0 // pred_fallthru
    _
  %s19 = ssub.s32 0, 0
  %s20 = smul.u32 8, %s19
  %p21 = scmp.lt.s32.totalorder %s20, 7
  %s22 = scalar_select %p21, %s20, 7
  %s23 = smul.addr %s22, 2
  %s24 = scalar_lea.vmem %s0, %s23
  %s25 = ssub.s32 0, 0
  %s26 = smul.u32 8, %s25
  %p27 = scmp.lt.s32.totalorder %s26, 7
  %s28 = scalar_select %p27, %s26, 7
  %s29 = smul.addr %s28, 2
  %s30 = scalar_lea.vmem %s2, %s29
  %s31 = ssub.s32 0, 0
  %s32 = smul.u32 8, %s31
  %p33 = scmp.lt.s32.totalorder %s32, 7
  %s34 = scalar_select %p33, %s32, 7
  %s35 = smul.addr %s34, 2
  %s36 = scalar_lea.vmem %s0, %s35
  %s37 = ssub.s32 0, 0
  %s38 = smul.u32 8, %s37
  %s39 = ssub.s32 0, 0
  %s40 = smul.u32 8, %s39
  %p41 = scmp.lt.s32.totalorder %s40, 7
  %s42 = scalar_select %p41, %s40, 7
  %s43 = smul.addr %s42, 2
  %s44 = scalar_lea.vmem %s2, %s43
  %s45 = ssub.s32 0, 0
  %s46 = smul.u32 8, %s45
  %p48 = scmp.eq.s32.totalorder 0, 0
  // Predicated region
  $region10: #{bilstm_forward.11} parent=0 // pred_check
    %p49 = pneg %p48
  $region11: #{bilstm_forward.11} parent=0 // pred_check_branch
    %51 = sbr.rel (%p49) target = $region13
  $region12: #{bilstm_forward.11} parent=0 // pred_region
    %vm52 = vcmask 254976
    %53 = vst.msk [vmem:[#allocation2] sm:$0x3] %vm52, 0.0
    %54 = vst.msk [vmem:[#allocation3] sm:$0x3] %vm52, 0.0
  $region13: #{bilstm_forward.11} parent=0 // pred_fallthru
    _
  %v55 = vld [vmem:[#allocation2] sm:$0x3]
  %v56 = vld [vmem:[#allocation3] sm:$0x3]
  %v57 = vld [vmem:[%s1] sm:$0xf]
  %v58 = vld [vmem:[%s1 + $0x4] sm:$0xf]
  %v59 = vld [vmem:[%s1 + $0x8] sm:$0xf]
  %v60 = vld [vmem:[%s1 + $0xc] sm:$0xf]
  %s61 = scalar_lea.vmem %s36, 14
  %v62 = vld [vmem:[%s61] sm:$0x3]
  %v63 = vpack.c.bf16 %v55, %v55
  %v68 = vunpack.c.l.b16 %v57
  %v69 = vunpack.c.l.b16 %v58
  %v70 = vunpack.c.l.b16 %v59
  %v71 = vunpack.c.l.b16 %v60
  %v72 = vpack.c.b16 %v69, %v68
  %v73 = vpack.c.b16 %v71, %v70
  %vm76 = vcmask 261120
  %v78 = vsel %vm76, %v63, 0
  %80 = vmatprep.subr.bf16.mxu0 0
  %81 = vmatpush1.bf16.msra.mxu0 0
  %82 = vmatprep.subr.bf16.mxu0 0
  %83 = vmatpush1.bf16.msra.mxu0 0
  %84 = vmatprep.subr.bf16.mxu0 0
  %85 = vmatpush1.bf16.msra.mxu0 0
  %86 = vmatprep.subr.bf16.mxu0 0
  %87 = vmatpush1.bf16.msra.mxu0 0
  %88 = vmatprep.subr.bf16.mxu0 0
  %89 = vmatpush1.bf16.msra.mxu0 0
  %90 = vmatprep.subr.bf16.mxu0 0
  %91 = vmatpush1.bf16.msra.mxu0 0
  %92 = vmatprep.subr.bf16.mxu0 0
  %93 = vmatpush1.bf16.msra.mxu0 %v73
  %94 = vmatprep.subr.bf16.mxu0 0
  %95 = vmatpush1.bf16.msra.mxu0 %v72
  %96 = vmatprep.subr.bf16.mxu0 0
  %97 = vmatpush2.bf16.msra.mxu0 0
  %98 = vmatprep.subr.bf16.mxu0 0
  %99 = vmatpush2.bf16.msra.mxu0 0
  %100 = vmatprep.subr.bf16.mxu0 0
  %101 = vmatpush2.bf16.msra.mxu0 0
  %102 = vmatprep.subr.bf16.mxu0 0
  %103 = vmatpush2.bf16.msra.mxu0 0
  %104 = vmatprep.subr.bf16.mxu0 0
  %105 = vmatpush2.bf16.msra.mxu0 0
  %106 = vmatprep.subr.bf16.mxu0 0
  %107 = vmatpush2.bf16.msra.mxu0 0
  %108 = vmatprep.subr.bf16.mxu0 0
  %109 = vmatpush2.bf16.msra.mxu0 0
  %110 = vmatprep.subr.bf16.mxu0 0
  %111 = vmatpush2.bf16.msra.mxu0 0
  %112 = vmatprep.mubr.bf16.mxu0 0
  %113 = vmatmul.mubr.bf16.gmra.mxu0 %v78
  %v114 = vpop.f32.mrf.mxu0
  %v115 = vadd.f32 0.0, %v114
  %v116 = vpop.f32.mrf.mxu0
  %v117 = vpop.f32.mrf.mxu0
  %v118 = vpop.f32.mrf.mxu0
  %119 = vdwg.mxu0
  %v120 = vadd.f32 %v62, %v115
  %v121 = vxor.u32 %v120, 2147483648
  %v122 = vmul.f32 %v121, 1.442695
  %v123 = vpow.pop %v122
  %v124 = vadd.f32 %v123, 1.0
  %v125 = vrcp.pop %v124
  %v126 = vmul.f32 1.0, %v125
  %v127 = vtanh.pop %v120
  %129 = vrot.lane.b32.xlu0 %v56, 32
  %v130 = vpop.permute.xlu0 %129
  %v132 = vmul.f32 %v126, %v130
  %134 = vrot.lane.b32.xlu0 %v127, 64
  %v135 = vpop.permute.xlu0 %134
  %v137 = vmul.f32 %v126, %v135
  %139 = vrot.lane.b32.xlu0 %v137, 32
  %v140 = vpop.permute.xlu0 %139
  %v142 = vadd.f32 %v132, %v140
  %v143 = vtanh.pop %v142
  %145 = vrot.lane.b32.xlu0 %v143, 64
  %v146 = vpop.permute.xlu0 %145
  %v148 = vmul.f32 %v126, %v146
  %150 = vrot.lane.b32.xlu0 %v148, 32
  %v151 = vpop.permute.xlu0 %150
  %s153 = scalar_lea.vmem %s44, 14
  %vm154 = vcmask 254976
  %155 = vst.msk [vmem:[%s153] sm:$0x3] %vm154, %v151
  %s156 = scalar_lea.vmem %s36, 12
  %v157 = vld [vmem:[%s156] sm:$0x3]
  %v158 = vpack.c.bf16 %v148, %v148
  %160 = vrot.lane.b32.xlu0 %v158, 32
  %v161 = vpop.permute.xlu0 %160
  %v163 = vsel %vm76, %v161, 0
  %165 = vmatprep.subr.bf16.mxu0 0
  %166 = vmatpush1.bf16.msra.mxu0 0
  %167 = vmatprep.subr.bf16.mxu0 0
  %168 = vmatpush1.bf16.msra.mxu0 0
  %169 = vmatprep.subr.bf16.mxu0 0
  %170 = vmatpush1.bf16.msra.mxu0 0
  %171 = vmatprep.subr.bf16.mxu0 0
  %172 = vmatpush1.bf16.msra.mxu0 0
  %173 = vmatprep.subr.bf16.mxu0 0
  %174 = vmatpush1.bf16.msra.mxu0 0
  %175 = vmatprep.subr.bf16.mxu0 0
  %176 = vmatpush1.bf16.msra.mxu0 0
  %177 = vmatprep.subr.bf16.mxu0 0
  %178 = vmatpush1.bf16.msra.mxu0 %v73
  %179 = vmatprep.subr.bf16.mxu0 0
  %180 = vmatpush1.bf16.msra.mxu0 %v72
  %181 = vmatprep.subr.bf16.mxu0 0
  %182 = vmatpush2.bf16.msra.mxu0 0
  %183 = vmatprep.subr.bf16.mxu0 0
  %184 = vmatpush2.bf16.msra.mxu0 0
  %185 = vmatprep.subr.bf16.mxu0 0
  %186 = vmatpush2.bf16.msra.mxu0 0
  %187 = vmatprep.subr.bf16.mxu0 0
  %188 = vmatpush2.bf16.msra.mxu0 0
  %189 = vmatprep.subr.bf16.mxu0 0
  %190 = vmatpush2.bf16.msra.mxu0 0
  %191 = vmatprep.subr.bf16.mxu0 0
  %192 = vmatpush2.bf16.msra.mxu0 0
  %193 = vmatprep.subr.bf16.mxu0 0
  %194 = vmatpush2.bf16.msra.mxu0 0
  %195 = vmatprep.subr.bf16.mxu0 0
  %196 = vmatpush2.bf16.msra.mxu0 0
  %197 = vmatprep.mubr.bf16.mxu0 0
  %198 = vmatmul.mubr.bf16.gmra.mxu0 %v163
  %v199 = vpop.f32.mrf.mxu0
  %v200 = vadd.f32 0.0, %v199
  %v201 = vpop.f32.mrf.mxu0
  %v202 = vpop.f32.mrf.mxu0
  %v203 = vpop.f32.mrf.mxu0
  %204 = vdwg.mxu0
  %v205 = vadd.f32 %v157, %v200
  %v206 = vxor.u32 %v205, 2147483648
  %v207 = vmul.f32 %v206, 1.442695
  %v208 = vpow.pop %v207
  %v209 = vadd.f32 %v208, 1.0
  %v210 = vrcp.pop %v209
  %v211 = vmul.f32 1.0, %v210
  %v212 = vtanh.pop %v205
  %v213 = vmul.f32 %v211, %v142
  %215 = vrot.lane.b32.xlu0 %v212, 64
  %v216 = vpop.permute.xlu0 %215
  %v218 = vmul.f32 %v211, %v216
  %220 = vrot.lane.b32.xlu0 %v218, 32
  %v221 = vpop.permute.xlu0 %220
  %v223 = vadd.f32 %v213, %v221
  %v224 = vtanh.pop %v223
  %226 = vrot.lane.b32.xlu0 %v224, 64
  %v227 = vpop.permute.xlu0 %226
  %v229 = vmul.f32 %v211, %v227
  %231 = vrot.lane.b32.xlu0 %v229, 32
  %v232 = vpop.permute.xlu0 %231
  %s234 = scalar_lea.vmem %s44, 12
  %235 = vst.msk [vmem:[%s234] sm:$0x3] %vm154, %v232
  %s236 = scalar_lea.vmem %s36, 10
  %v237 = vld [vmem:[%s236] sm:$0x3]
  %v238 = vpack.c.bf16 %v229, %v229
  %240 = vrot.lane.b32.xlu0 %v238, 32
  %v241 = vpop.permute.xlu0 %240
  %v243 = vsel %vm76, %v241, 0
  %245 = vmatprep.subr.bf16.mxu0 0
  %246 = vmatpush1.bf16.msra.mxu0 0
  %247 = vmatprep.subr.bf16.mxu0 0
  %248 = vmatpush1.bf16.msra.mxu0 0
  %249 = vmatprep.subr.bf16.mxu0 0
  %250 = vmatpush1.bf16.msra.mxu0 0
  %251 = vmatprep.subr.bf16.mxu0 0
  %252 = vmatpush1.bf16.msra.mxu0 0
  %253 = vmatprep.subr.bf16.mxu0 0
  %254 = vmatpush1.bf16.msra.mxu0 0
  %255 = vmatprep.subr.bf16.mxu0 0
  %256 = vmatpush1.bf16.msra.mxu0 0
  %257 = vmatprep.subr.bf16.mxu0 0
  %258 = vmatpush1.bf16.msra.mxu0 %v73
  %259 = vmatprep.subr.bf16.mxu0 0
  %260 = vmatpush1.bf16.msra.mxu0 %v72
  %261 = vmatprep.subr.bf16.mxu0 0
  %262 = vmatpush2.bf16.msra.mxu0 0
  %263 = vmatprep.subr.bf16.mxu0 0
  %264 = vmatpush2.bf16.msra.mxu0 0
  %265 = vmatprep.subr.bf16.mxu0 0
  %266 = vmatpush2.bf16.msra.mxu0 0
  %267 = vmatprep.subr.bf16.mxu0 0
  %268 = vmatpush2.bf16.msra.mxu0 0
  %269 = vmatprep.subr.bf16.mxu0 0
  %270 = vmatpush2.bf16.msra.mxu0 0
  %271 = vmatprep.subr.bf16.mxu0 0
  %272 = vmatpush2.bf16.msra.mxu0 0
  %273 = vmatprep.subr.bf16.mxu0 0
  %274 = vmatpush2.bf16.msra.mxu0 0
  %275 = vmatprep.subr.bf16.mxu0 0
  %276 = vmatpush2.bf16.msra.mxu0 0
  %277 = vmatprep.mubr.bf16.mxu0 0
  %278 = vmatmul.mubr.bf16.gmra.mxu0 %v243
  %v279 = vpop.f32.mrf.mxu0
  %v280 = vadd.f32 0.0, %v279
  %v281 = vpop.f32.mrf.mxu0
  %v282 = vpop.f32.mrf.mxu0
  %v283 = vpop.f32.mrf.mxu0
  %284 = vdwg.mxu0
  %v285 = vadd.f32 %v237, %v280
  %v286 = vxor.u32 %v285, 2147483648
  %v287 = vmul.f32 %v286, 1.442695
  %v288 = vpow.pop %v287
  %v289 = vadd.f32 %v288, 1.0
  %v290 = vrcp.pop %v289
  %v291 = vmul.f32 1.0, %v290
  %v292 = vtanh.pop %v285
  %v293 = vmul.f32 %v291, %v223
  %295 = vrot.lane.b32.xlu0 %v292, 64
  %v296 = vpop.permute.xlu0 %295
  %v298 = vmul.f32 %v291, %v296
  %300 = vrot.lane.b32.xlu0 %v298, 32
  %v301 = vpop.permute.xlu0 %300
  %v303 = vadd.f32 %v293, %v301
  %v304 = vtanh.pop %v303
  %306 = vrot.lane.b32.xlu0 %v304, 64
  %v307 = vpop.permute.xlu0 %306
  %v309 = vmul.f32 %v291, %v307
  %311 = vrot.lane.b32.xlu0 %v309, 32
  %v312 = vpop.permute.xlu0 %311
  %s314 = scalar_lea.vmem %s44, 10
  %315 = vst.msk [vmem:[%s314] sm:$0x3] %vm154, %v312
  %s316 = scalar_lea.vmem %s36, 8
  %v317 = vld [vmem:[%s316] sm:$0x3]
  %v318 = vpack.c.bf16 %v309, %v309
  %320 = vrot.lane.b32.xlu0 %v318, 32
  %v321 = vpop.permute.xlu0 %320
  %v323 = vsel %vm76, %v321, 0
  %325 = vmatprep.subr.bf16.mxu0 0
  %326 = vmatpush1.bf16.msra.mxu0 0
  %327 = vmatprep.subr.bf16.mxu0 0
  %328 = vmatpush1.bf16.msra.mxu0 0
  %329 = vmatprep.subr.bf16.mxu0 0
  %330 = vmatpush1.bf16.msra.mxu0 0
  %331 = vmatprep.subr.bf16.mxu0 0
  %332 = vmatpush1.bf16.msra.mxu0 0
  %333 = vmatprep.subr.bf16.mxu0 0
  %334 = vmatpush1.bf16.msra.mxu0 0
  %335 = vmatprep.subr.bf16.mxu0 0
  %336 = vmatpush1.bf16.msra.mxu0 0
  %337 = vmatprep.subr.bf16.mxu0 0
  %338 = vmatpush1.bf16.msra.mxu0 %v73
  %339 = vmatprep.subr.bf16.mxu0 0
  %340 = vmatpush1.bf16.msra.mxu0 %v72
  %341 = vmatprep.subr.bf16.mxu0 0
  %342 = vmatpush2.bf16.msra.mxu0 0
  %343 = vmatprep.subr.bf16.mxu0 0
  %344 = vmatpush2.bf16.msra.mxu0 0
  %345 = vmatprep.subr.bf16.mxu0 0
  %346 = vmatpush2.bf16.msra.mxu0 0
  %347 = vmatprep.subr.bf16.mxu0 0
  %348 = vmatpush2.bf16.msra.mxu0 0
  %349 = vmatprep.subr.bf16.mxu0 0
  %350 = vmatpush2.bf16.msra.mxu0 0
  %351 = vmatprep.subr.bf16.mxu0 0
  %352 = vmatpush2.bf16.msra.mxu0 0
  %353 = vmatprep.subr.bf16.mxu0 0
  %354 = vmatpush2.bf16.msra.mxu0 0
  %355 = vmatprep.subr.bf16.mxu0 0
  %356 = vmatpush2.bf16.msra.mxu0 0
  %357 = vmatprep.mubr.bf16.mxu0 0
  %358 = vmatmul.mubr.bf16.gmra.mxu0 %v323
  %v359 = vpop.f32.mrf.mxu0
  %v360 = vadd.f32 0.0, %v359
  %v361 = vpop.f32.mrf.mxu0
  %v362 = vpop.f32.mrf.mxu0
  %v363 = vpop.f32.mrf.mxu0
  %364 = vdwg.mxu0
  %v365 = vadd.f32 %v317, %v360
  %v366 = vxor.u32 %v365, 2147483648
  %v367 = vmul.f32 %v366, 1.442695
  %v368 = vpow.pop %v367
  %v369 = vadd.f32 %v368, 1.0
  %v370 = vrcp.pop %v369
  %v371 = vmul.f32 1.0, %v370
  %v372 = vtanh.pop %v365
  %v373 = vmul.f32 %v371, %v303
  %375 = vrot.lane.b32.xlu0 %v372, 64
  %v376 = vpop.permute.xlu0 %375
  %v378 = vmul.f32 %v371, %v376
  %380 = vrot.lane.b32.xlu0 %v378, 32
  %v381 = vpop.permute.xlu0 %380
  %v383 = vadd.f32 %v373, %v381
  %v384 = vtanh.pop %v383
  %386 = vrot.lane.b32.xlu0 %v384, 64
  %v387 = vpop.permute.xlu0 %386
  %v389 = vmul.f32 %v371, %v387
  %391 = vrot.lane.b32.xlu0 %v389, 32
  %v392 = vpop.permute.xlu0 %391
  %s394 = scalar_lea.vmem %s44, 8
  %395 = vst.msk [vmem:[%s394] sm:$0x3] %vm154, %v392
  %s396 = scalar_lea.vmem %s36, 6
  %v397 = vld [vmem:[%s396] sm:$0x3]
  %v398 = vpack.c.bf16 %v389, %v389
  %400 = vrot.lane.b32.xlu0 %v398, 32
  %v401 = vpop.permute.xlu0 %400
  %v403 = vsel %vm76, %v401, 0
  %405 = vmatprep.subr.bf16.mxu0 0
  %406 = vmatpush1.bf16.msra.mxu0 0
  %407 = vmatprep.subr.bf16.mxu0 0
  %408 = vmatpush1.bf16.msra.mxu0 0
  %409 = vmatprep.subr.bf16.mxu0 0
  %410 = vmatpush1.bf16.msra.mxu0 0
  %411 = vmatprep.subr.bf16.mxu0 0
  %412 = vmatpush1.bf16.msra.mxu0 0
  %413 = vmatprep.subr.bf16.mxu0 0
  %414 = vmatpush1.bf16.msra.mxu0 0
  %415 = vmatprep.subr.bf16.mxu0 0
  %416 = vmatpush1.bf16.msra.mxu0 0
  %417 = vmatprep.subr.bf16.mxu0 0
  %418 = vmatpush1.bf16.msra.mxu0 %v73
  %419 = vmatprep.subr.bf16.mxu0 0
  %420 = vmatpush1.bf16.msra.mxu0 %v72
  %421 = vmatprep.subr.bf16.mxu0 0
  %422 = vmatpush2.bf16.msra.mxu0 0
  %423 = vmatprep.subr.bf16.mxu0 0
  %424 = vmatpush2.bf16.msra.mxu0 0
  %425 = vmatprep.subr.bf16.mxu0 0
  %426 = vmatpush2.bf16.msra.mxu0 0
  %427 = vmatprep.subr.bf16.mxu0 0
  %428 = vmatpush2.bf16.msra.mxu0 0
  %429 = vmatprep.subr.bf16.mxu0 0
  %430 = vmatpush2.bf16.msra.mxu0 0
  %431 = vmatprep.subr.bf16.mxu0 0
  %432 = vmatpush2.bf16.msra.mxu0 0
  %433 = vmatprep.subr.bf16.mxu0 0
  %434 = vmatpush2.bf16.msra.mxu0 0
  %435 = vmatprep.subr.bf16.mxu0 0
  %436 = vmatpush2.bf16.msra.mxu0 0
  %437 = vmatprep.mubr.bf16.mxu0 0
  %438 = vmatmul.mubr.bf16.gmra.mxu0 %v403
  %v439 = vpop.f32.mrf.mxu0
  %v440 = vadd.f32 0.0, %v439
  %v441 = vpop.f32.mrf.mxu0
  %v442 = vpop.f32.mrf.mxu0
  %v443 = vpop.f32.mrf.mxu0
  %444 = vdwg.mxu0
  %v445 = vadd.f32 %v397, %v440
  %v446 = vxor.u32 %v445, 2147483648
  %v447 = vmul.f32 %v446, 1.442695
  %v448 = vpow.pop %v447
  %v449 = vadd.f32 %v448, 1.0
  %v450 = vrcp.pop %v449
  %v451 = vmul.f32 1.0, %v450
  %v452 = vtanh.pop %v445
  %v453 = vmul.f32 %v451, %v383
  %455 = vrot.lane.b32.xlu0 %v452, 64
  %v456 = vpop.permute.xlu0 %455
  %v458 = vmul.f32 %v451, %v456
  %460 = vrot.lane.b32.xlu0 %v458, 32
  %v461 = vpop.permute.xlu0 %460
  %v463 = vadd.f32 %v453, %v461
  %v464 = vtanh.pop %v463
  %466 = vrot.lane.b32.xlu0 %v464, 64
  %v467 = vpop.permute.xlu0 %466
  %v469 = vmul.f32 %v451, %v467
  %471 = vrot.lane.b32.xlu0 %v469, 32
  %v472 = vpop.permute.xlu0 %471
  %s474 = scalar_lea.vmem %s44, 6
  %475 = vst.msk [vmem:[%s474] sm:$0x3] %vm154, %v472
  %s476 = scalar_lea.vmem %s36, 4
  %v477 = vld [vmem:[%s476] sm:$0x3]
  %v478 = vpack.c.bf16 %v469, %v469
  %480 = vrot.lane.b32.xlu0 %v478, 32
  %v481 = vpop.permute.xlu0 %480
  %v483 = vsel %vm76, %v481, 0
  %485 = vmatprep.subr.bf16.mxu0 0
  %486 = vmatpush1.bf16.msra.mxu0 0
  %487 = vmatprep.subr.bf16.mxu0 0
  %488 = vmatpush1.bf16.msra.mxu0 0
  %489 = vmatprep.subr.bf16.mxu0 0
  %490 = vmatpush1.bf16.msra.mxu0 0
  %491 = vmatprep.subr.bf16.mxu0 0
  %492 = vmatpush1.bf16.msra.mxu0 0
  %493 = vmatprep.subr.bf16.mxu0 0
  %494 = vmatpush1.bf16.msra.mxu0 0
  %495 = vmatprep.subr.bf16.mxu0 0
  %496 = vmatpush1.bf16.msra.mxu0 0
  %497 = vmatprep.subr.bf16.mxu0 0
  %498 = vmatpush1.bf16.msra.mxu0 %v73
  %499 = vmatprep.subr.bf16.mxu0 0
  %500 = vmatpush1.bf16.msra.mxu0 %v72
  %501 = vmatprep.subr.bf16.mxu0 0
  %502 = vmatpush2.bf16.msra.mxu0 0
  %503 = vmatprep.subr.bf16.mxu0 0
  %504 = vmatpush2.bf16.msra.mxu0 0
  %505 = vmatprep.subr.bf16.mxu0 0
  %506 = vmatpush2.bf16.msra.mxu0 0
  %507 = vmatprep.subr.bf16.mxu0 0
  %508 = vmatpush2.bf16.msra.mxu0 0
  %509 = vmatprep.subr.bf16.mxu0 0
  %510 = vmatpush2.bf16.msra.mxu0 0
  %511 = vmatprep.subr.bf16.mxu0 0
  %512 = vmatpush2.bf16.msra.mxu0 0
  %513 = vmatprep.subr.bf16.mxu0 0
  %514 = vmatpush2.bf16.msra.mxu0 0
  %515 = vmatprep.subr.bf16.mxu0 0
  %516 = vmatpush2.bf16.msra.mxu0 0
  %517 = vmatprep.mubr.bf16.mxu0 0
  %518 = vmatmul.mubr.bf16.gmra.mxu0 %v483
  %v519 = vpop.f32.mrf.mxu0
  %v520 = vadd.f32 0.0, %v519
  %v521 = vpop.f32.mrf.mxu0
  %v522 = vpop.f32.mrf.mxu0
  %v523 = vpop.f32.mrf.mxu0
  %524 = vdwg.mxu0
  %v525 = vadd.f32 %v477, %v520
  %v526 = vxor.u32 %v525, 2147483648
  %v527 = vmul.f32 %v526, 1.442695
  %v528 = vpow.pop %v527
  %v529 = vadd.f32 %v528, 1.0
  %v530 = vrcp.pop %v529
  %v531 = vmul.f32 1.0, %v530
  %v532 = vtanh.pop %v525
  %v533 = vmul.f32 %v531, %v463
  %535 = vrot.lane.b32.xlu0 %v532, 64
  %v536 = vpop.permute.xlu0 %535
  %v538 = vmul.f32 %v531, %v536
  %540 = vrot.lane.b32.xlu0 %v538, 32
  %v541 = vpop.permute.xlu0 %540
  %v543 = vadd.f32 %v533, %v541
  %v544 = vtanh.pop %v543
  %546 = vrot.lane.b32.xlu0 %v544, 64
  %v547 = vpop.permute.xlu0 %546
  %v549 = vmul.f32 %v531, %v547
  %551 = vrot.lane.b32.xlu0 %v549, 32
  %v552 = vpop.permute.xlu0 %551
  %s554 = scalar_lea.vmem %s44, 4
  %555 = vst.msk [vmem:[%s554] sm:$0x3] %vm154, %v552
  %s556 = scalar_lea.vmem %s36, 2
  %v557 = vld [vmem:[%s556] sm:$0x3]
  %v558 = vpack.c.bf16 %v549, %v549
  %560 = vrot.lane.b32.xlu0 %v558, 32
  %v561 = vpop.permute.xlu0 %560
  %v563 = vsel %vm76, %v561, 0
  %565 = vmatprep.subr.bf16.mxu0 0
  %566 = vmatpush1.bf16.msra.mxu0 0
  %567 = vmatprep.subr.bf16.mxu0 0
  %568 = vmatpush1.bf16.msra.mxu0 0
  %569 = vmatprep.subr.bf16.mxu0 0
  %570 = vmatpush1.bf16.msra.mxu0 0
  %571 = vmatprep.subr.bf16.mxu0 0
  %572 = vmatpush1.bf16.msra.mxu0 0
  %573 = vmatprep.subr.bf16.mxu0 0
  %574 = vmatpush1.bf16.msra.mxu0 0
  %575 = vmatprep.subr.bf16.mxu0 0
  %576 = vmatpush1.bf16.msra.mxu0 0
  %577 = vmatprep.subr.bf16.mxu0 0
  %578 = vmatpush1.bf16.msra.mxu0 %v73
  %579 = vmatprep.subr.bf16.mxu0 0
  %580 = vmatpush1.bf16.msra.mxu0 %v72
  %581 = vmatprep.subr.bf16.mxu0 0
  %582 = vmatpush2.bf16.msra.mxu0 0
  %583 = vmatprep.subr.bf16.mxu0 0
  %584 = vmatpush2.bf16.msra.mxu0 0
  %585 = vmatprep.subr.bf16.mxu0 0
  %586 = vmatpush2.bf16.msra.mxu0 0
  %587 = vmatprep.subr.bf16.mxu0 0
  %588 = vmatpush2.bf16.msra.mxu0 0
  %589 = vmatprep.subr.bf16.mxu0 0
  %590 = vmatpush2.bf16.msra.mxu0 0
  %591 = vmatprep.subr.bf16.mxu0 0
  %592 = vmatpush2.bf16.msra.mxu0 0
  %593 = vmatprep.subr.bf16.mxu0 0
  %594 = vmatpush2.bf16.msra.mxu0 0
  %595 = vmatprep.subr.bf16.mxu0 0
  %596 = vmatpush2.bf16.msra.mxu0 0
  %597 = vmatprep.mubr.bf16.mxu0 0
  %598 = vmatmul.mubr.bf16.gmra.mxu0 %v563
  %v599 = vpop.f32.mrf.mxu0
  %v600 = vadd.f32 0.0, %v599
  %v601 = vpop.f32.mrf.mxu0
  %v602 = vpop.f32.mrf.mxu0
  %v603 = vpop.f32.mrf.mxu0
  %604 = vdwg.mxu0
  %v605 = vadd.f32 %v557, %v600
  %v606 = vxor.u32 %v605, 2147483648
  %v607 = vmul.f32 %v606, 1.442695
  %v608 = vpow.pop %v607
  %v609 = vadd.f32 %v608, 1.0
  %v610 = vrcp.pop %v609
  %v611 = vmul.f32 1.0, %v610
  %v612 = vtanh.pop %v605
  %v613 = vmul.f32 %v611, %v543
  %615 = vrot.lane.b32.xlu0 %v612, 64
  %v616 = vpop.permute.xlu0 %615
  %v618 = vmul.f32 %v611, %v616
  %620 = vrot.lane.b32.xlu0 %v618, 32
  %v621 = vpop.permute.xlu0 %620
  %v623 = vadd.f32 %v613, %v621
  %v624 = vtanh.pop %v623
  %626 = vrot.lane.b32.xlu0 %v624, 64
  %v627 = vpop.permute.xlu0 %626
  %v629 = vmul.f32 %v611, %v627
  %631 = vrot.lane.b32.xlu0 %v629, 32
  %v632 = vpop.permute.xlu0 %631
  %s634 = scalar_lea.vmem %s44, 2
  %635 = vst.msk [vmem:[%s634] sm:$0x3] %vm154, %v632
  %v636 = vld [vmem:[%s36] sm:$0x3]
  %v637 = vpack.c.bf16 %v629, %v629
  %639 = vrot.lane.b32.xlu0 %v637, 32
  %v640 = vpop.permute.xlu0 %639
  %v642 = vsel %vm76, %v640, 0
  %644 = vmatprep.subr.bf16.mxu0 0
  %645 = vmatpush1.bf16.msra.mxu0 0
  %646 = vmatprep.subr.bf16.mxu0 0
  %647 = vmatpush1.bf16.msra.mxu0 0
  %648 = vmatprep.subr.bf16.mxu0 0
  %649 = vmatpush1.bf16.msra.mxu0 0
  %650 = vmatprep.subr.bf16.mxu0 0
  %651 = vmatpush1.bf16.msra.mxu0 0
  %652 = vmatprep.subr.bf16.mxu0 0
  %653 = vmatpush1.bf16.msra.mxu0 0
  %654 = vmatprep.subr.bf16.mxu0 0
  %655 = vmatpush1.bf16.msra.mxu0 0
  %656 = vmatprep.subr.bf16.mxu0 0
  %657 = vmatpush1.bf16.msra.mxu0 %v73
  %658 = vmatprep.subr.bf16.mxu0 0
  %659 = vmatpush1.bf16.msra.mxu0 %v72
  %660 = vmatprep.subr.bf16.mxu0 0
  %661 = vmatpush2.bf16.msra.mxu0 0
  %662 = vmatprep.subr.bf16.mxu0 0
  %663 = vmatpush2.bf16.msra.mxu0 0
  %664 = vmatprep.subr.bf16.mxu0 0
  %665 = vmatpush2.bf16.msra.mxu0 0
  %666 = vmatprep.subr.bf16.mxu0 0
  %667 = vmatpush2.bf16.msra.mxu0 0
  %668 = vmatprep.subr.bf16.mxu0 0
  %669 = vmatpush2.bf16.msra.mxu0 0
  %670 = vmatprep.subr.bf16.mxu0 0
  %671 = vmatpush2.bf16.msra.mxu0 0
  %672 = vmatprep.subr.bf16.mxu0 0
  %673 = vmatpush2.bf16.msra.mxu0 0
  %674 = vmatprep.subr.bf16.mxu0 0
  %675 = vmatpush2.bf16.msra.mxu0 0
  %676 = vmatprep.mubr.bf16.mxu0 0
  %677 = vmatmul.mubr.bf16.gmra.mxu0 %v642
  %v678 = vpop.f32.mrf.mxu0
  %v679 = vadd.f32 0.0, %v678
  %v680 = vpop.f32.mrf.mxu0
  %v681 = vpop.f32.mrf.mxu0
  %v682 = vpop.f32.mrf.mxu0
  %683 = vdwg.mxu0
  %v684 = vadd.f32 %v636, %v679
  %v685 = vxor.u32 %v684, 2147483648
  %v686 = vmul.f32 %v685, 1.442695
  %v687 = vpow.pop %v686
  %v688 = vadd.f32 %v687, 1.0
  %v689 = vrcp.pop %v688
  %v690 = vmul.f32 1.0, %v689
  %v691 = vtanh.pop %v684
  %v692 = vmul.f32 %v690, %v623
  %694 = vrot.lane.b32.xlu0 %v691, 64
  %v695 = vpop.permute.xlu0 %694
  %v697 = vmul.f32 %v690, %v695
  %699 = vrot.lane.b32.xlu0 %v697, 32
  %v700 = vpop.permute.xlu0 %699
  %v702 = vadd.f32 %v692, %v700
  %v703 = vtanh.pop %v702
  %705 = vrot.lane.b32.xlu0 %v703, 64
  %v706 = vpop.permute.xlu0 %705
  %v708 = vmul.f32 %v690, %v706
  %710 = vrot.lane.b32.xlu0 %v708, 32
  %v711 = vpop.permute.xlu0 %710
  %713 = vst.msk [vmem:[%s44] sm:$0x3] %vm154, %v711
  %714 = vst.msk [vmem:[#allocation2] sm:$0x3] %vm154, %v711
  %716 = vrot.lane.b32.xlu0 %v702, 96
  %v717 = vpop.permute.xlu0 %716
  %719 = vst.msk [vmem:[#allocation3] sm:$0x3] %vm154, %v717
  %s720 = ssub.s32 0, 0
  %s721 = smul.u32 8, %s720
  %p722 = scmp.lt.s32.totalorder %s721, 7
  %s723 = scalar_select %p722, %s721, 7
  %s724 = smul.addr %s723, 2
  %s725 = scalar_lea.vmem %s2, %s724
  // Predicated region
  $region14: #{bilstm_forward.11} parent=0 // pred_check
    _
  $region15: #{bilstm_forward.11} parent=0 // pred_check_branch
    %727 = sbr.rel (0) target = $region17
  $region16: #{bilstm_forward.11} parent=0 // pred_region
    %s728 = ssub.s32 0, 0
    %s729 = smul.u32 8, %s728
  $region17: #{bilstm_forward.11} parent=0 // pred_fallthru
    _
  // Predicated region
  $region18: #{bilstm_forward.11} parent=0 // pred_check
    _
  $region19: #{bilstm_forward.11} parent=0 // pred_check_branch
    %731 = sbr.rel (0) target = $region21
  $region20: #{bilstm_forward.11} parent=0 // pred_region
    %s732 = ssub.s32 0, 0
    %s733 = smul.u32 8, %s732
    %p734 = scmp.lt.s32.totalorder %s733, 7
    %s735 = scalar_select %p734, %s733, 7
    %s736 = smul.addr %s735, 2
    %s737 = scalar_lea.vmem %s2, %s736
  $region21: #{bilstm_forward.11} parent=0 // pred_fallthru
    _

// kernel: bilstm_forward.12
$region0: #{bilstm_forward.12}
  #allocation0 [shape = 'u32[]', space=smem, size = 0x4, offset = 0x4, fixed_abs, tag = 'smem constant byte address 0x4 - core index']
  #allocation1 [shape = 'u32[144,128]{1,0:T(1,128)}', space=vmem, size = 0x12000, scoped, tag = 'internal scratch']
  %s0 = inlined_call_operand.vmem [shape: f32[16,32], index: 0, kind: input, shape index: {}]
  %s1 = inlined_call_operand.vmem [shape: f32[16,32], index: 1, kind: input, shape index: {}]
  %s2 = inlined_call_operand.vmem [shape: bf16[32,128], index: 2, kind: input, shape index: {}]
  %s3 = inlined_call_operand.vmem [shape: bf16[32,128], index: 3, kind: input, shape index: {}]
  %s4 = inlined_call_operand.vmem [shape: f32[1,128], index: 4, kind: input, shape index: {}]
  %s5 = inlined_call_operand.vmem [shape: f32[16,128], index: 5, kind: output, shape index: {}]
  %s6 = sld [smem:[#allocation0]]
  $region30: #{bilstm_forward.12} parent=0
    _
  %s8 = ssub.s32 1, %s6
  %s9 = scalar_select 0, %s8, %s6
  // Predicated region
  $region2: #{bilstm_forward.12} parent=0 // pred_check
    _
  $region3: #{bilstm_forward.12} parent=0 // pred_check_branch
    %11 = sbr.rel (0) target = $region5
  $region4: #{bilstm_forward.12} parent=0 // pred_region
    _
  $region5: #{bilstm_forward.12} parent=0 // pred_fallthru
    _
  // Predicated region
  $region6: #{bilstm_forward.12} parent=0 // pred_check
    _
  $region7: #{bilstm_forward.12} parent=0 // pred_check_branch
    %13 = sbr.rel (0) target = $region9
  $region8: #{bilstm_forward.12} parent=0 // pred_region
    _
  $region9: #{bilstm_forward.12} parent=0 // pred_fallthru
    _
  // Predicated region
  $region10: #{bilstm_forward.12} parent=0 // pred_check
    _
  $region11: #{bilstm_forward.12} parent=0 // pred_check_branch
    %15 = sbr.rel (0) target = $region13
  $region12: #{bilstm_forward.12} parent=0 // pred_region
    _
  $region13: #{bilstm_forward.12} parent=0 // pred_fallthru
    _
  // Predicated region
  $region14: #{bilstm_forward.12} parent=0 // pred_check
    _
  $region15: #{bilstm_forward.12} parent=0 // pred_check_branch
    %17 = sbr.rel (0) target = $region17
  $region16: #{bilstm_forward.12} parent=0 // pred_region
    _
  $region17: #{bilstm_forward.12} parent=0 // pred_fallthru
    _
  // Predicated region
  $region18: #{bilstm_forward.12} parent=0 // pred_check
    _
  $region19: #{bilstm_forward.12} parent=0 // pred_check_branch
    %19 = sbr.rel (0) target = $region21
  $region20: #{bilstm_forward.12} parent=0 // pred_region
    _
  $region21: #{bilstm_forward.12} parent=0 // pred_fallthru
    _
  %v21 = vld [vmem:[%s0] sm:$0xff]
  %v22 = vld [vmem:[%s0 + $0x8] sm:$0xff]
  %v23 = vpack.c.bf16 %v22, %v21
  %v24 = vld [vmem:[%s2] sm:$0xf]
  %v25 = vld [vmem:[%s2 + $0x4] sm:$0xf]
  %v26 = vld [vmem:[%s2 + $0x8] sm:$0xf]
  %v27 = vld [vmem:[%s2 + $0xc] sm:$0xf]
  %v28 = vld [vmem:[%s1] sm:$0xff]
  %v29 = vld [vmem:[%s1 + $0x8] sm:$0xff]
  %v30 = vpack.c.bf16 %v29, %v28
  %v31 = vld [vmem:[%s3] sm:$0xf]
  %v32 = vld [vmem:[%s3 + $0x4] sm:$0xf]
  %v33 = vld [vmem:[%s3 + $0x8] sm:$0xf]
  %v34 = vld [vmem:[%s3 + $0xc] sm:$0xf]
  %v39 = vunpack.c.l.b16 %v31
  %v40 = vunpack.c.l.b16 %v32
  %v41 = vunpack.c.l.b16 %v33
  %v42 = vunpack.c.l.b16 %v34
  %v43 = vpack.c.b16 %v40, %v39
  %v44 = vpack.c.b16 %v42, %v41
  %vm47 = vcmask 261120
  %v49 = vsel %vm47, %v30, 0
  %51 = vmatprep.subr.bf16.mxu0 0
  %52 = vmatpush1.bf16.msra.mxu0 0
  %53 = vmatprep.subr.bf16.mxu0 0
  %54 = vmatpush1.bf16.msra.mxu0 0
  %55 = vmatprep.subr.bf16.mxu0 0
  %56 = vmatpush1.bf16.msra.mxu0 0
  %57 = vmatprep.subr.bf16.mxu0 0
  %58 = vmatpush1.bf16.msra.mxu0 0
  %59 = vmatprep.subr.bf16.mxu0 0
  %60 = vmatpush1.bf16.msra.mxu0 0
  %61 = vmatprep.subr.bf16.mxu0 0
  %62 = vmatpush1.bf16.msra.mxu0 0
  %63 = vmatprep.subr.bf16.mxu0 0
  %64 = vmatpush1.bf16.msra.mxu0 %v44
  %65 = vmatprep.subr.bf16.mxu0 0
  %66 = vmatpush1.bf16.msra.mxu0 %v43
  %67 = vmatprep.subr.bf16.mxu0 0
  %68 = vmatpush2.bf16.msra.mxu0 0
  %69 = vmatprep.subr.bf16.mxu0 0
  %70 = vmatpush2.bf16.msra.mxu0 0
  %71 = vmatprep.subr.bf16.mxu0 0
  %72 = vmatpush2.bf16.msra.mxu0 0
  %73 = vmatprep.subr.bf16.mxu0 0
  %74 = vmatpush2.bf16.msra.mxu0 0
  %75 = vmatprep.subr.bf16.mxu0 0
  %76 = vmatpush2.bf16.msra.mxu0 0
  %77 = vmatprep.subr.bf16.mxu0 0
  %78 = vmatpush2.bf16.msra.mxu0 0
  %79 = vmatprep.subr.bf16.mxu0 0
  %80 = vmatpush2.bf16.msra.mxu0 0
  %81 = vmatprep.subr.bf16.mxu0 0
  %82 = vmatpush2.bf16.msra.mxu0 0
  %83 = vmatprep.mubr.bf16.mxu0 0
  %84 = vmatmul.mubr.bf16.gmra.mxu0 %v49
  %v85 = vpop.f32.mrf.mxu0
  %v86 = vadd.f32 0.0, %v85
  %v87 = vpop.f32.mrf.mxu0
  %v88 = vpop.f32.mrf.mxu0
  %v89 = vadd.f32 0.0, %v88
  %v90 = vpop.f32.mrf.mxu0
  %91 = vdwg.mxu0
  %v96 = vunpack.c.l.b16 %v24
  %v97 = vunpack.c.l.b16 %v25
  %v98 = vunpack.c.l.b16 %v26
  %v99 = vunpack.c.l.b16 %v27
  %v100 = vpack.c.b16 %v97, %v96
  %v101 = vpack.c.b16 %v99, %v98
  %v105 = vsel %vm47, %v23, 0
  %107 = vmatprep.subr.bf16.mxu0 0
  %108 = vmatpush1.bf16.msra.mxu0 0
  %109 = vmatprep.subr.bf16.mxu0 0
  %110 = vmatpush1.bf16.msra.mxu0 0
  %111 = vmatprep.subr.bf16.mxu0 0
  %112 = vmatpush1.bf16.msra.mxu0 0
  %113 = vmatprep.subr.bf16.mxu0 0
  %114 = vmatpush1.bf16.msra.mxu0 0
  %115 = vmatprep.subr.bf16.mxu0 0
  %116 = vmatpush1.bf16.msra.mxu0 0
  %117 = vmatprep.subr.bf16.mxu0 0
  %118 = vmatpush1.bf16.msra.mxu0 0
  %119 = vmatprep.subr.bf16.mxu0 0
  %120 = vmatpush1.bf16.msra.mxu0 %v101
  %121 = vmatprep.subr.bf16.mxu0 0
  %122 = vmatpush1.bf16.msra.mxu0 %v100
  %123 = vmatprep.subr.bf16.mxu0 0
  %124 = vmatpush2.bf16.msra.mxu0 0
  %125 = vmatprep.subr.bf16.mxu0 0
  %126 = vmatpush2.bf16.msra.mxu0 0
  %127 = vmatprep.subr.bf16.mxu0 0
  %128 = vmatpush2.bf16.msra.mxu0 0
  %129 = vmatprep.subr.bf16.mxu0 0
  %130 = vmatpush2.bf16.msra.mxu0 0
  %131 = vmatprep.subr.bf16.mxu0 0
  %132 = vmatpush2.bf16.msra.mxu0 0
  %133 = vmatprep.subr.bf16.mxu0 0
  %134 = vmatpush2.bf16.msra.mxu0 0
  %135 = vmatprep.subr.bf16.mxu0 0
  %136 = vmatpush2.bf16.msra.mxu0 0
  %137 = vmatprep.subr.bf16.mxu0 0
  %138 = vmatpush2.bf16.msra.mxu0 0
  %139 = vmatprep.mubr.bf16.mxu0 0
  %140 = vmatmul.mubr.bf16.gmra.mxu0 %v105
  %v141 = vpop.f32.mrf.mxu0
  %v142 = vadd.f32 %v86, %v141
  %v143 = vpop.f32.mrf.mxu0
  %v144 = vpop.f32.mrf.mxu0
  %v145 = vadd.f32 %v89, %v144
  %v146 = vpop.f32.mrf.mxu0
  %147 = vdwg.mxu0
  %v148 = vld [vmem:[%s4] sm:$0x1]
  %v150 = vlaneseq
  %v151 = vshrl.u32 %v150, 7
  %v152 = vsub.s32 0, %v151
  %v153 = vrot.slane %v148, %v152
  %v155 = vadd.f32 %v142, %v153
  %v156 = vadd.f32 %v145, %v153
  %157 = vst [vmem:[%s5] sm:$0xff] %v155
  %158 = vst [vmem:[%s5 + $0x8] sm:$0xff] %v156
  // Predicated region
  $region22: #{bilstm_forward.12} parent=0 // pred_check
    _
  $region23: #{bilstm_forward.12} parent=0 // pred_check_branch
    %160 = sbr.rel (0) target = $region25
  $region24: #{bilstm_forward.12} parent=0 // pred_region
    _
  $region25: #{bilstm_forward.12} parent=0 // pred_fallthru
    _
  // Predicated region
  $region26: #{bilstm_forward.12} parent=0 // pred_check
    _
  $region27: #{bilstm_forward.12} parent=0 // pred_check_branch
    %162 = sbr.rel (0) target = $region29
  $region28: #{bilstm_forward.12} parent=0 // pred_region
    _
  $region29: #{bilstm_forward.12} parent=0 // pred_fallthru
    _

// kernel: bilstm_forward.13
$region0: #{bilstm_forward.13}
  #allocation0 [shape = 'u32[]', space=smem, size = 0x4, offset = 0x4, fixed_abs, tag = 'smem constant byte address 0x4 - core index']
  #allocation1 [shape = 'u32[144,128]{1,0:T(1,128)}', space=vmem, size = 0x12000, scoped, tag = 'internal scratch']
  #allocation2 [shape = 'f32[2,32]{1,0:T(2,128)}', space=vmem, size = 0x400, scoped, tag = 'scratch operand']
  #allocation3 [shape = 'f32[2,32]{1,0:T(2,128)}', space=vmem, size = 0x400, scoped, tag = 'scratch operand']
  %s0 = inlined_call_operand.vmem [shape: f32[8,2,128], index: 0, kind: input, shape index: {}]
  %s1 = inlined_call_operand.vmem [shape: bf16[32,128], index: 1, kind: input, shape index: {}]
  %s2 = inlined_call_operand.vmem [shape: f32[2,32], index: 2, kind: output, shape index: {}]
  %s3 = sld [smem:[#allocation0]]
  $region22: #{bilstm_forward.13} parent=0
    _
  %s5 = ssub.s32 1, %s3
  %s6 = scalar_select 0, %s5, %s3
  // Predicated region
  $region2: #{bilstm_forward.13} parent=0 // pred_check
    _
  $region3: #{bilstm_forward.13} parent=0 // pred_check_branch
    %8 = sbr.rel (0) target = $region5
  $region4: #{bilstm_forward.13} parent=0 // pred_region
    _
  $region5: #{bilstm_forward.13} parent=0 // pred_fallthru
    _
  // Predicated region
  $region6: #{bilstm_forward.13} parent=0 // pred_check
    _
  $region7: #{bilstm_forward.13} parent=0 // pred_check_branch
    %10 = sbr.rel (0) target = $region9
  $region8: #{bilstm_forward.13} parent=0 // pred_region
    _
  $region9: #{bilstm_forward.13} parent=0 // pred_fallthru
    _
  %p12 = scmp.eq.s32.totalorder 0, 0
  // Predicated region
  $region10: #{bilstm_forward.13} parent=0 // pred_check
    %p13 = pneg %p12
  $region11: #{bilstm_forward.13} parent=0 // pred_check_branch
    %15 = sbr.rel (%p13) target = $region13
  $region12: #{bilstm_forward.13} parent=0 // pred_region
    %vm16 = vcmask 254976
    %17 = vst.msk [vmem:[#allocation2] sm:$0x3] %vm16, 0.0
    %18 = vst.msk [vmem:[#allocation3] sm:$0x3] %vm16, 0.0
  $region13: #{bilstm_forward.13} parent=0 // pred_fallthru
    _
  %v19 = vld [vmem:[#allocation2] sm:$0x3]
  %v20 = vld [vmem:[#allocation3] sm:$0x3]
  %v21 = vld [vmem:[%s1] sm:$0xf]
  %v22 = vld [vmem:[%s1 + $0x4] sm:$0xf]
  %v23 = vld [vmem:[%s1 + $0x8] sm:$0xf]
  %v24 = vld [vmem:[%s1 + $0xc] sm:$0xf]
  %v25 = vld [vmem:[%s0] sm:$0x3]
  %v26 = vpack.c.bf16 %v19, %v19
  %v31 = vunpack.c.l.b16 %v21
  %v32 = vunpack.c.l.b16 %v22
  %v33 = vunpack.c.l.b16 %v23
  %v34 = vunpack.c.l.b16 %v24
  %v35 = vpack.c.b16 %v32, %v31
  %v36 = vpack.c.b16 %v34, %v33
  %vm39 = vcmask 261120
  %v41 = vsel %vm39, %v26, 0
  %43 = vmatprep.subr.bf16.mxu0 0
  %44 = vmatpush1.bf16.msra.mxu0 0
  %45 = vmatprep.subr.bf16.mxu0 0
  %46 = vmatpush1.bf16.msra.mxu0 0
  %47 = vmatprep.subr.bf16.mxu0 0
  %48 = vmatpush1.bf16.msra.mxu0 0
  %49 = vmatprep.subr.bf16.mxu0 0
  %50 = vmatpush1.bf16.msra.mxu0 0
  %51 = vmatprep.subr.bf16.mxu0 0
  %52 = vmatpush1.bf16.msra.mxu0 0
  %53 = vmatprep.subr.bf16.mxu0 0
  %54 = vmatpush1.bf16.msra.mxu0 0
  %55 = vmatprep.subr.bf16.mxu0 0
  %56 = vmatpush1.bf16.msra.mxu0 %v36
  %57 = vmatprep.subr.bf16.mxu0 0
  %58 = vmatpush1.bf16.msra.mxu0 %v35
  %59 = vmatprep.subr.bf16.mxu0 0
  %60 = vmatpush2.bf16.msra.mxu0 0
  %61 = vmatprep.subr.bf16.mxu0 0
  %62 = vmatpush2.bf16.msra.mxu0 0
  %63 = vmatprep.subr.bf16.mxu0 0
  %64 = vmatpush2.bf16.msra.mxu0 0
  %65 = vmatprep.subr.bf16.mxu0 0
  %66 = vmatpush2.bf16.msra.mxu0 0
  %67 = vmatprep.subr.bf16.mxu0 0
  %68 = vmatpush2.bf16.msra.mxu0 0
  %69 = vmatprep.subr.bf16.mxu0 0
  %70 = vmatpush2.bf16.msra.mxu0 0
  %71 = vmatprep.subr.bf16.mxu0 0
  %72 = vmatpush2.bf16.msra.mxu0 0
  %73 = vmatprep.subr.bf16.mxu0 0
  %74 = vmatpush2.bf16.msra.mxu0 0
  %75 = vmatprep.mubr.bf16.mxu0 0
  %76 = vmatmul.mubr.bf16.gmra.mxu0 %v41
  %v77 = vpop.f32.mrf.mxu0
  %v78 = vadd.f32 0.0, %v77
  %v79 = vpop.f32.mrf.mxu0
  %v80 = vpop.f32.mrf.mxu0
  %v81 = vpop.f32.mrf.mxu0
  %82 = vdwg.mxu0
  %v83 = vadd.f32 %v25, %v78
  %v84 = vxor.u32 %v83, 2147483648
  %v85 = vmul.f32 %v84, 1.442695
  %v86 = vpow.pop %v85
  %v87 = vadd.f32 %v86, 1.0
  %v88 = vrcp.pop %v87
  %v89 = vmul.f32 1.0, %v88
  %v90 = vtanh.pop %v83
  %92 = vrot.lane.b32.xlu0 %v20, 32
  %v93 = vpop.permute.xlu0 %92
  %v95 = vmul.f32 %v89, %v93
  %97 = vrot.lane.b32.xlu0 %v90, 64
  %v98 = vpop.permute.xlu0 %97
  %v100 = vmul.f32 %v89, %v98
  %102 = vrot.lane.b32.xlu0 %v100, 32
  %v103 = vpop.permute.xlu0 %102
  %v105 = vadd.f32 %v95, %v103
  %v106 = vtanh.pop %v105
  %108 = vrot.lane.b32.xlu0 %v106, 64
  %v109 = vpop.permute.xlu0 %108
  %v111 = vmul.f32 %v89, %v109
  %s112 = scalar_lea.vmem %s0, 2
  %v113 = vld [vmem:[%s112] sm:$0x3]
  %v114 = vpack.c.bf16 %v111, %v111
  %116 = vrot.lane.b32.xlu0 %v114, 32
  %v117 = vpop.permute.xlu0 %116
  %v119 = vsel %vm39, %v117, 0
  %121 = vmatprep.subr.bf16.mxu0 0
  %122 = vmatpush1.bf16.msra.mxu0 0
  %123 = vmatprep.subr.bf16.mxu0 0
  %124 = vmatpush1.bf16.msra.mxu0 0
  %125 = vmatprep.subr.bf16.mxu0 0
  %126 = vmatpush1.bf16.msra.mxu0 0
  %127 = vmatprep.subr.bf16.mxu0 0
  %128 = vmatpush1.bf16.msra.mxu0 0
  %129 = vmatprep.subr.bf16.mxu0 0
  %130 = vmatpush1.bf16.msra.mxu0 0
  %131 = vmatprep.subr.bf16.mxu0 0
  %132 = vmatpush1.bf16.msra.mxu0 0
  %133 = vmatprep.subr.bf16.mxu0 0
  %134 = vmatpush1.bf16.msra.mxu0 %v36
  %135 = vmatprep.subr.bf16.mxu0 0
  %136 = vmatpush1.bf16.msra.mxu0 %v35
  %137 = vmatprep.subr.bf16.mxu0 0
  %138 = vmatpush2.bf16.msra.mxu0 0
  %139 = vmatprep.subr.bf16.mxu0 0
  %140 = vmatpush2.bf16.msra.mxu0 0
  %141 = vmatprep.subr.bf16.mxu0 0
  %142 = vmatpush2.bf16.msra.mxu0 0
  %143 = vmatprep.subr.bf16.mxu0 0
  %144 = vmatpush2.bf16.msra.mxu0 0
  %145 = vmatprep.subr.bf16.mxu0 0
  %146 = vmatpush2.bf16.msra.mxu0 0
  %147 = vmatprep.subr.bf16.mxu0 0
  %148 = vmatpush2.bf16.msra.mxu0 0
  %149 = vmatprep.subr.bf16.mxu0 0
  %150 = vmatpush2.bf16.msra.mxu0 0
  %151 = vmatprep.subr.bf16.mxu0 0
  %152 = vmatpush2.bf16.msra.mxu0 0
  %153 = vmatprep.mubr.bf16.mxu0 0
  %154 = vmatmul.mubr.bf16.gmra.mxu0 %v119
  %v155 = vpop.f32.mrf.mxu0
  %v156 = vadd.f32 0.0, %v155
  %v157 = vpop.f32.mrf.mxu0
  %v158 = vpop.f32.mrf.mxu0
  %v159 = vpop.f32.mrf.mxu0
  %160 = vdwg.mxu0
  %v161 = vadd.f32 %v113, %v156
  %v162 = vxor.u32 %v161, 2147483648
  %v163 = vmul.f32 %v162, 1.442695
  %v164 = vpow.pop %v163
  %v165 = vadd.f32 %v164, 1.0
  %v166 = vrcp.pop %v165
  %v167 = vmul.f32 1.0, %v166
  %v168 = vtanh.pop %v161
  %v169 = vmul.f32 %v167, %v105
  %171 = vrot.lane.b32.xlu0 %v168, 64
  %v172 = vpop.permute.xlu0 %171
  %v174 = vmul.f32 %v167, %v172
  %176 = vrot.lane.b32.xlu0 %v174, 32
  %v177 = vpop.permute.xlu0 %176
  %v179 = vadd.f32 %v169, %v177
  %v180 = vtanh.pop %v179
  %182 = vrot.lane.b32.xlu0 %v180, 64
  %v183 = vpop.permute.xlu0 %182
  %v185 = vmul.f32 %v167, %v183
  %s186 = scalar_lea.vmem %s0, 4
  %v187 = vld [vmem:[%s186] sm:$0x3]
  %v188 = vpack.c.bf16 %v185, %v185
  %190 = vrot.lane.b32.xlu0 %v188, 32
  %v191 = vpop.permute.xlu0 %190
  %v193 = vsel %vm39, %v191, 0
  %195 = vmatprep.subr.bf16.mxu0 0
  %196 = vmatpush1.bf16.msra.mxu0 0
  %197 = vmatprep.subr.bf16.mxu0 0
  %198 = vmatpush1.bf16.msra.mxu0 0
  %199 = vmatprep.subr.bf16.mxu0 0
  %200 = vmatpush1.bf16.msra.mxu0 0
  %201 = vmatprep.subr.bf16.mxu0 0
  %202 = vmatpush1.bf16.msra.mxu0 0
  %203 = vmatprep.subr.bf16.mxu0 0
  %204 = vmatpush1.bf16.msra.mxu0 0
  %205 = vmatprep.subr.bf16.mxu0 0
  %206 = vmatpush1.bf16.msra.mxu0 0
  %207 = vmatprep.subr.bf16.mxu0 0
  %208 = vmatpush1.bf16.msra.mxu0 %v36
  %209 = vmatprep.subr.bf16.mxu0 0
  %210 = vmatpush1.bf16.msra.mxu0 %v35
  %211 = vmatprep.subr.bf16.mxu0 0
  %212 = vmatpush2.bf16.msra.mxu0 0
  %213 = vmatprep.subr.bf16.mxu0 0
  %214 = vmatpush2.bf16.msra.mxu0 0
  %215 = vmatprep.subr.bf16.mxu0 0
  %216 = vmatpush2.bf16.msra.mxu0 0
  %217 = vmatprep.subr.bf16.mxu0 0
  %218 = vmatpush2.bf16.msra.mxu0 0
  %219 = vmatprep.subr.bf16.mxu0 0
  %220 = vmatpush2.bf16.msra.mxu0 0
  %221 = vmatprep.subr.bf16.mxu0 0
  %222 = vmatpush2.bf16.msra.mxu0 0
  %223 = vmatprep.subr.bf16.mxu0 0
  %224 = vmatpush2.bf16.msra.mxu0 0
  %225 = vmatprep.subr.bf16.mxu0 0
  %226 = vmatpush2.bf16.msra.mxu0 0
  %227 = vmatprep.mubr.bf16.mxu0 0
  %228 = vmatmul.mubr.bf16.gmra.mxu0 %v193
  %v229 = vpop.f32.mrf.mxu0
  %v230 = vadd.f32 0.0, %v229
  %v231 = vpop.f32.mrf.mxu0
  %v232 = vpop.f32.mrf.mxu0
  %v233 = vpop.f32.mrf.mxu0
  %234 = vdwg.mxu0
  %v235 = vadd.f32 %v187, %v230
  %v236 = vxor.u32 %v235, 2147483648
  %v237 = vmul.f32 %v236, 1.442695
  %v238 = vpow.pop %v237
  %v239 = vadd.f32 %v238, 1.0
  %v240 = vrcp.pop %v239
  %v241 = vmul.f32 1.0, %v240
  %v242 = vtanh.pop %v235
  %v243 = vmul.f32 %v241, %v179
  %245 = vrot.lane.b32.xlu0 %v242, 64
  %v246 = vpop.permute.xlu0 %245
  %v248 = vmul.f32 %v241, %v246
  %250 = vrot.lane.b32.xlu0 %v248, 32
  %v251 = vpop.permute.xlu0 %250
  %v253 = vadd.f32 %v243, %v251
  %v254 = vtanh.pop %v253
  %256 = vrot.lane.b32.xlu0 %v254, 64
  %v257 = vpop.permute.xlu0 %256
  %v259 = vmul.f32 %v241, %v257
  %s260 = scalar_lea.vmem %s0, 6
  %v261 = vld [vmem:[%s260] sm:$0x3]
  %v262 = vpack.c.bf16 %v259, %v259
  %264 = vrot.lane.b32.xlu0 %v262, 32
  %v265 = vpop.permute.xlu0 %264
  %v267 = vsel %vm39, %v265, 0
  %269 = vmatprep.subr.bf16.mxu0 0
  %270 = vmatpush1.bf16.msra.mxu0 0
  %271 = vmatprep.subr.bf16.mxu0 0
  %272 = vmatpush1.bf16.msra.mxu0 0
  %273 = vmatprep.subr.bf16.mxu0 0
  %274 = vmatpush1.bf16.msra.mxu0 0
  %275 = vmatprep.subr.bf16.mxu0 0
  %276 = vmatpush1.bf16.msra.mxu0 0
  %277 = vmatprep.subr.bf16.mxu0 0
  %278 = vmatpush1.bf16.msra.mxu0 0
  %279 = vmatprep.subr.bf16.mxu0 0
  %280 = vmatpush1.bf16.msra.mxu0 0
  %281 = vmatprep.subr.bf16.mxu0 0
  %282 = vmatpush1.bf16.msra.mxu0 %v36
  %283 = vmatprep.subr.bf16.mxu0 0
  %284 = vmatpush1.bf16.msra.mxu0 %v35
  %285 = vmatprep.subr.bf16.mxu0 0
  %286 = vmatpush2.bf16.msra.mxu0 0
  %287 = vmatprep.subr.bf16.mxu0 0
  %288 = vmatpush2.bf16.msra.mxu0 0
  %289 = vmatprep.subr.bf16.mxu0 0
  %290 = vmatpush2.bf16.msra.mxu0 0
  %291 = vmatprep.subr.bf16.mxu0 0
  %292 = vmatpush2.bf16.msra.mxu0 0
  %293 = vmatprep.subr.bf16.mxu0 0
  %294 = vmatpush2.bf16.msra.mxu0 0
  %295 = vmatprep.subr.bf16.mxu0 0
  %296 = vmatpush2.bf16.msra.mxu0 0
  %297 = vmatprep.subr.bf16.mxu0 0
  %298 = vmatpush2.bf16.msra.mxu0 0
  %299 = vmatprep.subr.bf16.mxu0 0
  %300 = vmatpush2.bf16.msra.mxu0 0
  %301 = vmatprep.mubr.bf16.mxu0 0
  %302 = vmatmul.mubr.bf16.gmra.mxu0 %v267
  %v303 = vpop.f32.mrf.mxu0
  %v304 = vadd.f32 0.0, %v303
  %v305 = vpop.f32.mrf.mxu0
  %v306 = vpop.f32.mrf.mxu0
  %v307 = vpop.f32.mrf.mxu0
  %308 = vdwg.mxu0
  %v309 = vadd.f32 %v261, %v304
  %v310 = vxor.u32 %v309, 2147483648
  %v311 = vmul.f32 %v310, 1.442695
  %v312 = vpow.pop %v311
  %v313 = vadd.f32 %v312, 1.0
  %v314 = vrcp.pop %v313
  %v315 = vmul.f32 1.0, %v314
  %v316 = vtanh.pop %v309
  %v317 = vmul.f32 %v315, %v253
  %319 = vrot.lane.b32.xlu0 %v316, 64
  %v320 = vpop.permute.xlu0 %319
  %v322 = vmul.f32 %v315, %v320
  %324 = vrot.lane.b32.xlu0 %v322, 32
  %v325 = vpop.permute.xlu0 %324
  %v327 = vadd.f32 %v317, %v325
  %v328 = vtanh.pop %v327
  %330 = vrot.lane.b32.xlu0 %v328, 64
  %v331 = vpop.permute.xlu0 %330
  %v333 = vmul.f32 %v315, %v331
  %s334 = scalar_lea.vmem %s0, 8
  %v335 = vld [vmem:[%s334] sm:$0x3]
  %v336 = vpack.c.bf16 %v333, %v333
  %338 = vrot.lane.b32.xlu0 %v336, 32
  %v339 = vpop.permute.xlu0 %338
  %v341 = vsel %vm39, %v339, 0
  %343 = vmatprep.subr.bf16.mxu0 0
  %344 = vmatpush1.bf16.msra.mxu0 0
  %345 = vmatprep.subr.bf16.mxu0 0
  %346 = vmatpush1.bf16.msra.mxu0 0
  %347 = vmatprep.subr.bf16.mxu0 0
  %348 = vmatpush1.bf16.msra.mxu0 0
  %349 = vmatprep.subr.bf16.mxu0 0
  %350 = vmatpush1.bf16.msra.mxu0 0
  %351 = vmatprep.subr.bf16.mxu0 0
  %352 = vmatpush1.bf16.msra.mxu0 0
  %353 = vmatprep.subr.bf16.mxu0 0
  %354 = vmatpush1.bf16.msra.mxu0 0
  %355 = vmatprep.subr.bf16.mxu0 0
  %356 = vmatpush1.bf16.msra.mxu0 %v36
  %357 = vmatprep.subr.bf16.mxu0 0
  %358 = vmatpush1.bf16.msra.mxu0 %v35
  %359 = vmatprep.subr.bf16.mxu0 0
  %360 = vmatpush2.bf16.msra.mxu0 0
  %361 = vmatprep.subr.bf16.mxu0 0
  %362 = vmatpush2.bf16.msra.mxu0 0
  %363 = vmatprep.subr.bf16.mxu0 0
  %364 = vmatpush2.bf16.msra.mxu0 0
  %365 = vmatprep.subr.bf16.mxu0 0
  %366 = vmatpush2.bf16.msra.mxu0 0
  %367 = vmatprep.subr.bf16.mxu0 0
  %368 = vmatpush2.bf16.msra.mxu0 0
  %369 = vmatprep.subr.bf16.mxu0 0
  %370 = vmatpush2.bf16.msra.mxu0 0
  %371 = vmatprep.subr.bf16.mxu0 0
  %372 = vmatpush2.bf16.msra.mxu0 0
  %373 = vmatprep.subr.bf16.mxu0 0
  %374 = vmatpush2.bf16.msra.mxu0 0
  %375 = vmatprep.mubr.bf16.mxu0 0
  %376 = vmatmul.mubr.bf16.gmra.mxu0 %v341
  %v377 = vpop.f32.mrf.mxu0
  %v378 = vadd.f32 0.0, %v377
  %v379 = vpop.f32.mrf.mxu0
  %v380 = vpop.f32.mrf.mxu0
  %v381 = vpop.f32.mrf.mxu0
  %382 = vdwg.mxu0
  %v383 = vadd.f32 %v335, %v378
  %v384 = vxor.u32 %v383, 2147483648
  %v385 = vmul.f32 %v384, 1.442695
  %v386 = vpow.pop %v385
  %v387 = vadd.f32 %v386, 1.0
  %v388 = vrcp.pop %v387
  %v389 = vmul.f32 1.0, %v388
  %v390 = vtanh.pop %v383
  %v391 = vmul.f32 %v389, %v327
  %393 = vrot.lane.b32.xlu0 %v390, 64
  %v394 = vpop.permute.xlu0 %393
  %v396 = vmul.f32 %v389, %v394
  %398 = vrot.lane.b32.xlu0 %v396, 32
  %v399 = vpop.permute.xlu0 %398
  %v401 = vadd.f32 %v391, %v399
  %v402 = vtanh.pop %v401
  %404 = vrot.lane.b32.xlu0 %v402, 64
  %v405 = vpop.permute.xlu0 %404
  %v407 = vmul.f32 %v389, %v405
  %s408 = scalar_lea.vmem %s0, 10
  %v409 = vld [vmem:[%s408] sm:$0x3]
  %v410 = vpack.c.bf16 %v407, %v407
  %412 = vrot.lane.b32.xlu0 %v410, 32
  %v413 = vpop.permute.xlu0 %412
  %v415 = vsel %vm39, %v413, 0
  %417 = vmatprep.subr.bf16.mxu0 0
  %418 = vmatpush1.bf16.msra.mxu0 0
  %419 = vmatprep.subr.bf16.mxu0 0
  %420 = vmatpush1.bf16.msra.mxu0 0
  %421 = vmatprep.subr.bf16.mxu0 0
  %422 = vmatpush1.bf16.msra.mxu0 0
  %423 = vmatprep.subr.bf16.mxu0 0
  %424 = vmatpush1.bf16.msra.mxu0 0
  %425 = vmatprep.subr.bf16.mxu0 0
  %426 = vmatpush1.bf16.msra.mxu0 0
  %427 = vmatprep.subr.bf16.mxu0 0
  %428 = vmatpush1.bf16.msra.mxu0 0
  %429 = vmatprep.subr.bf16.mxu0 0
  %430 = vmatpush1.bf16.msra.mxu0 %v36
  %431 = vmatprep.subr.bf16.mxu0 0
  %432 = vmatpush1.bf16.msra.mxu0 %v35
  %433 = vmatprep.subr.bf16.mxu0 0
  %434 = vmatpush2.bf16.msra.mxu0 0
  %435 = vmatprep.subr.bf16.mxu0 0
  %436 = vmatpush2.bf16.msra.mxu0 0
  %437 = vmatprep.subr.bf16.mxu0 0
  %438 = vmatpush2.bf16.msra.mxu0 0
  %439 = vmatprep.subr.bf16.mxu0 0
  %440 = vmatpush2.bf16.msra.mxu0 0
  %441 = vmatprep.subr.bf16.mxu0 0
  %442 = vmatpush2.bf16.msra.mxu0 0
  %443 = vmatprep.subr.bf16.mxu0 0
  %444 = vmatpush2.bf16.msra.mxu0 0
  %445 = vmatprep.subr.bf16.mxu0 0
  %446 = vmatpush2.bf16.msra.mxu0 0
  %447 = vmatprep.subr.bf16.mxu0 0
  %448 = vmatpush2.bf16.msra.mxu0 0
  %449 = vmatprep.mubr.bf16.mxu0 0
  %450 = vmatmul.mubr.bf16.gmra.mxu0 %v415
  %v451 = vpop.f32.mrf.mxu0
  %v452 = vadd.f32 0.0, %v451
  %v453 = vpop.f32.mrf.mxu0
  %v454 = vpop.f32.mrf.mxu0
  %v455 = vpop.f32.mrf.mxu0
  %456 = vdwg.mxu0
  %v457 = vadd.f32 %v409, %v452
  %v458 = vxor.u32 %v457, 2147483648
  %v459 = vmul.f32 %v458, 1.442695
  %v460 = vpow.pop %v459
  %v461 = vadd.f32 %v460, 1.0
  %v462 = vrcp.pop %v461
  %v463 = vmul.f32 1.0, %v462
  %v464 = vtanh.pop %v457
  %v465 = vmul.f32 %v463, %v401
  %467 = vrot.lane.b32.xlu0 %v464, 64
  %v468 = vpop.permute.xlu0 %467
  %v470 = vmul.f32 %v463, %v468
  %472 = vrot.lane.b32.xlu0 %v470, 32
  %v473 = vpop.permute.xlu0 %472
  %v475 = vadd.f32 %v465, %v473
  %v476 = vtanh.pop %v475
  %478 = vrot.lane.b32.xlu0 %v476, 64
  %v479 = vpop.permute.xlu0 %478
  %v481 = vmul.f32 %v463, %v479
  %s482 = scalar_lea.vmem %s0, 12
  %v483 = vld [vmem:[%s482] sm:$0x3]
  %v484 = vpack.c.bf16 %v481, %v481
  %486 = vrot.lane.b32.xlu0 %v484, 32
  %v487 = vpop.permute.xlu0 %486
  %v489 = vsel %vm39, %v487, 0
  %491 = vmatprep.subr.bf16.mxu0 0
  %492 = vmatpush1.bf16.msra.mxu0 0
  %493 = vmatprep.subr.bf16.mxu0 0
  %494 = vmatpush1.bf16.msra.mxu0 0
  %495 = vmatprep.subr.bf16.mxu0 0
  %496 = vmatpush1.bf16.msra.mxu0 0
  %497 = vmatprep.subr.bf16.mxu0 0
  %498 = vmatpush1.bf16.msra.mxu0 0
  %499 = vmatprep.subr.bf16.mxu0 0
  %500 = vmatpush1.bf16.msra.mxu0 0
  %501 = vmatprep.subr.bf16.mxu0 0
  %502 = vmatpush1.bf16.msra.mxu0 0
  %503 = vmatprep.subr.bf16.mxu0 0
  %504 = vmatpush1.bf16.msra.mxu0 %v36
  %505 = vmatprep.subr.bf16.mxu0 0
  %506 = vmatpush1.bf16.msra.mxu0 %v35
  %507 = vmatprep.subr.bf16.mxu0 0
  %508 = vmatpush2.bf16.msra.mxu0 0
  %509 = vmatprep.subr.bf16.mxu0 0
  %510 = vmatpush2.bf16.msra.mxu0 0
  %511 = vmatprep.subr.bf16.mxu0 0
  %512 = vmatpush2.bf16.msra.mxu0 0
  %513 = vmatprep.subr.bf16.mxu0 0
  %514 = vmatpush2.bf16.msra.mxu0 0
  %515 = vmatprep.subr.bf16.mxu0 0
  %516 = vmatpush2.bf16.msra.mxu0 0
  %517 = vmatprep.subr.bf16.mxu0 0
  %518 = vmatpush2.bf16.msra.mxu0 0
  %519 = vmatprep.subr.bf16.mxu0 0
  %520 = vmatpush2.bf16.msra.mxu0 0
  %521 = vmatprep.subr.bf16.mxu0 0
  %522 = vmatpush2.bf16.msra.mxu0 0
  %523 = vmatprep.mubr.bf16.mxu0 0
  %524 = vmatmul.mubr.bf16.gmra.mxu0 %v489
  %v525 = vpop.f32.mrf.mxu0
  %v526 = vadd.f32 0.0, %v525
  %v527 = vpop.f32.mrf.mxu0
  %v528 = vpop.f32.mrf.mxu0
  %v529 = vpop.f32.mrf.mxu0
  %530 = vdwg.mxu0
  %v531 = vadd.f32 %v483, %v526
  %v532 = vxor.u32 %v531, 2147483648
  %v533 = vmul.f32 %v532, 1.442695
  %v534 = vpow.pop %v533
  %v535 = vadd.f32 %v534, 1.0
  %v536 = vrcp.pop %v535
  %v537 = vmul.f32 1.0, %v536
  %v538 = vtanh.pop %v531
  %v539 = vmul.f32 %v537, %v475
  %541 = vrot.lane.b32.xlu0 %v538, 64
  %v542 = vpop.permute.xlu0 %541
  %v544 = vmul.f32 %v537, %v542
  %546 = vrot.lane.b32.xlu0 %v544, 32
  %v547 = vpop.permute.xlu0 %546
  %v549 = vadd.f32 %v539, %v547
  %v550 = vtanh.pop %v549
  %552 = vrot.lane.b32.xlu0 %v550, 64
  %v553 = vpop.permute.xlu0 %552
  %v555 = vmul.f32 %v537, %v553
  %s556 = scalar_lea.vmem %s0, 14
  %v557 = vld [vmem:[%s556] sm:$0x3]
  %v558 = vpack.c.bf16 %v555, %v555
  %560 = vrot.lane.b32.xlu0 %v558, 32
  %v561 = vpop.permute.xlu0 %560
  %v563 = vsel %vm39, %v561, 0
  %565 = vmatprep.subr.bf16.mxu0 0
  %566 = vmatpush1.bf16.msra.mxu0 0
  %567 = vmatprep.subr.bf16.mxu0 0
  %568 = vmatpush1.bf16.msra.mxu0 0
  %569 = vmatprep.subr.bf16.mxu0 0
  %570 = vmatpush1.bf16.msra.mxu0 0
  %571 = vmatprep.subr.bf16.mxu0 0
  %572 = vmatpush1.bf16.msra.mxu0 0
  %573 = vmatprep.subr.bf16.mxu0 0
  %574 = vmatpush1.bf16.msra.mxu0 0
  %575 = vmatprep.subr.bf16.mxu0 0
  %576 = vmatpush1.bf16.msra.mxu0 0
  %577 = vmatprep.subr.bf16.mxu0 0
  %578 = vmatpush1.bf16.msra.mxu0 %v36
  %579 = vmatprep.subr.bf16.mxu0 0
  %580 = vmatpush1.bf16.msra.mxu0 %v35
  %581 = vmatprep.subr.bf16.mxu0 0
  %582 = vmatpush2.bf16.msra.mxu0 0
  %583 = vmatprep.subr.bf16.mxu0 0
  %584 = vmatpush2.bf16.msra.mxu0 0
  %585 = vmatprep.subr.bf16.mxu0 0
  %586 = vmatpush2.bf16.msra.mxu0 0
  %587 = vmatprep.subr.bf16.mxu0 0
  %588 = vmatpush2.bf16.msra.mxu0 0
  %589 = vmatprep.subr.bf16.mxu0 0
  %590 = vmatpush2.bf16.msra.mxu0 0
  %591 = vmatprep.subr.bf16.mxu0 0
  %592 = vmatpush2.bf16.msra.mxu0 0
  %593 = vmatprep.subr.bf16.mxu0 0
  %594 = vmatpush2.bf16.msra.mxu0 0
  %595 = vmatprep.subr.bf16.mxu0 0
  %596 = vmatpush2.bf16.msra.mxu0 0
  %597 = vmatprep.mubr.bf16.mxu0 0
  %598 = vmatmul.mubr.bf16.gmra.mxu0 %v563
  %v599 = vpop.f32.mrf.mxu0
  %v600 = vadd.f32 0.0, %v599
  %v601 = vpop.f32.mrf.mxu0
  %v602 = vpop.f32.mrf.mxu0
  %v603 = vpop.f32.mrf.mxu0
  %604 = vdwg.mxu0
  %v605 = vadd.f32 %v557, %v600
  %v606 = vxor.u32 %v605, 2147483648
  %v607 = vmul.f32 %v606, 1.442695
  %v608 = vpow.pop %v607
  %v609 = vadd.f32 %v608, 1.0
  %v610 = vrcp.pop %v609
  %v611 = vmul.f32 1.0, %v610
  %v612 = vtanh.pop %v605
  %v613 = vmul.f32 %v611, %v549
  %615 = vrot.lane.b32.xlu0 %v612, 64
  %v616 = vpop.permute.xlu0 %615
  %v618 = vmul.f32 %v611, %v616
  %620 = vrot.lane.b32.xlu0 %v618, 32
  %v621 = vpop.permute.xlu0 %620
  %v623 = vadd.f32 %v613, %v621
  %v624 = vtanh.pop %v623
  %626 = vrot.lane.b32.xlu0 %v624, 64
  %v627 = vpop.permute.xlu0 %626
  %v629 = vmul.f32 %v611, %v627
  %631 = vrot.lane.b32.xlu0 %v629, 32
  %v632 = vpop.permute.xlu0 %631
  %vm634 = vcmask 254976
  %635 = vst.msk [vmem:[#allocation2] sm:$0x3] %vm634, %v632
  %637 = vrot.lane.b32.xlu0 %v623, 96
  %v638 = vpop.permute.xlu0 %637
  %640 = vst.msk [vmem:[#allocation3] sm:$0x3] %vm634, %v638
  %641 = vst.msk [vmem:[%s2] sm:$0x3] %vm634, %v632
  // Predicated region
  $region14: #{bilstm_forward.13} parent=0 // pred_check
    _
  $region15: #{bilstm_forward.13} parent=0 // pred_check_branch
    %643 = sbr.rel (0) target = $region17
  $region16: #{bilstm_forward.13} parent=0 // pred_region
    _
  $region17: #{bilstm_forward.13} parent=0 // pred_fallthru
    _
  // Predicated region
  $region18: #{bilstm_forward.13} parent=0 // pred_check
    _
  $region19: #{bilstm_forward.13} parent=0 // pred_check_branch
    %645 = sbr.rel (0) target = $region21
  $region20: #{bilstm_forward.13} parent=0 // pred_region
    _
  $region21: #{bilstm_forward.13} parent=0 // pred_fallthru
    _

// kernel: bilstm_forward.15
$region0: #{bilstm_forward.15}
  #allocation0 [shape = 'u32[]', space=smem, size = 0x4, offset = 0x4, fixed_abs, tag = 'smem constant byte address 0x4 - core index']
  #allocation1 [shape = 'u32[144,128]{1,0:T(1,128)}', space=vmem, size = 0x12000, scoped, tag = 'internal scratch']
  %s0 = inlined_call_operand.vmem [shape: f32[2,32], index: 0, kind: input, shape index: {}]
  %s1 = inlined_call_operand.vmem [shape: f32[2,128], index: 1, kind: input, shape index: {}]
  %s2 = inlined_call_operand.vmem [shape: f32[32,8], index: 2, kind: input, shape index: {}]
  %s3 = inlined_call_operand.vmem [shape: f32[32,8], index: 3, kind: input, shape index: {}]
  %s4 = inlined_call_operand.vmem [shape: f32[1,8], index: 4, kind: input, shape index: {}]
  %s5 = inlined_call_operand.hbm [shape: f32[2,8], index: 5, kind: output, shape index: {}]
  %s6 = sld [smem:[#allocation0]]
  $region30: #{bilstm_forward.15} parent=0
    _
  %s8 = ssub.s32 1, %s6
  %s9 = scalar_select 0, %s8, %s6
  $region1: #{bilstm_forward.15} parent=0
    #allocation2 [shape = 'u8[1024]{0}', space=vmem, size = 0x400, scoped, tag = 'output window, operand 0, single buffered']
    #allocation3 [shape = 's32[1]{0}', space=sflag, size = 0x4, scoped, tag = 'scoped memory for bilstm_forward.15']
    %10 = vsyncpa [#allocation3], 0
    // Predicated region
    $region2: #{bilstm_forward.15} parent=1 // pred_check
      _
    $region3: #{bilstm_forward.15} parent=1 // pred_check_branch
      %12 = sbr.rel (0) target = $region5
    $region4: #{bilstm_forward.15} parent=1 // pred_region
      _
    $region5: #{bilstm_forward.15} parent=1 // pred_fallthru
      _
    // Predicated region
    $region6: #{bilstm_forward.15} parent=1 // pred_check
      _
    $region7: #{bilstm_forward.15} parent=1 // pred_check_branch
      %14 = sbr.rel (0) target = $region9
    $region8: #{bilstm_forward.15} parent=1 // pred_region
      _
    $region9: #{bilstm_forward.15} parent=1 // pred_fallthru
      _
    // Predicated region
    $region10: #{bilstm_forward.15} parent=1 // pred_check
      _
    $region11: #{bilstm_forward.15} parent=1 // pred_check_branch
      %16 = sbr.rel (0) target = $region13
    $region12: #{bilstm_forward.15} parent=1 // pred_region
      _
    $region13: #{bilstm_forward.15} parent=1 // pred_fallthru
      _
    // Predicated region
    $region14: #{bilstm_forward.15} parent=1 // pred_check
      _
    $region15: #{bilstm_forward.15} parent=1 // pred_check_branch
      %18 = sbr.rel (0) target = $region17
    $region16: #{bilstm_forward.15} parent=1 // pred_region
      _
    $region17: #{bilstm_forward.15} parent=1 // pred_fallthru
      _
    // Predicated region
    $region18: #{bilstm_forward.15} parent=1 // pred_check
      _
    $region19: #{bilstm_forward.15} parent=1 // pred_check_branch
      %20 = sbr.rel (0) target = $region21
    $region20: #{bilstm_forward.15} parent=1 // pred_region
      _
    $region21: #{bilstm_forward.15} parent=1 // pred_fallthru
      _
    %v21 = vld [vmem:[%s1] sm:$0x3]
    %v22 = vxor.u32 %v21, 2147483648
    %v23 = vmul.f32 %v22, 1.442695
    %v24 = vpow.pop %v23
    %v25 = vadd.f32 %v24, 1.0
    %v26 = vrcp.pop %v25
    %v27 = vmul.f32 1.0, %v26
    %v28 = vtanh.pop %v21
    %30 = vrot.lane.b32.xlu0 %v28, 64
    %v31 = vpop.permute.xlu0 %30
    %v33 = vmul.f32 %v27, %v31
    %v34 = vtanh.pop %v33
    %36 = vrot.lane.b32.xlu0 %v34, 96
    %v37 = vpop.permute.xlu0 %36
    %v39 = vmul.f32 %v27, %v37
    %v40 = vld [vmem:[%s0] sm:$0x3]
    %v41 = vld [vmem:[%s2] sm:$0xff]
    %v42 = vld [vmem:[%s2 + $0x8] sm:$0xff]
    %v43 = vld [vmem:[%s2 + $0x10] sm:$0xff]
    %v44 = vld [vmem:[%s2 + $0x18] sm:$0xff]
    %v45 = vld [vmem:[%s3] sm:$0xff]
    %v46 = vld [vmem:[%s3 + $0x8] sm:$0xff]
    %v47 = vld [vmem:[%s3 + $0x10] sm:$0xff]
    %v48 = vld [vmem:[%s3 + $0x18] sm:$0xff]
    %50 = vrot.lane.b32.xlu0 %v39, 32
    %v51 = vpop.permute.xlu0 %50
    %vm52 = vcmask 261120
    %v53 = vsel %vm52, %v51, 0
    %55 = vmatprep.subr.mxu0 0.0
    %56 = vmatpush1.msra.mxu0 0.0
    %57 = vmatprep.subr.mxu0 0.0
    %58 = vmatpush1.msra.mxu0 0.0
    %59 = vmatprep.subr.mxu0 0.0
    %60 = vmatpush1.msra.mxu0 0.0
    %61 = vmatprep.subr.mxu0 0.0
    %62 = vmatpush1.msra.mxu0 0.0
    %63 = vmatprep.subr.mxu0 0.0
    %64 = vmatpush1.msra.mxu0 0.0
    %65 = vmatprep.subr.mxu0 0.0
    %66 = vmatpush1.msra.mxu0 0.0
    %67 = vmatprep.subr.mxu0 0.0
    %68 = vmatpush1.msra.mxu0 0.0
    %69 = vmatprep.subr.mxu0 0.0
    %70 = vmatpush1.msra.mxu0 0.0
    %71 = vmatprep.subr.mxu0 0.0
    %72 = vmatpush1.msra.mxu0 0.0
    %73 = vmatprep.subr.mxu0 0.0
    %74 = vmatpush1.msra.mxu0 0.0
    %75 = vmatprep.subr.mxu0 0.0
    %76 = vmatpush1.msra.mxu0 0.0
    %77 = vmatprep.subr.mxu0 0.0
    %78 = vmatpush1.msra.mxu0 0.0
    %79 = vmatprep.subr.mxu0 0.0
    %80 = vmatpush1.msra.mxu0 %v48
    %81 = vmatprep.subr.mxu0 0.0
    %82 = vmatpush1.msra.mxu0 %v47
    %83 = vmatprep.subr.mxu0 0.0
    %84 = vmatpush1.msra.mxu0 %v46
    %85 = vmatprep.subr.mxu0 0.0
    %86 = vmatpush1.msra.mxu0 %v45
    %87 = vmatprep.subr.mxu0 0.0
    %88 = vmatpush2.msra.mxu0 0.0
    %89 = vmatprep.subr.mxu0 0.0
    %90 = vmatpush2.msra.mxu0 0.0
    %91 = vmatprep.subr.mxu0 0.0
    %92 = vmatpush2.msra.mxu0 0.0
    %93 = vmatprep.subr.mxu0 0.0
    %94 = vmatpush2.msra.mxu0 0.0
    %95 = vmatprep.subr.mxu0 0.0
    %96 = vmatpush2.msra.mxu0 0.0
    %97 = vmatprep.subr.mxu0 0.0
    %98 = vmatpush2.msra.mxu0 0.0
    %99 = vmatprep.subr.mxu0 0.0
    %100 = vmatpush2.msra.mxu0 0.0
    %101 = vmatprep.subr.mxu0 0.0
    %102 = vmatpush2.msra.mxu0 0.0
    %103 = vmatprep.subr.mxu0 0.0
    %104 = vmatpush2.msra.mxu0 0.0
    %105 = vmatprep.subr.mxu0 0.0
    %106 = vmatpush2.msra.mxu0 0.0
    %107 = vmatprep.subr.mxu0 0.0
    %108 = vmatpush2.msra.mxu0 0.0
    %109 = vmatprep.subr.mxu0 0.0
    %110 = vmatpush2.msra.mxu0 0.0
    %111 = vmatprep.subr.mxu0 0.0
    %112 = vmatpush2.msra.mxu0 0.0
    %113 = vmatprep.subr.mxu0 0.0
    %114 = vmatpush2.msra.mxu0 0.0
    %115 = vmatprep.subr.mxu0 0.0
    %116 = vmatpush2.msra.mxu0 0.0
    %117 = vmatprep.subr.mxu0 0.0
    %118 = vmatpush2.msra.mxu0 0.0
    %119 = vmatprep.mubr.f32.mxu0 0.0
    %120 = vmatmul.mubr.f32.gmra.mxu0 %v53
    %v121 = vpop.f32.mrf.mxu0
    %v122 = vadd.f32 0.0, %v121
    %v123 = vpop.f32.mrf.mxu0
    %124 = vdwg.mxu0
    %v126 = vsel %vm52, %v40, 0
    %128 = vmatprep.subr.mxu0 0.0
    %129 = vmatpush1.msra.mxu0 0.0
    %130 = vmatprep.subr.mxu0 0.0
    %131 = vmatpush1.msra.mxu0 0.0
    %132 = vmatprep.subr.mxu0 0.0
    %133 = vmatpush1.msra.mxu0 0.0
    %134 = vmatprep.subr.mxu0 0.0
    %135 = vmatpush1.msra.mxu0 0.0
    %136 = vmatprep.subr.mxu0 0.0
    %137 = vmatpush1.msra.mxu0 0.0
    %138 = vmatprep.subr.mxu0 0.0
    %139 = vmatpush1.msra.mxu0 0.0
    %140 = vmatprep.subr.mxu0 0.0
    %141 = vmatpush1.msra.mxu0 0.0
    %142 = vmatprep.subr.mxu0 0.0
    %143 = vmatpush1.msra.mxu0 0.0
    %144 = vmatprep.subr.mxu0 0.0
    %145 = vmatpush1.msra.mxu0 0.0
    %146 = vmatprep.subr.mxu0 0.0
    %147 = vmatpush1.msra.mxu0 0.0
    %148 = vmatprep.subr.mxu0 0.0
    %149 = vmatpush1.msra.mxu0 0.0
    %150 = vmatprep.subr.mxu0 0.0
    %151 = vmatpush1.msra.mxu0 0.0
    %152 = vmatprep.subr.mxu0 0.0
    %153 = vmatpush1.msra.mxu0 %v44
    %154 = vmatprep.subr.mxu0 0.0
    %155 = vmatpush1.msra.mxu0 %v43
    %156 = vmatprep.subr.mxu0 0.0
    %157 = vmatpush1.msra.mxu0 %v42
    %158 = vmatprep.subr.mxu0 0.0
    %159 = vmatpush1.msra.mxu0 %v41
    %160 = vmatprep.subr.mxu0 0.0
    %161 = vmatpush2.msra.mxu0 0.0
    %162 = vmatprep.subr.mxu0 0.0
    %163 = vmatpush2.msra.mxu0 0.0
    %164 = vmatprep.subr.mxu0 0.0
    %165 = vmatpush2.msra.mxu0 0.0
    %166 = vmatprep.subr.mxu0 0.0
    %167 = vmatpush2.msra.mxu0 0.0
    %168 = vmatprep.subr.mxu0 0.0
    %169 = vmatpush2.msra.mxu0 0.0
    %170 = vmatprep.subr.mxu0 0.0
    %171 = vmatpush2.msra.mxu0 0.0
    %172 = vmatprep.subr.mxu0 0.0
    %173 = vmatpush2.msra.mxu0 0.0
    %174 = vmatprep.subr.mxu0 0.0
    %175 = vmatpush2.msra.mxu0 0.0
    %176 = vmatprep.subr.mxu0 0.0
    %177 = vmatpush2.msra.mxu0 0.0
    %178 = vmatprep.subr.mxu0 0.0
    %179 = vmatpush2.msra.mxu0 0.0
    %180 = vmatprep.subr.mxu0 0.0
    %181 = vmatpush2.msra.mxu0 0.0
    %182 = vmatprep.subr.mxu0 0.0
    %183 = vmatpush2.msra.mxu0 0.0
    %184 = vmatprep.subr.mxu0 0.0
    %185 = vmatpush2.msra.mxu0 0.0
    %186 = vmatprep.subr.mxu0 0.0
    %187 = vmatpush2.msra.mxu0 0.0
    %188 = vmatprep.subr.mxu0 0.0
    %189 = vmatpush2.msra.mxu0 0.0
    %190 = vmatprep.subr.mxu0 0.0
    %191 = vmatpush2.msra.mxu0 0.0
    %192 = vmatprep.mubr.f32.mxu0 0.0
    %193 = vmatmul.mubr.f32.gmra.mxu0 %v126
    %v194 = vpop.f32.mrf.mxu0
    %v195 = vadd.f32 %v122, %v194
    %v196 = vpop.f32.mrf.mxu0
    %197 = vdwg.mxu0
    %v198 = vld [vmem:[%s4] sm:$0x1]
    %v200 = vlaneseq
    %v201 = vshrl.u32 %v200, 7
    %v202 = vsub.s32 0, %v201
    %v203 = vrot.slane %v198, %v202
    %v205 = vadd.f32 %v195, %v203
    %vm206 = vcmask 58368
    %207 = vst.msk [vmem:[#allocation2] sm:$0x3] %vm206, %v205
    // Predicated region
    $region22: #{bilstm_forward.15} parent=1 // pred_check
      _
    $region23: #{bilstm_forward.15} parent=1 // pred_check_branch
      %209 = sbr.rel (0) target = $region25
    $region24: #{bilstm_forward.15} parent=1 // pred_region
      %s211 = ssub.s32 32, 32
      %212 = vsyncadd [#allocation3], %s211
      %s214 = sshll.u32 [#allocation2], 4
      %s215 = int_to_ptr.vmem [resolvable:$true] %s214
      %217 = dma.vmem_to_hbm [thread:$0]  %s215, 32, %s5, [#allocation3]
    $region25: #{bilstm_forward.15} parent=1 // pred_fallthru
      _
    // Predicated region
    $region26: #{bilstm_forward.15} parent=1 // pred_check
      _
    $region27: #{bilstm_forward.15} parent=1 // pred_check_branch
      %219 = sbr.rel (0) target = $region29
    $region28: #{bilstm_forward.15} parent=1 // pred_region
      %220 = dma.done [#allocation3], 32
    $region29: #{bilstm_forward.15} parent=1 // pred_fallthru
      _
    %221 = vsyncpa [#allocation3], 1

</llo_original>
